<compile_context>
chip_gen: v7x
topology: tpu7x:2x2x1
jax: 0.10.0
libtpu: 0.0.40
codegen_flags: <defaults>
</compile_context>

<pallas_src>
import functools
import math

import jax
import jax.numpy as jnp
from jax import lax
from jax.experimental import pallas as pl
from jax.experimental.pallas import tpu as pltpu

LN_EPS = 1e-6        # PreSumm TransformerDecoder uses nn.LayerNorm(..., eps=1e-6)
NEG_INF = -1e18

_COMPILER_PARAMS = pltpu.CompilerParams(
    dimension_semantics=("parallel",),        # batch axis -> both TensorCores on v7x
    vmem_limit_bytes=64 * 1024 * 1024,        # raise the 32 MiB scoped default (v6e)
)


# ------------------------------------------------------------------ spec helpers
def _full_spec(arr):
    """Whole-array block, constant index map (fetched once, stays resident)."""
    idx = (0,) * arr.ndim
    return pl.BlockSpec(arr.shape, lambda b, _i=idx: _i)


def _batch_spec(tail_shape):
    """One batch row per grid step; leading batch dim squeezed out."""
    n = len(tail_shape)
    return pl.BlockSpec((None,) + tuple(tail_shape), lambda b, _n=n: (b,) + (0,) * _n)


# ------------------------------------------------------------------ in-kernel math
def _layernorm(x, w_ref, b_ref):
    mu = jnp.mean(x, axis=-1, keepdims=True)
    var = jnp.mean((x - mu) ** 2, axis=-1, keepdims=True)
    return (x - mu) * lax.rsqrt(var + LN_EPS) * w_ref[...] + b_ref[...]


def _mm(a_f32, w_bf16):
    """[M,K] f32 activation @ [K,N] bf16 weight -> f32 (bf16 MXU, f32 accumulate)."""
    return lax.dot_general(a_f32.astype(jnp.bfloat16), w_bf16,
                           (((1,), (0,)), ((), ())),
                           preferred_element_type=jnp.float32)


def _mm_f32(a, b):
    return lax.dot_general(a, b, (((1,), (0,)), ((), ())),
                           preferred_element_type=jnp.float32)


def _mm_nt(a, b):
    """a @ b.T without materializing a transpose (contract last dims)."""
    return lax.dot_general(a, b, (((1,), (1,)), ((), ())),
                           preferred_element_type=jnp.float32)


def _gelu(x):
    # TODO(synk): reference uses erf-based GELU; tanh approximation used here.
    return 0.5 * x * (1.0 + jnp.tanh(0.7978845608028654 * (x + 0.044715 * x * x * x)))


def _softmax_rows(s):
    s = s - jnp.max(s, axis=-1, keepdims=True)
    e = jnp.exp(s)
    return e / jnp.sum(e, axis=-1, keepdims=True)


# ------------------------------------------------------- fused decoder-layer kernel
@functools.lru_cache(maxsize=None)
def _make_layer_kernel(heads, need_attn):
    def kernel(x_ref, enc_ref, dbias_ref, sbias_ref,
               ln1w, ln1b, ln2w, ln2b, ln3w, ln3b,
               wqkv, bqkv, wos, bos,
               wqc, bqc, wkvc, bkvc, woc, boc,
               w1, b1, w2, b2,
               xo_ref, *attn_out):
        x = x_ref[...].astype(jnp.float32)        # [Lq, H]
        enc = enc_ref[...].astype(jnp.float32)    # [Ls, H]
        dbias = dbias_ref[...]                    # [Lq, Lq]  (shared across heads)
        sbias = sbias_ref[...]                    # [Lq, Ls]
        Lq, H = x.shape
        Ls = enc.shape[0]
        dh = H // heads
        scale = 1.0 / math.sqrt(dh)

        # ---- self-attention (fused QKV projection) ----
        x_n = _layernorm(x, ln1w, ln1b)
        qkv = _mm(x_n, wqkv[...]) + bqkv[...]     # [Lq, 3H]
        wos_m = wos[...]
        self_out = jnp.zeros((Lq, H), jnp.float32)
        for h in range(heads):
            qh = qkv[:, h * dh:(h + 1) * dh] * scale
            kh = qkv[:, H + h * dh:H + (h + 1) * dh]
            vh = qkv[:, 2 * H + h * dh:2 * H + (h + 1) * dh]
            p = _softmax_rows(_mm_nt(qh, kh) + dbias)
            ctx = _mm_f32(p, vh)                                       # [Lq, dh]
            self_out = self_out + _mm(ctx, wos_m[h * dh:(h + 1) * dh, :])
        query = self_out + bos[...] + x                                # residual

        # ---- cross-attention (fused encoder KV projection) ----
        q_n = _layernorm(query, ln2w, ln2b)
        qc = _mm(q_n, wqc[...]) + bqc[...]        # [Lq, H]
        kv = _mm(enc, wkvc[...]) + bkvc[...]      # [Ls, 2H]
        woc_m = woc[...]
        ctx_out = jnp.zeros((Lq, H), jnp.float32)
        attn_acc = jnp.zeros((Lq, Ls), jnp.float32) if need_attn else None
        for h in range(heads):
            qh = qc[:, h * dh:(h + 1) * dh] * scale
            kh = kv[:, h * dh:(h + 1) * dh]
            vh = kv[:, H + h * dh:H + (h + 1) * dh]
            p = _softmax_rows(_mm_nt(qh, kh) + sbias)
            if need_attn:
                attn_acc = attn_acc + p
            ctx = _mm_f32(p, vh)
            ctx_out = ctx_out + _mm(ctx, woc_m[h * dh:(h + 1) * dh, :])
        mid = ctx_out + boc[...] + query                               # residual

        # ---- feed-forward ----
        y_n = _layernorm(mid, ln3w, ln3b)
        h1 = _gelu(_mm(y_n, w1[...]) + b1[...])
        h2 = _mm(h1, w2[...]) + b2[...]
        xo_ref[...] = (h2 + mid).astype(xo_ref.dtype)

        if need_attn:
            attn_out[0][...] = attn_acc * (1.0 / heads)                # mean over heads

    return kernel


def _run_layer(layer, x, enc_h, dec_bias, src_bias, heads, need_attn):
    B, Lq, H = x.shape
    Ls = enc_h.shape[1]
    weights = (layer["ln1_w"], layer["ln1_b"], layer["ln2_w"], layer["ln2_b"],
               layer["ln3_w"], layer["ln3_b"],
               layer["wqkv"], layer["bqkv"], layer["wo_self"], layer["bo_self"],
               layer["wq_ctx"], layer["bq_ctx"], layer["wkv_ctx"], layer["bkv_ctx"],
               layer["wo_ctx"], layer["bo_ctx"],
               layer["w1"], layer["b1"], layer["w2"], layer["b2"])
    in_specs = ([_batch_spec((Lq, H)), _batch_spec((Ls, H)),
                 _batch_spec((Lq, Lq)), _batch_spec((Lq, Ls))]
                + [_full_spec(w) for w in weights])
    out_shape = [jax.ShapeDtypeStruct((B, Lq, H), jnp.bfloat16)]
    out_specs = [_batch_spec((Lq, H))]
    if need_attn:
        out_shape.append(jax.ShapeDtypeStruct((B, Lq, Ls), jnp.float32))
        out_specs.append(_batch_spec((Lq, Ls)))

    outs = pl.pallas_call(
        _make_layer_kernel(heads, need_attn),
        grid=(B,),
        in_specs=in_specs,
        out_specs=tuple(out_specs),
        out_shape=tuple(out_shape),
        compiler_params=_COMPILER_PARAMS,
    )(x, enc_h, dec_bias, src_bias, *weights)
    if need_attn:
        return outs[0], outs[1]
    return outs[0], None


# -------------------------------------- fused final-LN + tied generator + log-softmax
# TODO(synk): for realistic vocab sizes the [V,H] table / [Lq,V] logits must be tiled
# over V (two-pass online logsumexp) to fit v7x's 64 MiB VMEM; whole-V blocks are used
# here because the test vocab is tiny.
def _generator_kernel(x_ref, lnw, lnb, emb_ref, gb_ref, o_ref):
    dec = _layernorm(x_ref[...].astype(jnp.float32), lnw, lnb)       # final LN fused
    logits = lax.dot_general(dec.astype(jnp.bfloat16), emb_ref[...],  # x @ emb.T, no copy
                             (((1,), (1,)), ((), ())),
                             preferred_element_type=jnp.float32) + gb_ref[...]
    z = logits - jnp.max(logits, axis=-1, keepdims=True)
    o_ref[...] = z - jnp.log(jnp.sum(jnp.exp(z), axis=-1, keepdims=True))


def _generator(params, x, V):
    B, Lq, H = x.shape
    args = (x, params["ln_f_w"], params["ln_f_b"], params["emb"], params["gen_b"])
    in_specs = [_batch_spec((Lq, H))] + [_full_spec(a) for a in args[1:]]
    return pl.pallas_call(
        _generator_kernel,
        grid=(B,),
        in_specs=in_specs,
        out_specs=_batch_spec((Lq, V)),
        out_shape=jax.ShapeDtypeStruct((B, Lq, V), jnp.float32),
        compiler_params=_COMPILER_PARAMS,
    )(*args)


# --------------------------------------------- fused pointer-generator copy kernel
def _copy_kernel(x_ref, enc_ref, attn_ref, ids_ref, lnw, lnb,
                 emb_ref, gb_ref, wa_ref, wb_ref, pb_ref, o_ref):
    dec = _layernorm(x_ref[...].astype(jnp.float32), lnw, lnb)       # [Lq, H]
    enc = enc_ref[...].astype(jnp.float32)                           # [Ls, H]
    attn = attn_ref[...]                                             # [Lq, Ls] f32
    Ls = enc.shape[0]
    V = emb_ref.shape[0]

    # tied-generator logits -> softmax
    logits = lax.dot_general(dec.astype(jnp.bfloat16), emb_ref[...],
                             (((1,), (1,)), ((), ())),
                             preferred_element_type=jnp.float32) + gb_ref[...]
    vocab = _softmax_rows(logits)                                    # [Lq, V]

    # gen_prob = sigmoid([dec, enc_dist] @ W + b) with split weights (no concat)
    enc_dist = _mm_f32(attn, enc)                                    # [Lq, H]
    gen_logit = _mm_f32(dec, wa_ref[...]) + _mm_f32(enc_dist, wb_ref[...]) + pb_ref[...]
    g = jax.nn.sigmoid(gen_logit)                                    # [Lq, 1]

    # scatter_add over the vocab == attn @ one_hot(ids); one-hot built in VMEM
    ids = ids_ref[...]                                               # [Ls, 1] int32
    one_hot = (lax.broadcasted_iota(jnp.int32, (Ls, V), 1) == ids).astype(jnp.float32)
    copy_d = _mm_f32(attn, one_hot)                                  # [Lq, V]

    # TODO(synk): eps added to avoid log(0); the given reference has no eps.
    o_ref[...] = jnp.log(g * vocab + (1.0 - g) * copy_d + 1e-12)


def _copy_generator(params, x, enc_h, attn_mean, enc_ids, V):
    B, Lq, H = x.shape
    Ls = enc_h.shape[1]
    ids3 = enc_ids[:, :, None].astype(jnp.int32)                     # [B, Ls, 1] (tiny)
    args = (x, enc_h, attn_mean, ids3,
            params["ln_f_w"], params["ln_f_b"], params["emb"], params["gen_b"],
            params["gen_proj_wa"], params["gen_proj_wb"], params["gen_proj_b"])
    in_specs = ([_batch_spec((Lq, H)), _batch_spec((Ls, H)),
                 _batch_spec((Lq, Ls)), _batch_spec((Ls, 1))]
                + [_full_spec(a) for a in args[4:]])
    return pl.pallas_call(
        _copy_kernel,
        grid=(B,),
        in_specs=in_specs,
        out_specs=_batch_spec((Lq, V)),
        out_shape=jax.ShapeDtypeStruct((B, Lq, V), jnp.float32),
        compiler_params=_COMPILER_PARAMS,
    )(*args)


# --------------------------------------------------------------------------- model
def sinusoid_pe(L, H):
    pos = jnp.arange(L, dtype=jnp.float32)[:, None]
    div = jnp.exp(jnp.arange(0, H, 2, dtype=jnp.float32) * -(math.log(10000.0) / H))
    ang = pos * div[None, :]
    pe = jnp.zeros((L, H), jnp.float32)
    pe = pe.at[:, 0::2].set(jnp.sin(ang))
    pe = pe.at[:, 1::2].set(jnp.cos(ang))
    return pe


def decoder_apply(params, decoder_input_ids, encoder_input_ids, encoder_hidden_states,
                  heads, copy_mode=False):
    B, Lq = decoder_input_ids.shape
    Benc, Ls = encoder_input_ids.shape
    H = encoder_hidden_states.shape[-1]
    V = params["emb"].shape[0]
    n_layers = len(params["layers"])

    # glue: embedding gather + positional encoding (bf16 storage, f32 math)
    emb = params["emb"][decoder_input_ids].astype(jnp.float32)
    x = (emb * math.sqrt(H) + sinusoid_pe(Lq, H)[None]).astype(jnp.bfloat16)
    enc_h = encoder_hidden_states.astype(jnp.bfloat16)

    # masks: causal + target padding (self), source padding (cross); [B,Lq,Lk] only
    causal = jnp.triu(jnp.ones((Lq, Lq), dtype=bool), k=1)
    dec_mask = (decoder_input_ids == 0)[:, None, :] | causal[None]
    dec_bias = jnp.where(dec_mask, NEG_INF, 0.0).astype(jnp.float32)
    src_bias = jnp.where((encoder_input_ids == 0)[:, None, :], NEG_INF, 0.0)
    src_bias = jnp.broadcast_to(src_bias, (B, Lq, Ls)).astype(jnp.float32)

    attn_mean = None
    for li, layer in enumerate(params["layers"]):
        need_attn = copy_mode and (li == n_layers - 1)   # only last layer's cross-attn
        x, a = _run_layer(layer, x, enc_h, dec_bias, src_bias, heads, need_attn)
        if need_attn:
            attn_mean = a

    if not copy_mode:
        combine = _generator(params, x, V)
    else:
        count = B // Benc
        enc_ids = jnp.repeat(encoder_input_ids, count, axis=0)   # == torch tile(dim=0)
        combine = _copy_generator(params, x, enc_h, attn_mean, enc_ids, V)

    # TODO(synk): decoder cache state (init_decoder_state / step) not modeled; return None.
    return combine, None


# -------------------------------------------------------------------------- params
def init_params(key, num_layers, H, F, V):
    keys = iter(jax.random.split(key, 16 + num_layers * 16))

    def mat(shape, std=0.02):
        return (std * jax.random.normal(next(keys), shape)).astype(jnp.bfloat16)

    def vecf(shape, std=0.02):
        return (std * jax.random.normal(next(keys), shape)).astype(jnp.float32)

    def zeros(shape):
        return jnp.zeros(shape, jnp.float32)

    def ones(shape):
        return jnp.ones(shape, jnp.float32)

    params = {
        "emb": mat((V, H)),                           # tied with the generator weight
        "gen_b": zeros((1, V)),
        "gen_proj_wa": vecf((H, 1)),                  # gen_proj weight split: dec_out part
        "gen_proj_wb": vecf((H, 1)),                  #                        enc_dist part
        "gen_proj_b": zeros((1, 1)),
        "ln_f_w": ones((1, H)), "ln_f_b": zeros((1, H)),
        "layers": [],
    }
    for _ in range(num_layers):
        params["layers"].append({
            "ln1_w": ones((1, H)), "ln1_b": zeros((1, H)),
            "ln2_w": ones((1, H)), "ln2_b": zeros((1, H)),
            "ln3_w": ones((1, H)), "ln3_b": zeros((1, H)),
            "wqkv": mat((H, 3 * H)), "bqkv": zeros((1, 3 * H)),     # fused Q|K|V
            "wo_self": mat((H, H)), "bo_self": zeros((1, H)),
            "wq_ctx": mat((H, H)), "bq_ctx": zeros((1, H)),
            "wkv_ctx": mat((H, 2 * H)), "bkv_ctx": zeros((1, 2 * H)),  # fused K|V
            "wo_ctx": mat((H, H)), "bo_ctx": zeros((1, H)),
            "w1": mat((H, F)), "b1": zeros((1, F)),
            "w2": mat((F, H)), "b2": zeros((1, H)),
        })
    return params


# ---------------------------------------------------------------------------- main
if __name__ == "__main__":
    num_layers, hidden, heads, d_ff, vocab = 2, 32, 4, 64, 64
    B, dec_len, src_len = 2, 8, 16

    root = jax.random.PRNGKey(0)
    k_param, k_dec, k_enc, k_hid = jax.random.split(root, 4)
    params = init_params(k_param, num_layers, hidden, d_ff, vocab)

    decoder_input_ids = jax.random.randint(k_dec, (B, dec_len), 1, vocab, dtype=jnp.int32)
    encoder_input_ids = jax.random.randint(k_enc, (B, src_len), 1, vocab, dtype=jnp.int32)
    encoder_hidden_states = jax.random.normal(k_hid, (B, src_len, hidden), dtype=jnp.float32)

    fwd = jax.jit(decoder_apply, static_argnames=("heads", "copy_mode"))

    # default path (copy=False): tied-generator logits -> log-softmax
    combine, _ = fwd(params, decoder_input_ids, encoder_input_ids,
                     encoder_hidden_states, heads=heads, copy_mode=False)
    combine = jax.block_until_ready(combine)
    assert combine.shape == (B, dec_len, vocab)
    assert bool(jnp.all(jnp.isfinite(combine)))
    assert bool(jnp.allclose(jnp.sum(jnp.exp(combine), axis=-1), 1.0, atol=1e-3))

    # copy path (pointer-generator mixture)
    combine_copy, _ = fwd(params, decoder_input_ids, encoder_input_ids,
                          encoder_hidden_states, heads=heads, copy_mode=True)
    combine_copy = jax.block_until_ready(combine_copy)
    assert combine_copy.shape == (B, dec_len, vocab)
    assert bool(jnp.all(jnp.isfinite(combine_copy)))

    print("KERNEL_OK")
</pallas_src>

<mosaic_0001>
module attributes {stable_mosaic.version = 11 : i64} {
  func.func @kernel(%arg0: i32, %arg1: memref<1x8x32xbf16, #tpu.memory_space<vmem>>, %arg2: memref<1x16x32xbf16, #tpu.memory_space<vmem>>, %arg3: memref<1x8x8xf32, #tpu.memory_space<vmem>>, %arg4: memref<1x8x16xf32, #tpu.memory_space<vmem>>, %arg5: memref<1x32xf32, #tpu.memory_space<vmem>>, %arg6: memref<1x32xf32, #tpu.memory_space<vmem>>, %arg7: memref<1x32xf32, #tpu.memory_space<vmem>>, %arg8: memref<1x32xf32, #tpu.memory_space<vmem>>, %arg9: memref<1x32xf32, #tpu.memory_space<vmem>>, %arg10: memref<1x32xf32, #tpu.memory_space<vmem>>, %arg11: memref<32x96xbf16, #tpu.memory_space<vmem>>, %arg12: memref<1x96xf32, #tpu.memory_space<vmem>>, %arg13: memref<32x32xbf16, #tpu.memory_space<vmem>>, %arg14: memref<1x32xf32, #tpu.memory_space<vmem>>, %arg15: memref<32x32xbf16, #tpu.memory_space<vmem>>, %arg16: memref<1x32xf32, #tpu.memory_space<vmem>>, %arg17: memref<32x64xbf16, #tpu.memory_space<vmem>>, %arg18: memref<1x64xf32, #tpu.memory_space<vmem>>, %arg19: memref<32x32xbf16, #tpu.memory_space<vmem>>, %arg20: memref<1x32xf32, #tpu.memory_space<vmem>>, %arg21: memref<32x64xbf16, #tpu.memory_space<vmem>>, %arg22: memref<1x64xf32, #tpu.memory_space<vmem>>, %arg23: memref<64x32xbf16, #tpu.memory_space<vmem>>, %arg24: memref<1x32xf32, #tpu.memory_space<vmem>>, %arg25: memref<1x8x32xbf16, #tpu.memory_space<vmem>>) attributes {dimension_semantics = [#tpu.dimension_semantics<parallel>], iteration_bounds = array<i64: 2>, scalar_prefetch = 0 : i64, scratch_operands = 0 : i64, tpu.core_type = #tpu.core_type<tc>, window_params = [{transform_indices = @transform_0, window_bounds = array<i64: 1, 8, 32>}, {transform_indices = @transform_1, window_bounds = array<i64: 1, 16, 32>}, {transform_indices = @transform_2, window_bounds = array<i64: 1, 8, 8>}, {transform_indices = @transform_3, window_bounds = array<i64: 1, 8, 16>}, {pipeline_mode = #tpu.pipeline_mode<synchronous>, transform_indices = @transform_4, window_bounds = array<i64: 1, 32>}, {pipeline_mode = #tpu.pipeline_mode<synchronous>, transform_indices = @transform_5, window_bounds = array<i64: 1, 32>}, {pipeline_mode = #tpu.pipeline_mode<synchronous>, transform_indices = @transform_6, window_bounds = array<i64: 1, 32>}, {pipeline_mode = #tpu.pipeline_mode<synchronous>, transform_indices = @transform_7, window_bounds = array<i64: 1, 32>}, {pipeline_mode = #tpu.pipeline_mode<synchronous>, transform_indices = @transform_8, window_bounds = array<i64: 1, 32>}, {pipeline_mode = #tpu.pipeline_mode<synchronous>, transform_indices = @transform_9, window_bounds = array<i64: 1, 32>}, {pipeline_mode = #tpu.pipeline_mode<synchronous>, transform_indices = @transform_10, window_bounds = array<i64: 32, 96>}, {pipeline_mode = #tpu.pipeline_mode<synchronous>, transform_indices = @transform_11, window_bounds = array<i64: 1, 96>}, {pipeline_mode = #tpu.pipeline_mode<synchronous>, transform_indices = @transform_12, window_bounds = array<i64: 32, 32>}, {pipeline_mode = #tpu.pipeline_mode<synchronous>, transform_indices = @transform_13, window_bounds = array<i64: 1, 32>}, {pipeline_mode = #tpu.pipeline_mode<synchronous>, transform_indices = @transform_14, window_bounds = array<i64: 32, 32>}, {pipeline_mode = #tpu.pipeline_mode<synchronous>, transform_indices = @transform_15, window_bounds = array<i64: 1, 32>}, {pipeline_mode = #tpu.pipeline_mode<synchronous>, transform_indices = @transform_16, window_bounds = array<i64: 32, 64>}, {pipeline_mode = #tpu.pipeline_mode<synchronous>, transform_indices = @transform_17, window_bounds = array<i64: 1, 64>}, {pipeline_mode = #tpu.pipeline_mode<synchronous>, transform_indices = @transform_18, window_bounds = array<i64: 32, 32>}, {pipeline_mode = #tpu.pipeline_mode<synchronous>, transform_indices = @transform_19, window_bounds = array<i64: 1, 32>}, {pipeline_mode = #tpu.pipeline_mode<synchronous>, transform_indices = @transform_20, window_bounds = array<i64: 32, 64>}, {pipeline_mode = #tpu.pipeline_mode<synchronous>, transform_indices = @transform_21, window_bounds = array<i64: 1, 64>}, {pipeline_mode = #tpu.pipeline_mode<synchronous>, transform_indices = @transform_22, window_bounds = array<i64: 64, 32>}, {pipeline_mode = #tpu.pipeline_mode<synchronous>, transform_indices = @transform_23, window_bounds = array<i64: 1, 32>}, {transform_indices = @transform_24, window_bounds = array<i64: 1, 8, 32>}]} {
    %c0 = arith.constant 0 : index
    %c0_0 = arith.constant 0 : index
    %c0_1 = arith.constant 0 : index
    %0 = vector.load %arg1[%c0, %c0_0, %c0_1] : memref<1x8x32xbf16, #tpu.memory_space<vmem>>, vector<1x8x32xbf16>
    %1 = vector.shape_cast %0 : vector<1x8x32xbf16> to vector<8x32xbf16>
    %2 = arith.extf %1 : vector<8x32xbf16> to vector<8x32xf32>
    %c0_2 = arith.constant 0 : index
    %c0_3 = arith.constant 0 : index
    %c0_4 = arith.constant 0 : index
    %3 = vector.load %arg2[%c0_2, %c0_3, %c0_4] : memref<1x16x32xbf16, #tpu.memory_space<vmem>>, vector<1x16x32xbf16>
    %4 = vector.shape_cast %3 : vector<1x16x32xbf16> to vector<16x32xbf16>
    %5 = arith.extf %4 : vector<16x32xbf16> to vector<16x32xf32>
    %c0_5 = arith.constant 0 : index
    %c0_6 = arith.constant 0 : index
    %c0_7 = arith.constant 0 : index
    %6 = vector.load %arg3[%c0_5, %c0_6, %c0_7] : memref<1x8x8xf32, #tpu.memory_space<vmem>>, vector<1x8x8xf32>
    %7 = vector.shape_cast %6 : vector<1x8x8xf32> to vector<8x8xf32>
    %c0_8 = arith.constant 0 : index
    %c0_9 = arith.constant 0 : index
    %c0_10 = arith.constant 0 : index
    %8 = vector.load %arg4[%c0_8, %c0_9, %c0_10] : memref<1x8x16xf32, #tpu.memory_space<vmem>>, vector<1x8x16xf32>
    %9 = vector.shape_cast %8 : vector<1x8x16xf32> to vector<8x16xf32>
    %cst = arith.constant dense<0.000000e+00> : vector<8xf32>
    %10 = vector.multi_reduction <add>, %2, %cst [1] : vector<8x32xf32> to vector<8xf32>
    %11 = vector.shape_cast %10 : vector<8xf32> to vector<8x1xf32>
    %cst_11 = arith.constant 3.200000e+01 : f32
    %12 = vector.broadcast %cst_11 : f32 to vector<8x1xf32>
    %13 = arith.divf %11, %12 : vector<8x1xf32>
    %14 = vector.broadcast %13 : vector<8x1xf32> to vector<8x32xf32>
    %15 = arith.subf %2, %14 : vector<8x32xf32>
    %16 = arith.mulf %15, %15 : vector<8x32xf32>
    %cst_12 = arith.constant dense<0.000000e+00> : vector<8xf32>
    %17 = vector.multi_reduction <add>, %16, %cst_12 [1] : vector<8x32xf32> to vector<8xf32>
    %18 = vector.shape_cast %17 : vector<8xf32> to vector<8x1xf32>
    %cst_13 = arith.constant 3.200000e+01 : f32
    %19 = vector.broadcast %cst_13 : f32 to vector<8x1xf32>
    %20 = arith.divf %18, %19 : vector<8x1xf32>
    %21 = vector.broadcast %13 : vector<8x1xf32> to vector<8x32xf32>
    %22 = arith.subf %2, %21 : vector<8x32xf32>
    %cst_14 = arith.constant 9.99999997E-7 : f32
    %23 = vector.broadcast %cst_14 : f32 to vector<8x1xf32>
    %24 = arith.addf %20, %23 : vector<8x1xf32>
    %25 = math.rsqrt %24 : vector<8x1xf32>
    %26 = vector.broadcast %25 : vector<8x1xf32> to vector<8x32xf32>
    %27 = arith.mulf %22, %26 : vector<8x32xf32>
    %c0_15 = arith.constant 0 : index
    %c0_16 = arith.constant 0 : index
    %28 = vector.load %arg5[%c0_15, %c0_16] : memref<1x32xf32, #tpu.memory_space<vmem>>, vector<1x32xf32>
    %29 = vector.broadcast %28 : vector<1x32xf32> to vector<8x32xf32>
    %30 = arith.mulf %27, %29 : vector<8x32xf32>
    %c0_17 = arith.constant 0 : index
    %c0_18 = arith.constant 0 : index
    %31 = vector.load %arg6[%c0_17, %c0_18] : memref<1x32xf32, #tpu.memory_space<vmem>>, vector<1x32xf32>
    %32 = vector.broadcast %31 : vector<1x32xf32> to vector<8x32xf32>
    %33 = arith.addf %30, %32 : vector<8x32xf32>
    %c0_19 = arith.constant 0 : index
    %c0_20 = arith.constant 0 : index
    %34 = vector.load %arg11[%c0_19, %c0_20] : memref<32x96xbf16, #tpu.memory_space<vmem>>, vector<32x96xbf16>
    %35 = arith.truncf %33 : vector<8x32xf32> to vector<8x32xbf16>
    %cst_21 = arith.constant dense<0.000000e+00> : vector<8x96xf32>
    %36 = tpu.matmul %35, %34, %cst_21 {dimension_numbers = #tpu.dot_dimension_numbers<[1], [0], [0], [1], [0, 0, 1, 1], [], []>} : vector<8x32xbf16>, vector<32x96xbf16>, vector<8x96xf32> -> vector<8x96xf32>
    %c0_22 = arith.constant 0 : index
    %c0_23 = arith.constant 0 : index
    %37 = vector.load %arg12[%c0_22, %c0_23] : memref<1x96xf32, #tpu.memory_space<vmem>>, vector<1x96xf32>
    %38 = vector.broadcast %37 : vector<1x96xf32> to vector<8x96xf32>
    %39 = arith.addf %36, %38 : vector<8x96xf32>
    %c0_24 = arith.constant 0 : index
    %c0_25 = arith.constant 0 : index
    %40 = vector.load %arg13[%c0_24, %c0_25] : memref<32x32xbf16, #tpu.memory_space<vmem>>, vector<32x32xbf16>
    %cst_26 = arith.constant 0.000000e+00 : f32
    %41 = vector.broadcast %cst_26 : f32 to vector<8x32xf32>
    %42 = vector.extract_strided_slice %39 {offsets = [0, 0], sizes = [8, 8], strides = [1, 1]} : vector<8x96xf32> to vector<8x8xf32>
    %cst_27 = arith.constant 0.353553385 : f32
    %43 = vector.broadcast %cst_27 : f32 to vector<8x8xf32>
    %44 = arith.mulf %42, %43 : vector<8x8xf32>
    %45 = vector.extract_strided_slice %39 {offsets = [0, 32], sizes = [8, 8], strides = [1, 1]} : vector<8x96xf32> to vector<8x8xf32>
    %46 = vector.extract_strided_slice %39 {offsets = [0, 64], sizes = [8, 8], strides = [1, 1]} : vector<8x96xf32> to vector<8x8xf32>
    %cst_28 = arith.constant dense<0.000000e+00> : vector<8x8xf32>
    %47 = tpu.matmul %44, %45, %cst_28 {dimension_numbers = #tpu.dot_dimension_numbers<[1], [1], [0], [0], [0, 0, 1, 0], [], []>} : vector<8x8xf32>, vector<8x8xf32>, vector<8x8xf32> -> vector<8x8xf32>
    %48 = arith.addf %47, %7 : vector<8x8xf32>
    %cst_29 = arith.constant dense<0xFF800000> : vector<8xf32>
    %49 = vector.multi_reduction <maximumf>, %48, %cst_29 [1] : vector<8x8xf32> to vector<8xf32>
    %50 = vector.shape_cast %49 : vector<8xf32> to vector<8x1xf32>
    %51 = vector.broadcast %50 : vector<8x1xf32> to vector<8x8xf32>
    %52 = arith.subf %48, %51 : vector<8x8xf32>
    %53 = math.exp %52 : vector<8x8xf32>
    %cst_30 = arith.constant dense<0.000000e+00> : vector<8xf32>
    %54 = vector.multi_reduction <add>, %53, %cst_30 [1] : vector<8x8xf32> to vector<8xf32>
    %55 = vector.shape_cast %54 : vector<8xf32> to vector<8x1xf32>
    %56 = vector.broadcast %55 : vector<8x1xf32> to vector<8x8xf32>
    %57 = arith.divf %53, %56 : vector<8x8xf32>
    %cst_31 = arith.constant dense<0.000000e+00> : vector<8x8xf32>
    %58 = tpu.matmul %57, %46, %cst_31 {dimension_numbers = #tpu.dot_dimension_numbers<[1], [0], [0], [1], [0, 0, 1, 1], [], []>} : vector<8x8xf32>, vector<8x8xf32>, vector<8x8xf32> -> vector<8x8xf32>
    %59 = vector.extract_strided_slice %40 {offsets = [0, 0], sizes = [8, 32], strides = [1, 1]} : vector<32x32xbf16> to vector<8x32xbf16>
    %60 = arith.truncf %58 : vector<8x8xf32> to vector<8x8xbf16>
    %cst_32 = arith.constant dense<0.000000e+00> : vector<8x32xf32>
    %61 = tpu.matmul %60, %59, %cst_32 {dimension_numbers = #tpu.dot_dimension_numbers<[1], [0], [0], [1], [0, 0, 1, 1], [], []>} : vector<8x8xbf16>, vector<8x32xbf16>, vector<8x32xf32> -> vector<8x32xf32>
    %62 = arith.addf %41, %61 : vector<8x32xf32>
    %63 = vector.extract_strided_slice %39 {offsets = [0, 8], sizes = [8, 8], strides = [1, 1]} : vector<8x96xf32> to vector<8x8xf32>
    %cst_33 = arith.constant 0.353553385 : f32
    %64 = vector.broadcast %cst_33 : f32 to vector<8x8xf32>
    %65 = arith.mulf %63, %64 : vector<8x8xf32>
    %66 = vector.extract_strided_slice %39 {offsets = [0, 40], sizes = [8, 8], strides = [1, 1]} : vector<8x96xf32> to vector<8x8xf32>
    %67 = vector.extract_strided_slice %39 {offsets = [0, 72], sizes = [8, 8], strides = [1, 1]} : vector<8x96xf32> to vector<8x8xf32>
    %cst_34 = arith.constant dense<0.000000e+00> : vector<8x8xf32>
    %68 = tpu.matmul %65, %66, %cst_34 {dimension_numbers = #tpu.dot_dimension_numbers<[1], [1], [0], [0], [0, 0, 1, 0], [], []>} : vector<8x8xf32>, vector<8x8xf32>, vector<8x8xf32> -> vector<8x8xf32>
    %69 = arith.addf %68, %7 : vector<8x8xf32>
    %cst_35 = arith.constant dense<0xFF800000> : vector<8xf32>
    %70 = vector.multi_reduction <maximumf>, %69, %cst_35 [1] : vector<8x8xf32> to vector<8xf32>
    %71 = vector.shape_cast %70 : vector<8xf32> to vector<8x1xf32>
    %72 = vector.broadcast %71 : vector<8x1xf32> to vector<8x8xf32>
    %73 = arith.subf %69, %72 : vector<8x8xf32>
    %74 = math.exp %73 : vector<8x8xf32>
    %cst_36 = arith.constant dense<0.000000e+00> : vector<8xf32>
    %75 = vector.multi_reduction <add>, %74, %cst_36 [1] : vector<8x8xf32> to vector<8xf32>
    %76 = vector.shape_cast %75 : vector<8xf32> to vector<8x1xf32>
    %77 = vector.broadcast %76 : vector<8x1xf32> to vector<8x8xf32>
    %78 = arith.divf %74, %77 : vector<8x8xf32>
    %cst_37 = arith.constant dense<0.000000e+00> : vector<8x8xf32>
    %79 = tpu.matmul %78, %67, %cst_37 {dimension_numbers = #tpu.dot_dimension_numbers<[1], [0], [0], [1], [0, 0, 1, 1], [], []>} : vector<8x8xf32>, vector<8x8xf32>, vector<8x8xf32> -> vector<8x8xf32>
    %80 = vector.extract_strided_slice %40 {offsets = [8, 0], sizes = [8, 32], strides = [1, 1]} : vector<32x32xbf16> to vector<8x32xbf16>
    %81 = arith.truncf %79 : vector<8x8xf32> to vector<8x8xbf16>
    %cst_38 = arith.constant dense<0.000000e+00> : vector<8x32xf32>
    %82 = tpu.matmul %81, %80, %cst_38 {dimension_numbers = #tpu.dot_dimension_numbers<[1], [0], [0], [1], [0, 0, 1, 1], [], []>} : vector<8x8xbf16>, vector<8x32xbf16>, vector<8x32xf32> -> vector<8x32xf32>
    %83 = arith.addf %62, %82 : vector<8x32xf32>
    %84 = vector.extract_strided_slice %39 {offsets = [0, 16], sizes = [8, 8], strides = [1, 1]} : vector<8x96xf32> to vector<8x8xf32>
    %cst_39 = arith.constant 0.353553385 : f32
    %85 = vector.broadcast %cst_39 : f32 to vector<8x8xf32>
    %86 = arith.mulf %84, %85 : vector<8x8xf32>
    %87 = vector.extract_strided_slice %39 {offsets = [0, 48], sizes = [8, 8], strides = [1, 1]} : vector<8x96xf32> to vector<8x8xf32>
    %88 = vector.extract_strided_slice %39 {offsets = [0, 80], sizes = [8, 8], strides = [1, 1]} : vector<8x96xf32> to vector<8x8xf32>
    %cst_40 = arith.constant dense<0.000000e+00> : vector<8x8xf32>
    %89 = tpu.matmul %86, %87, %cst_40 {dimension_numbers = #tpu.dot_dimension_numbers<[1], [1], [0], [0], [0, 0, 1, 0], [], []>} : vector<8x8xf32>, vector<8x8xf32>, vector<8x8xf32> -> vector<8x8xf32>
    %90 = arith.addf %89, %7 : vector<8x8xf32>
    %cst_41 = arith.constant dense<0xFF800000> : vector<8xf32>
    %91 = vector.multi_reduction <maximumf>, %90, %cst_41 [1] : vector<8x8xf32> to vector<8xf32>
    %92 = vector.shape_cast %91 : vector<8xf32> to vector<8x1xf32>
    %93 = vector.broadcast %92 : vector<8x1xf32> to vector<8x8xf32>
    %94 = arith.subf %90, %93 : vector<8x8xf32>
    %95 = math.exp %94 : vector<8x8xf32>
    %cst_42 = arith.constant dense<0.000000e+00> : vector<8xf32>
    %96 = vector.multi_reduction <add>, %95, %cst_42 [1] : vector<8x8xf32> to vector<8xf32>
    %97 = vector.shape_cast %96 : vector<8xf32> to vector<8x1xf32>
    %98 = vector.broadcast %97 : vector<8x1xf32> to vector<8x8xf32>
    %99 = arith.divf %95, %98 : vector<8x8xf32>
    %cst_43 = arith.constant dense<0.000000e+00> : vector<8x8xf32>
    %100 = tpu.matmul %99, %88, %cst_43 {dimension_numbers = #tpu.dot_dimension_numbers<[1], [0], [0], [1], [0, 0, 1, 1], [], []>} : vector<8x8xf32>, vector<8x8xf32>, vector<8x8xf32> -> vector<8x8xf32>
    %101 = vector.extract_strided_slice %40 {offsets = [16, 0], sizes = [8, 32], strides = [1, 1]} : vector<32x32xbf16> to vector<8x32xbf16>
    %102 = arith.truncf %100 : vector<8x8xf32> to vector<8x8xbf16>
    %cst_44 = arith.constant dense<0.000000e+00> : vector<8x32xf32>
    %103 = tpu.matmul %102, %101, %cst_44 {dimension_numbers = #tpu.dot_dimension_numbers<[1], [0], [0], [1], [0, 0, 1, 1], [], []>} : vector<8x8xbf16>, vector<8x32xbf16>, vector<8x32xf32> -> vector<8x32xf32>
    %104 = arith.addf %83, %103 : vector<8x32xf32>
    %105 = vector.extract_strided_slice %39 {offsets = [0, 24], sizes = [8, 8], strides = [1, 1]} : vector<8x96xf32> to vector<8x8xf32>
    %cst_45 = arith.constant 0.353553385 : f32
    %106 = vector.broadcast %cst_45 : f32 to vector<8x8xf32>
    %107 = arith.mulf %105, %106 : vector<8x8xf32>
    %108 = vector.extract_strided_slice %39 {offsets = [0, 56], sizes = [8, 8], strides = [1, 1]} : vector<8x96xf32> to vector<8x8xf32>
    %109 = vector.extract_strided_slice %39 {offsets = [0, 88], sizes = [8, 8], strides = [1, 1]} : vector<8x96xf32> to vector<8x8xf32>
    %cst_46 = arith.constant dense<0.000000e+00> : vector<8x8xf32>
    %110 = tpu.matmul %107, %108, %cst_46 {dimension_numbers = #tpu.dot_dimension_numbers<[1], [1], [0], [0], [0, 0, 1, 0], [], []>} : vector<8x8xf32>, vector<8x8xf32>, vector<8x8xf32> -> vector<8x8xf32>
    %111 = arith.addf %110, %7 : vector<8x8xf32>
    %cst_47 = arith.constant dense<0xFF800000> : vector<8xf32>
    %112 = vector.multi_reduction <maximumf>, %111, %cst_47 [1] : vector<8x8xf32> to vector<8xf32>
    %113 = vector.shape_cast %112 : vector<8xf32> to vector<8x1xf32>
    %114 = vector.broadcast %113 : vector<8x1xf32> to vector<8x8xf32>
    %115 = arith.subf %111, %114 : vector<8x8xf32>
    %116 = math.exp %115 : vector<8x8xf32>
    %cst_48 = arith.constant dense<0.000000e+00> : vector<8xf32>
    %117 = vector.multi_reduction <add>, %116, %cst_48 [1] : vector<8x8xf32> to vector<8xf32>
    %118 = vector.shape_cast %117 : vector<8xf32> to vector<8x1xf32>
    %119 = vector.broadcast %118 : vector<8x1xf32> to vector<8x8xf32>
    %120 = arith.divf %116, %119 : vector<8x8xf32>
    %cst_49 = arith.constant dense<0.000000e+00> : vector<8x8xf32>
    %121 = tpu.matmul %120, %109, %cst_49 {dimension_numbers = #tpu.dot_dimension_numbers<[1], [0], [0], [1], [0, 0, 1, 1], [], []>} : vector<8x8xf32>, vector<8x8xf32>, vector<8x8xf32> -> vector<8x8xf32>
    %122 = vector.extract_strided_slice %40 {offsets = [24, 0], sizes = [8, 32], strides = [1, 1]} : vector<32x32xbf16> to vector<8x32xbf16>
    %123 = arith.truncf %121 : vector<8x8xf32> to vector<8x8xbf16>
    %cst_50 = arith.constant dense<0.000000e+00> : vector<8x32xf32>
    %124 = tpu.matmul %123, %122, %cst_50 {dimension_numbers = #tpu.dot_dimension_numbers<[1], [0], [0], [1], [0, 0, 1, 1], [], []>} : vector<8x8xbf16>, vector<8x32xbf16>, vector<8x32xf32> -> vector<8x32xf32>
    %125 = arith.addf %104, %124 : vector<8x32xf32>
    %c0_51 = arith.constant 0 : index
    %c0_52 = arith.constant 0 : index
    %126 = vector.load %arg14[%c0_51, %c0_52] : memref<1x32xf32, #tpu.memory_space<vmem>>, vector<1x32xf32>
    %127 = vector.broadcast %126 : vector<1x32xf32> to vector<8x32xf32>
    %128 = arith.addf %125, %127 : vector<8x32xf32>
    %129 = arith.addf %128, %2 : vector<8x32xf32>
    %cst_53 = arith.constant dense<0.000000e+00> : vector<8xf32>
    %130 = vector.multi_reduction <add>, %129, %cst_53 [1] : vector<8x32xf32> to vector<8xf32>
    %131 = vector.shape_cast %130 : vector<8xf32> to vector<8x1xf32>
    %cst_54 = arith.constant 3.200000e+01 : f32
    %132 = vector.broadcast %cst_54 : f32 to vector<8x1xf32>
    %133 = arith.divf %131, %132 : vector<8x1xf32>
    %134 = vector.broadcast %133 : vector<8x1xf32> to vector<8x32xf32>
    %135 = arith.subf %129, %134 : vector<8x32xf32>
    %136 = arith.mulf %135, %135 : vector<8x32xf32>
    %cst_55 = arith.constant dense<0.000000e+00> : vector<8xf32>
    %137 = vector.multi_reduction <add>, %136, %cst_55 [1] : vector<8x32xf32> to vector<8xf32>
    %138 = vector.shape_cast %137 : vector<8xf32> to vector<8x1xf32>
    %cst_56 = arith.constant 3.200000e+01 : f32
    %139 = vector.broadcast %cst_56 : f32 to vector<8x1xf32>
    %140 = arith.divf %138, %139 : vector<8x1xf32>
    %141 = vector.broadcast %133 : vector<8x1xf32> to vector<8x32xf32>
    %142 = arith.subf %129, %141 : vector<8x32xf32>
    %cst_57 = arith.constant 9.99999997E-7 : f32
    %143 = vector.broadcast %cst_57 : f32 to vector<8x1xf32>
    %144 = arith.addf %140, %143 : vector<8x1xf32>
    %145 = math.rsqrt %144 : vector<8x1xf32>
    %146 = vector.broadcast %145 : vector<8x1xf32> to vector<8x32xf32>
    %147 = arith.mulf %142, %146 : vector<8x32xf32>
    %c0_58 = arith.constant 0 : index
    %c0_59 = arith.constant 0 : index
    %148 = vector.load %arg7[%c0_58, %c0_59] : memref<1x32xf32, #tpu.memory_space<vmem>>, vector<1x32xf32>
    %149 = vector.broadcast %148 : vector<1x32xf32> to vector<8x32xf32>
    %150 = arith.mulf %147, %149 : vector<8x32xf32>
    %c0_60 = arith.constant 0 : index
    %c0_61 = arith.constant 0 : index
    %151 = vector.load %arg8[%c0_60, %c0_61] : memref<1x32xf32, #tpu.memory_space<vmem>>, vector<1x32xf32>
    %152 = vector.broadcast %151 : vector<1x32xf32> to vector<8x32xf32>
    %153 = arith.addf %150, %152 : vector<8x32xf32>
    %c0_62 = arith.constant 0 : index
    %c0_63 = arith.constant 0 : index
    %154 = vector.load %arg15[%c0_62, %c0_63] : memref<32x32xbf16, #tpu.memory_space<vmem>>, vector<32x32xbf16>
    %155 = arith.truncf %153 : vector<8x32xf32> to vector<8x32xbf16>
    %cst_64 = arith.constant dense<0.000000e+00> : vector<8x32xf32>
    %156 = tpu.matmul %155, %154, %cst_64 {dimension_numbers = #tpu.dot_dimension_numbers<[1], [0], [0], [1], [0, 0, 1, 1], [], []>} : vector<8x32xbf16>, vector<32x32xbf16>, vector<8x32xf32> -> vector<8x32xf32>
    %c0_65 = arith.constant 0 : index
    %c0_66 = arith.constant 0 : index
    %157 = vector.load %arg16[%c0_65, %c0_66] : memref<1x32xf32, #tpu.memory_space<vmem>>, vector<1x32xf32>
    %158 = vector.broadcast %157 : vector<1x32xf32> to vector<8x32xf32>
    %159 = arith.addf %156, %158 : vector<8x32xf32>
    %c0_67 = arith.constant 0 : index
    %c0_68 = arith.constant 0 : index
    %160 = vector.load %arg17[%c0_67, %c0_68] : memref<32x64xbf16, #tpu.memory_space<vmem>>, vector<32x64xbf16>
    %161 = arith.truncf %5 : vector<16x32xf32> to vector<16x32xbf16>
    %cst_69 = arith.constant dense<0.000000e+00> : vector<16x64xf32>
    %162 = tpu.matmul %161, %160, %cst_69 {dimension_numbers = #tpu.dot_dimension_numbers<[1], [0], [0], [1], [0, 0, 1, 1], [], []>} : vector<16x32xbf16>, vector<32x64xbf16>, vector<16x64xf32> -> vector<16x64xf32>
    %c0_70 = arith.constant 0 : index
    %c0_71 = arith.constant 0 : index
    %163 = vector.load %arg18[%c0_70, %c0_71] : memref<1x64xf32, #tpu.memory_space<vmem>>, vector<1x64xf32>
    %164 = vector.broadcast %163 : vector<1x64xf32> to vector<16x64xf32>
    %165 = arith.addf %162, %164 : vector<16x64xf32>
    %c0_72 = arith.constant 0 : index
    %c0_73 = arith.constant 0 : index
    %166 = vector.load %arg19[%c0_72, %c0_73] : memref<32x32xbf16, #tpu.memory_space<vmem>>, vector<32x32xbf16>
    %cst_74 = arith.constant 0.000000e+00 : f32
    %167 = vector.broadcast %cst_74 : f32 to vector<8x32xf32>
    %168 = vector.extract_strided_slice %159 {offsets = [0, 0], sizes = [8, 8], strides = [1, 1]} : vector<8x32xf32> to vector<8x8xf32>
    %cst_75 = arith.constant 0.353553385 : f32
    %169 = vector.broadcast %cst_75 : f32 to vector<8x8xf32>
    %170 = arith.mulf %168, %169 : vector<8x8xf32>
    %171 = vector.extract_strided_slice %165 {offsets = [0, 0], sizes = [16, 8], strides = [1, 1]} : vector<16x64xf32> to vector<16x8xf32>
    %172 = vector.extract_strided_slice %165 {offsets = [0, 32], sizes = [16, 8], strides = [1, 1]} : vector<16x64xf32> to vector<16x8xf32>
    %cst_76 = arith.constant dense<0.000000e+00> : vector<8x16xf32>
    %173 = tpu.matmul %170, %171, %cst_76 {dimension_numbers = #tpu.dot_dimension_numbers<[1], [1], [0], [0], [0, 0, 1, 0], [], []>} : vector<8x8xf32>, vector<16x8xf32>, vector<8x16xf32> -> vector<8x16xf32>
    %174 = arith.addf %173, %9 : vector<8x16xf32>
    %cst_77 = arith.constant dense<0xFF800000> : vector<8xf32>
    %175 = vector.multi_reduction <maximumf>, %174, %cst_77 [1] : vector<8x16xf32> to vector<8xf32>
    %176 = vector.shape_cast %175 : vector<8xf32> to vector<8x1xf32>
    %177 = vector.broadcast %176 : vector<8x1xf32> to vector<8x16xf32>
    %178 = arith.subf %174, %177 : vector<8x16xf32>
    %179 = math.exp %178 : vector<8x16xf32>
    %cst_78 = arith.constant dense<0.000000e+00> : vector<8xf32>
    %180 = vector.multi_reduction <add>, %179, %cst_78 [1] : vector<8x16xf32> to vector<8xf32>
    %181 = vector.shape_cast %180 : vector<8xf32> to vector<8x1xf32>
    %182 = vector.broadcast %181 : vector<8x1xf32> to vector<8x16xf32>
    %183 = arith.divf %179, %182 : vector<8x16xf32>
    %cst_79 = arith.constant dense<0.000000e+00> : vector<8x8xf32>
    %184 = tpu.matmul %183, %172, %cst_79 {dimension_numbers = #tpu.dot_dimension_numbers<[1], [0], [0], [1], [0, 0, 1, 1], [], []>} : vector<8x16xf32>, vector<16x8xf32>, vector<8x8xf32> -> vector<8x8xf32>
    %185 = vector.extract_strided_slice %166 {offsets = [0, 0], sizes = [8, 32], strides = [1, 1]} : vector<32x32xbf16> to vector<8x32xbf16>
    %186 = arith.truncf %184 : vector<8x8xf32> to vector<8x8xbf16>
    %cst_80 = arith.constant dense<0.000000e+00> : vector<8x32xf32>
    %187 = tpu.matmul %186, %185, %cst_80 {dimension_numbers = #tpu.dot_dimension_numbers<[1], [0], [0], [1], [0, 0, 1, 1], [], []>} : vector<8x8xbf16>, vector<8x32xbf16>, vector<8x32xf32> -> vector<8x32xf32>
    %188 = arith.addf %167, %187 : vector<8x32xf32>
    %189 = vector.extract_strided_slice %159 {offsets = [0, 8], sizes = [8, 8], strides = [1, 1]} : vector<8x32xf32> to vector<8x8xf32>
    %cst_81 = arith.constant 0.353553385 : f32
    %190 = vector.broadcast %cst_81 : f32 to vector<8x8xf32>
    %191 = arith.mulf %189, %190 : vector<8x8xf32>
    %192 = vector.extract_strided_slice %165 {offsets = [0, 8], sizes = [16, 8], strides = [1, 1]} : vector<16x64xf32> to vector<16x8xf32>
    %193 = vector.extract_strided_slice %165 {offsets = [0, 40], sizes = [16, 8], strides = [1, 1]} : vector<16x64xf32> to vector<16x8xf32>
    %cst_82 = arith.constant dense<0.000000e+00> : vector<8x16xf32>
    %194 = tpu.matmul %191, %192, %cst_82 {dimension_numbers = #tpu.dot_dimension_numbers<[1], [1], [0], [0], [0, 0, 1, 0], [], []>} : vector<8x8xf32>, vector<16x8xf32>, vector<8x16xf32> -> vector<8x16xf32>
    %195 = arith.addf %194, %9 : vector<8x16xf32>
    %cst_83 = arith.constant dense<0xFF800000> : vector<8xf32>
    %196 = vector.multi_reduction <maximumf>, %195, %cst_83 [1] : vector<8x16xf32> to vector<8xf32>
    %197 = vector.shape_cast %196 : vector<8xf32> to vector<8x1xf32>
    %198 = vector.broadcast %197 : vector<8x1xf32> to vector<8x16xf32>
    %199 = arith.subf %195, %198 : vector<8x16xf32>
    %200 = math.exp %199 : vector<8x16xf32>
    %cst_84 = arith.constant dense<0.000000e+00> : vector<8xf32>
    %201 = vector.multi_reduction <add>, %200, %cst_84 [1] : vector<8x16xf32> to vector<8xf32>
    %202 = vector.shape_cast %201 : vector<8xf32> to vector<8x1xf32>
    %203 = vector.broadcast %202 : vector<8x1xf32> to vector<8x16xf32>
    %204 = arith.divf %200, %203 : vector<8x16xf32>
    %cst_85 = arith.constant dense<0.000000e+00> : vector<8x8xf32>
    %205 = tpu.matmul %204, %193, %cst_85 {dimension_numbers = #tpu.dot_dimension_numbers<[1], [0], [0], [1], [0, 0, 1, 1], [], []>} : vector<8x16xf32>, vector<16x8xf32>, vector<8x8xf32> -> vector<8x8xf32>
    %206 = vector.extract_strided_slice %166 {offsets = [8, 0], sizes = [8, 32], strides = [1, 1]} : vector<32x32xbf16> to vector<8x32xbf16>
    %207 = arith.truncf %205 : vector<8x8xf32> to vector<8x8xbf16>
    %cst_86 = arith.constant dense<0.000000e+00> : vector<8x32xf32>
    %208 = tpu.matmul %207, %206, %cst_86 {dimension_numbers = #tpu.dot_dimension_numbers<[1], [0], [0], [1], [0, 0, 1, 1], [], []>} : vector<8x8xbf16>, vector<8x32xbf16>, vector<8x32xf32> -> vector<8x32xf32>
    %209 = arith.addf %188, %208 : vector<8x32xf32>
    %210 = vector.extract_strided_slice %159 {offsets = [0, 16], sizes = [8, 8], strides = [1, 1]} : vector<8x32xf32> to vector<8x8xf32>
    %cst_87 = arith.constant 0.353553385 : f32
    %211 = vector.broadcast %cst_87 : f32 to vector<8x8xf32>
    %212 = arith.mulf %210, %211 : vector<8x8xf32>
    %213 = vector.extract_strided_slice %165 {offsets = [0, 16], sizes = [16, 8], strides = [1, 1]} : vector<16x64xf32> to vector<16x8xf32>
    %214 = vector.extract_strided_slice %165 {offsets = [0, 48], sizes = [16, 8], strides = [1, 1]} : vector<16x64xf32> to vector<16x8xf32>
    %cst_88 = arith.constant dense<0.000000e+00> : vector<8x16xf32>
    %215 = tpu.matmul %212, %213, %cst_88 {dimension_numbers = #tpu.dot_dimension_numbers<[1], [1], [0], [0], [0, 0, 1, 0], [], []>} : vector<8x8xf32>, vector<16x8xf32>, vector<8x16xf32> -> vector<8x16xf32>
    %216 = arith.addf %215, %9 : vector<8x16xf32>
    %cst_89 = arith.constant dense<0xFF800000> : vector<8xf32>
    %217 = vector.multi_reduction <maximumf>, %216, %cst_89 [1] : vector<8x16xf32> to vector<8xf32>
    %218 = vector.shape_cast %217 : vector<8xf32> to vector<8x1xf32>
    %219 = vector.broadcast %218 : vector<8x1xf32> to vector<8x16xf32>
    %220 = arith.subf %216, %219 : vector<8x16xf32>
    %221 = math.exp %220 : vector<8x16xf32>
    %cst_90 = arith.constant dense<0.000000e+00> : vector<8xf32>
    %222 = vector.multi_reduction <add>, %221, %cst_90 [1] : vector<8x16xf32> to vector<8xf32>
    %223 = vector.shape_cast %222 : vector<8xf32> to vector<8x1xf32>
    %224 = vector.broadcast %223 : vector<8x1xf32> to vector<8x16xf32>
    %225 = arith.divf %221, %224 : vector<8x16xf32>
    %cst_91 = arith.constant dense<0.000000e+00> : vector<8x8xf32>
    %226 = tpu.matmul %225, %214, %cst_91 {dimension_numbers = #tpu.dot_dimension_numbers<[1], [0], [0], [1], [0, 0, 1, 1], [], []>} : vector<8x16xf32>, vector<16x8xf32>, vector<8x8xf32> -> vector<8x8xf32>
    %227 = vector.extract_strided_slice %166 {offsets = [16, 0], sizes = [8, 32], strides = [1, 1]} : vector<32x32xbf16> to vector<8x32xbf16>
    %228 = arith.truncf %226 : vector<8x8xf32> to vector<8x8xbf16>
    %cst_92 = arith.constant dense<0.000000e+00> : vector<8x32xf32>
    %229 = tpu.matmul %228, %227, %cst_92 {dimension_numbers = #tpu.dot_dimension_numbers<[1], [0], [0], [1], [0, 0, 1, 1], [], []>} : vector<8x8xbf16>, vector<8x32xbf16>, vector<8x32xf32> -> vector<8x32xf32>
    %230 = arith.addf %209, %229 : vector<8x32xf32>
    %231 = vector.extract_strided_slice %159 {offsets = [0, 24], sizes = [8, 8], strides = [1, 1]} : vector<8x32xf32> to vector<8x8xf32>
    %cst_93 = arith.constant 0.353553385 : f32
    %232 = vector.broadcast %cst_93 : f32 to vector<8x8xf32>
    %233 = arith.mulf %231, %232 : vector<8x8xf32>
    %234 = vector.extract_strided_slice %165 {offsets = [0, 24], sizes = [16, 8], strides = [1, 1]} : vector<16x64xf32> to vector<16x8xf32>
    %235 = vector.extract_strided_slice %165 {offsets = [0, 56], sizes = [16, 8], strides = [1, 1]} : vector<16x64xf32> to vector<16x8xf32>
    %cst_94 = arith.constant dense<0.000000e+00> : vector<8x16xf32>
    %236 = tpu.matmul %233, %234, %cst_94 {dimension_numbers = #tpu.dot_dimension_numbers<[1], [1], [0], [0], [0, 0, 1, 0], [], []>} : vector<8x8xf32>, vector<16x8xf32>, vector<8x16xf32> -> vector<8x16xf32>
    %237 = arith.addf %236, %9 : vector<8x16xf32>
    %cst_95 = arith.constant dense<0xFF800000> : vector<8xf32>
    %238 = vector.multi_reduction <maximumf>, %237, %cst_95 [1] : vector<8x16xf32> to vector<8xf32>
    %239 = vector.shape_cast %238 : vector<8xf32> to vector<8x1xf32>
    %240 = vector.broadcast %239 : vector<8x1xf32> to vector<8x16xf32>
    %241 = arith.subf %237, %240 : vector<8x16xf32>
    %242 = math.exp %241 : vector<8x16xf32>
    %cst_96 = arith.constant dense<0.000000e+00> : vector<8xf32>
    %243 = vector.multi_reduction <add>, %242, %cst_96 [1] : vector<8x16xf32> to vector<8xf32>
    %244 = vector.shape_cast %243 : vector<8xf32> to vector<8x1xf32>
    %245 = vector.broadcast %244 : vector<8x1xf32> to vector<8x16xf32>
    %246 = arith.divf %242, %245 : vector<8x16xf32>
    %cst_97 = arith.constant dense<0.000000e+00> : vector<8x8xf32>
    %247 = tpu.matmul %246, %235, %cst_97 {dimension_numbers = #tpu.dot_dimension_numbers<[1], [0], [0], [1], [0, 0, 1, 1], [], []>} : vector<8x16xf32>, vector<16x8xf32>, vector<8x8xf32> -> vector<8x8xf32>
    %248 = vector.extract_strided_slice %166 {offsets = [24, 0], sizes = [8, 32], strides = [1, 1]} : vector<32x32xbf16> to vector<8x32xbf16>
    %249 = arith.truncf %247 : vector<8x8xf32> to vector<8x8xbf16>
    %cst_98 = arith.constant dense<0.000000e+00> : vector<8x32xf32>
    %250 = tpu.matmul %249, %248, %cst_98 {dimension_numbers = #tpu.dot_dimension_numbers<[1], [0], [0], [1], [0, 0, 1, 1], [], []>} : vector<8x8xbf16>, vector<8x32xbf16>, vector<8x32xf32> -> vector<8x32xf32>
    %251 = arith.addf %230, %250 : vector<8x32xf32>
    %c0_99 = arith.constant 0 : index
    %c0_100 = arith.constant 0 : index
    %252 = vector.load %arg20[%c0_99, %c0_100] : memref<1x32xf32, #tpu.memory_space<vmem>>, vector<1x32xf32>
    %253 = vector.broadcast %252 : vector<1x32xf32> to vector<8x32xf32>
    %254 = arith.addf %251, %253 : vector<8x32xf32>
    %255 = arith.addf %254, %129 : vector<8x32xf32>
    %cst_101 = arith.constant dense<0.000000e+00> : vector<8xf32>
    %256 = vector.multi_reduction <add>, %255, %cst_101 [1] : vector<8x32xf32> to vector<8xf32>
    %257 = vector.shape_cast %256 : vector<8xf32> to vector<8x1xf32>
    %cst_102 = arith.constant 3.200000e+01 : f32
    %258 = vector.broadcast %cst_102 : f32 to vector<8x1xf32>
    %259 = arith.divf %257, %258 : vector<8x1xf32>
    %260 = vector.broadcast %259 : vector<8x1xf32> to vector<8x32xf32>
    %261 = arith.subf %255, %260 : vector<8x32xf32>
    %262 = arith.mulf %261, %261 : vector<8x32xf32>
    %cst_103 = arith.constant dense<0.000000e+00> : vector<8xf32>
    %263 = vector.multi_reduction <add>, %262, %cst_103 [1] : vector<8x32xf32> to vector<8xf32>
    %264 = vector.shape_cast %263 : vector<8xf32> to vector<8x1xf32>
    %cst_104 = arith.constant 3.200000e+01 : f32
    %265 = vector.broadcast %cst_104 : f32 to vector<8x1xf32>
    %266 = arith.divf %264, %265 : vector<8x1xf32>
    %267 = vector.broadcast %259 : vector<8x1xf32> to vector<8x32xf32>
    %268 = arith.subf %255, %267 : vector<8x32xf32>
    %cst_105 = arith.constant 9.99999997E-7 : f32
    %269 = vector.broadcast %cst_105 : f32 to vector<8x1xf32>
    %270 = arith.addf %266, %269 : vector<8x1xf32>
    %271 = math.rsqrt %270 : vector<8x1xf32>
    %272 = vector.broadcast %271 : vector<8x1xf32> to vector<8x32xf32>
    %273 = arith.mulf %268, %272 : vector<8x32xf32>
    %c0_106 = arith.constant 0 : index
    %c0_107 = arith.constant 0 : index
    %274 = vector.load %arg9[%c0_106, %c0_107] : memref<1x32xf32, #tpu.memory_space<vmem>>, vector<1x32xf32>
    %275 = vector.broadcast %274 : vector<1x32xf32> to vector<8x32xf32>
    %276 = arith.mulf %273, %275 : vector<8x32xf32>
    %c0_108 = arith.constant 0 : index
    %c0_109 = arith.constant 0 : index
    %277 = vector.load %arg10[%c0_108, %c0_109] : memref<1x32xf32, #tpu.memory_space<vmem>>, vector<1x32xf32>
    %278 = vector.broadcast %277 : vector<1x32xf32> to vector<8x32xf32>
    %279 = arith.addf %276, %278 : vector<8x32xf32>
    %c0_110 = arith.constant 0 : index
    %c0_111 = arith.constant 0 : index
    %280 = vector.load %arg21[%c0_110, %c0_111] : memref<32x64xbf16, #tpu.memory_space<vmem>>, vector<32x64xbf16>
    %281 = arith.truncf %279 : vector<8x32xf32> to vector<8x32xbf16>
    %cst_112 = arith.constant dense<0.000000e+00> : vector<8x64xf32>
    %282 = tpu.matmul %281, %280, %cst_112 {dimension_numbers = #tpu.dot_dimension_numbers<[1], [0], [0], [1], [0, 0, 1, 1], [], []>} : vector<8x32xbf16>, vector<32x64xbf16>, vector<8x64xf32> -> vector<8x64xf32>
    %c0_113 = arith.constant 0 : index
    %c0_114 = arith.constant 0 : index
    %283 = vector.load %arg22[%c0_113, %c0_114] : memref<1x64xf32, #tpu.memory_space<vmem>>, vector<1x64xf32>
    %284 = vector.broadcast %283 : vector<1x64xf32> to vector<8x64xf32>
    %285 = arith.addf %282, %284 : vector<8x64xf32>
    %cst_115 = arith.constant 5.000000e-01 : f32
    %286 = vector.broadcast %cst_115 : f32 to vector<8x64xf32>
    %287 = arith.mulf %286, %285 : vector<8x64xf32>
    %cst_116 = arith.constant 4.471500e-02 : f32
    %288 = vector.broadcast %cst_116 : f32 to vector<8x64xf32>
    %289 = arith.mulf %288, %285 : vector<8x64xf32>
    %290 = arith.mulf %289, %285 : vector<8x64xf32>
    %291 = arith.mulf %290, %285 : vector<8x64xf32>
    %292 = arith.addf %285, %291 : vector<8x64xf32>
    %cst_117 = arith.constant 0.797884583 : f32
    %293 = vector.broadcast %cst_117 : f32 to vector<8x64xf32>
    %294 = arith.mulf %293, %292 : vector<8x64xf32>
    %295 = math.tanh %294 : vector<8x64xf32>
    %cst_118 = arith.constant 1.000000e+00 : f32
    %296 = vector.broadcast %cst_118 : f32 to vector<8x64xf32>
    %297 = arith.addf %296, %295 : vector<8x64xf32>
    %298 = arith.mulf %287, %297 : vector<8x64xf32>
    %c0_119 = arith.constant 0 : index
    %c0_120 = arith.constant 0 : index
    %299 = vector.load %arg23[%c0_119, %c0_120] : memref<64x32xbf16, #tpu.memory_space<vmem>>, vector<64x32xbf16>
    %300 = arith.truncf %298 : vector<8x64xf32> to vector<8x64xbf16>
    %cst_121 = arith.constant dense<0.000000e+00> : vector<8x32xf32>
    %301 = tpu.matmul %300, %299, %cst_121 {dimension_numbers = #tpu.dot_dimension_numbers<[1], [0], [0], [1], [0, 0, 1, 1], [], []>} : vector<8x64xbf16>, vector<64x32xbf16>, vector<8x32xf32> -> vector<8x32xf32>
    %c0_122 = arith.constant 0 : index
    %c0_123 = arith.constant 0 : index
    %302 = vector.load %arg24[%c0_122, %c0_123] : memref<1x32xf32, #tpu.memory_space<vmem>>, vector<1x32xf32>
    %303 = vector.broadcast %302 : vector<1x32xf32> to vector<8x32xf32>
    %304 = arith.addf %301, %303 : vector<8x32xf32>
    %305 = arith.addf %304, %255 : vector<8x32xf32>
    %306 = arith.truncf %305 : vector<8x32xf32> to vector<8x32xbf16>
    %c0_124 = arith.constant 0 : index
    %c0_125 = arith.constant 0 : index
    %c0_126 = arith.constant 0 : index
    %307 = vector.load %arg25[%c0_124, %c0_125, %c0_126] : memref<1x8x32xbf16, #tpu.memory_space<vmem>>, vector<1x8x32xbf16>
    %308 = vector.shape_cast %307 : vector<1x8x32xbf16> to vector<8x32xbf16>
    %309 = vector.shape_cast %306 : vector<8x32xbf16> to vector<1x8x32xbf16>
    tpu.vector_store %arg25[%c0_124, %c0_125, %c0_126], %309 {strides = array<i32>} : memref<1x8x32xbf16, #tpu.memory_space<vmem>>, vector<1x8x32xbf16>,
    return
  }
  func.func @transform_0(%arg0: i32) -> (i32, i32, i32) {
    %c0_i32 = arith.constant 0 : i32
    %c0_i32_0 = arith.constant 0 : i32
    %c0_i32_1 = arith.constant 0 : i32
    return %arg0, %c0_i32, %c0_i32_0 : i32, i32, i32
  }
  func.func @transform_1(%arg0: i32) -> (i32, i32, i32) {
    %c0_i32 = arith.constant 0 : i32
    %c0_i32_0 = arith.constant 0 : i32
    %c0_i32_1 = arith.constant 0 : i32
    return %arg0, %c0_i32, %c0_i32_0 : i32, i32, i32
  }
  func.func @transform_2(%arg0: i32) -> (i32, i32, i32) {
    %c0_i32 = arith.constant 0 : i32
    %c0_i32_0 = arith.constant 0 : i32
    %c0_i32_1 = arith.constant 0 : i32
    return %arg0, %c0_i32, %c0_i32_0 : i32, i32, i32
  }
  func.func @transform_3(%arg0: i32) -> (i32, i32, i32) {
    %c0_i32 = arith.constant 0 : i32
    %c0_i32_0 = arith.constant 0 : i32
    %c0_i32_1 = arith.constant 0 : i32
    return %arg0, %c0_i32, %c0_i32_0 : i32, i32, i32
  }
  func.func @transform_4(%arg0: i32) -> (i32, i32) {
    %c0_i32 = arith.constant 0 : i32
    %c0_i32_0 = arith.constant 0 : i32
    %c0_i32_1 = arith.constant 0 : i32
    return %c0_i32, %c0_i32_0 : i32, i32
  }
  func.func @transform_5(%arg0: i32) -> (i32, i32) {
    %c0_i32 = arith.constant 0 : i32
    %c0_i32_0 = arith.constant 0 : i32
    %c0_i32_1 = arith.constant 0 : i32
    return %c0_i32, %c0_i32_0 : i32, i32
  }
  func.func @transform_6(%arg0: i32) -> (i32, i32) {
    %c0_i32 = arith.constant 0 : i32
    %c0_i32_0 = arith.constant 0 : i32
    %c0_i32_1 = arith.constant 0 : i32
    return %c0_i32, %c0_i32_0 : i32, i32
  }
  func.func @transform_7(%arg0: i32) -> (i32, i32) {
    %c0_i32 = arith.constant 0 : i32
    %c0_i32_0 = arith.constant 0 : i32
    %c0_i32_1 = arith.constant 0 : i32
    return %c0_i32, %c0_i32_0 : i32, i32
  }
  func.func @transform_8(%arg0: i32) -> (i32, i32) {
    %c0_i32 = arith.constant 0 : i32
    %c0_i32_0 = arith.constant 0 : i32
    %c0_i32_1 = arith.constant 0 : i32
    return %c0_i32, %c0_i32_0 : i32, i32
  }
  func.func @transform_9(%arg0: i32) -> (i32, i32) {
    %c0_i32 = arith.constant 0 : i32
    %c0_i32_0 = arith.constant 0 : i32
    %c0_i32_1 = arith.constant 0 : i32
    return %c0_i32, %c0_i32_0 : i32, i32
  }
  func.func @transform_10(%arg0: i32) -> (i32, i32) {
    %c0_i32 = arith.constant 0 : i32
    %c0_i32_0 = arith.constant 0 : i32
    %c0_i32_1 = arith.constant 0 : i32
    return %c0_i32, %c0_i32_0 : i32, i32
  }
  func.func @transform_11(%arg0: i32) -> (i32, i32) {
    %c0_i32 = arith.constant 0 : i32
    %c0_i32_0 = arith.constant 0 : i32
    %c0_i32_1 = arith.constant 0 : i32
    return %c0_i32, %c0_i32_0 : i32, i32
  }
  func.func @transform_12(%arg0: i32) -> (i32, i32) {
    %c0_i32 = arith.constant 0 : i32
    %c0_i32_0 = arith.constant 0 : i32
    %c0_i32_1 = arith.constant 0 : i32
    return %c0_i32, %c0_i32_0 : i32, i32
  }
  func.func @transform_13(%arg0: i32) -> (i32, i32) {
    %c0_i32 = arith.constant 0 : i32
    %c0_i32_0 = arith.constant 0 : i32
    %c0_i32_1 = arith.constant 0 : i32
    return %c0_i32, %c0_i32_0 : i32, i32
  }
  func.func @transform_14(%arg0: i32) -> (i32, i32) {
    %c0_i32 = arith.constant 0 : i32
    %c0_i32_0 = arith.constant 0 : i32
    %c0_i32_1 = arith.constant 0 : i32
    return %c0_i32, %c0_i32_0 : i32, i32
  }
  func.func @transform_15(%arg0: i32) -> (i32, i32) {
    %c0_i32 = arith.constant 0 : i32
    %c0_i32_0 = arith.constant 0 : i32
    %c0_i32_1 = arith.constant 0 : i32
    return %c0_i32, %c0_i32_0 : i32, i32
  }
  func.func @transform_16(%arg0: i32) -> (i32, i32) {
    %c0_i32 = arith.constant 0 : i32
    %c0_i32_0 = arith.constant 0 : i32
    %c0_i32_1 = arith.constant 0 : i32
    return %c0_i32, %c0_i32_0 : i32, i32
  }
  func.func @transform_17(%arg0: i32) -> (i32, i32) {
    %c0_i32 = arith.constant 0 : i32
    %c0_i32_0 = arith.constant 0 : i32
    %c0_i32_1 = arith.constant 0 : i32
    return %c0_i32, %c0_i32_0 : i32, i32
  }
  func.func @transform_18(%arg0: i32) -> (i32, i32) {
    %c0_i32 = arith.constant 0 : i32
    %c0_i32_0 = arith.constant 0 : i32
    %c0_i32_1 = arith.constant 0 : i32
    return %c0_i32, %c0_i32_0 : i32, i32
  }
  func.func @transform_19(%arg0: i32) -> (i32, i32) {
    %c0_i32 = arith.constant 0 : i32
    %c0_i32_0 = arith.constant 0 : i32
    %c0_i32_1 = arith.constant 0 : i32
    return %c0_i32, %c0_i32_0 : i32, i32
  }
  func.func @transform_20(%arg0: i32) -> (i32, i32) {
    %c0_i32 = arith.constant 0 : i32
    %c0_i32_0 = arith.constant 0 : i32
    %c0_i32_1 = arith.constant 0 : i32
    return %c0_i32, %c0_i32_0 : i32, i32
  }
  func.func @transform_21(%arg0: i32) -> (i32, i32) {
    %c0_i32 = arith.constant 0 : i32
    %c0_i32_0 = arith.constant 0 : i32
    %c0_i32_1 = arith.constant 0 : i32
    return %c0_i32, %c0_i32_0 : i32, i32
  }
  func.func @transform_22(%arg0: i32) -> (i32, i32) {
    %c0_i32 = arith.constant 0 : i32
    %c0_i32_0 = arith.constant 0 : i32
    %c0_i32_1 = arith.constant 0 : i32
    return %c0_i32, %c0_i32_0 : i32, i32
  }
  func.func @transform_23(%arg0: i32) -> (i32, i32) {
    %c0_i32 = arith.constant 0 : i32
    %c0_i32_0 = arith.constant 0 : i32
    %c0_i32_1 = arith.constant 0 : i32
    return %c0_i32, %c0_i32_0 : i32, i32
  }
  func.func @transform_24(%arg0: i32) -> (i32, i32, i32) {
    %c0_i32 = arith.constant 0 : i32
    %c0_i32_0 = arith.constant 0 : i32
    %c0_i32_1 = arith.constant 0 : i32
    return %arg0, %c0_i32, %c0_i32_0 : i32, i32, i32
  }
}

module attributes {stable_mosaic.version = 11 : i64} {
  func.func @_generator_kernel(%arg0: i32, %arg1: memref<1x8x32xbf16, #tpu.memory_space<vmem>>, %arg2: memref<1x32xf32, #tpu.memory_space<vmem>>, %arg3: memref<1x32xf32, #tpu.memory_space<vmem>>, %arg4: memref<64x32xbf16, #tpu.memory_space<vmem>>, %arg5: memref<1x64xf32, #tpu.memory_space<vmem>>, %arg6: memref<1x8x64xf32, #tpu.memory_space<vmem>>) attributes {dimension_semantics = [#tpu.dimension_semantics<parallel>], iteration_bounds = array<i64: 2>, scalar_prefetch = 0 : i64, scratch_operands = 0 : i64, tpu.core_type = #tpu.core_type<tc>, window_params = [{transform_indices = @transform_0, window_bounds = array<i64: 1, 8, 32>}, {pipeline_mode = #tpu.pipeline_mode<synchronous>, transform_indices = @transform_1, window_bounds = array<i64: 1, 32>}, {pipeline_mode = #tpu.pipeline_mode<synchronous>, transform_indices = @transform_2, window_bounds = array<i64: 1, 32>}, {pipeline_mode = #tpu.pipeline_mode<synchronous>, transform_indices = @transform_3, window_bounds = array<i64: 64, 32>}, {pipeline_mode = #tpu.pipeline_mode<synchronous>, transform_indices = @transform_4, window_bounds = array<i64: 1, 64>}, {transform_indices = @transform_5, window_bounds = array<i64: 1, 8, 64>}]} {
    %c0 = arith.constant 0 : index
    %c0_0 = arith.constant 0 : index
    %c0_1 = arith.constant 0 : index
    %0 = vector.load %arg1[%c0, %c0_0, %c0_1] : memref<1x8x32xbf16, #tpu.memory_space<vmem>>, vector<1x8x32xbf16>
    %1 = vector.shape_cast %0 : vector<1x8x32xbf16> to vector<8x32xbf16>
    %2 = arith.extf %1 : vector<8x32xbf16> to vector<8x32xf32>
    %cst = arith.constant dense<0.000000e+00> : vector<8xf32>
    %3 = vector.multi_reduction <add>, %2, %cst [1] : vector<8x32xf32> to vector<8xf32>
    %4 = vector.shape_cast %3 : vector<8xf32> to vector<8x1xf32>
    %cst_2 = arith.constant 3.200000e+01 : f32
    %5 = vector.broadcast %cst_2 : f32 to vector<8x1xf32>
    %6 = arith.divf %4, %5 : vector<8x1xf32>
    %7 = vector.broadcast %6 : vector<8x1xf32> to vector<8x32xf32>
    %8 = arith.subf %2, %7 : vector<8x32xf32>
    %9 = arith.mulf %8, %8 : vector<8x32xf32>
    %cst_3 = arith.constant dense<0.000000e+00> : vector<8xf32>
    %10 = vector.multi_reduction <add>, %9, %cst_3 [1] : vector<8x32xf32> to vector<8xf32>
    %11 = vector.shape_cast %10 : vector<8xf32> to vector<8x1xf32>
    %cst_4 = arith.constant 3.200000e+01 : f32
    %12 = vector.broadcast %cst_4 : f32 to vector<8x1xf32>
    %13 = arith.divf %11, %12 : vector<8x1xf32>
    %14 = vector.broadcast %6 : vector<8x1xf32> to vector<8x32xf32>
    %15 = arith.subf %2, %14 : vector<8x32xf32>
    %cst_5 = arith.constant 9.99999997E-7 : f32
    %16 = vector.broadcast %cst_5 : f32 to vector<8x1xf32>
    %17 = arith.addf %13, %16 : vector<8x1xf32>
    %18 = math.rsqrt %17 : vector<8x1xf32>
    %19 = vector.broadcast %18 : vector<8x1xf32> to vector<8x32xf32>
    %20 = arith.mulf %15, %19 : vector<8x32xf32>
    %c0_6 = arith.constant 0 : index
    %c0_7 = arith.constant 0 : index
    %21 = vector.load %arg2[%c0_6, %c0_7] : memref<1x32xf32, #tpu.memory_space<vmem>>, vector<1x32xf32>
    %22 = vector.broadcast %21 : vector<1x32xf32> to vector<8x32xf32>
    %23 = arith.mulf %20, %22 : vector<8x32xf32>
    %c0_8 = arith.constant 0 : index
    %c0_9 = arith.constant 0 : index
    %24 = vector.load %arg3[%c0_8, %c0_9] : memref<1x32xf32, #tpu.memory_space<vmem>>, vector<1x32xf32>
    %25 = vector.broadcast %24 : vector<1x32xf32> to vector<8x32xf32>
    %26 = arith.addf %23, %25 : vector<8x32xf32>
    %27 = arith.truncf %26 : vector<8x32xf32> to vector<8x32xbf16>
    %c0_10 = arith.constant 0 : index
    %c0_11 = arith.constant 0 : index
    %28 = vector.load %arg4[%c0_10, %c0_11] : memref<64x32xbf16, #tpu.memory_space<vmem>>, vector<64x32xbf16>
    %cst_12 = arith.constant dense<0.000000e+00> : vector<8x64xf32>
    %29 = tpu.matmul %27, %28, %cst_12 {dimension_numbers = #tpu.dot_dimension_numbers<[1], [1], [0], [0], [0, 0, 1, 0], [], []>} : vector<8x32xbf16>, vector<64x32xbf16>, vector<8x64xf32> -> vector<8x64xf32>
    %c0_13 = arith.constant 0 : index
    %c0_14 = arith.constant 0 : index
    %30 = vector.load %arg5[%c0_13, %c0_14] : memref<1x64xf32, #tpu.memory_space<vmem>>, vector<1x64xf32>
    %31 = vector.broadcast %30 : vector<1x64xf32> to vector<8x64xf32>
    %32 = arith.addf %29, %31 : vector<8x64xf32>
    %cst_15 = arith.constant dense<0xFF800000> : vector<8xf32>
    %33 = vector.multi_reduction <maximumf>, %32, %cst_15 [1] : vector<8x64xf32> to vector<8xf32>
    %34 = vector.shape_cast %33 : vector<8xf32> to vector<8x1xf32>
    %35 = vector.broadcast %34 : vector<8x1xf32> to vector<8x64xf32>
    %36 = arith.subf %32, %35 : vector<8x64xf32>
    %37 = math.exp %36 : vector<8x64xf32>
    %cst_16 = arith.constant dense<0.000000e+00> : vector<8xf32>
    %38 = vector.multi_reduction <add>, %37, %cst_16 [1] : vector<8x64xf32> to vector<8xf32>
    %39 = vector.shape_cast %38 : vector<8xf32> to vector<8x1xf32>
    %40 = math.log %39 : vector<8x1xf32>
    %41 = vector.broadcast %40 : vector<8x1xf32> to vector<8x64xf32>
    %42 = arith.subf %36, %41 : vector<8x64xf32>
    %c0_17 = arith.constant 0 : index
    %c0_18 = arith.constant 0 : index
    %c0_19 = arith.constant 0 : index
    %43 = vector.load %arg6[%c0_17, %c0_18, %c0_19] : memref<1x8x64xf32, #tpu.memory_space<vmem>>, vector<1x8x64xf32>
    %44 = vector.shape_cast %43 : vector<1x8x64xf32> to vector<8x64xf32>
    %45 = vector.shape_cast %42 : vector<8x64xf32> to vector<1x8x64xf32>
    tpu.vector_store %arg6[%c0_17, %c0_18, %c0_19], %45 {strides = array<i32>} : memref<1x8x64xf32, #tpu.memory_space<vmem>>, vector<1x8x64xf32>,
    return
  }
  func.func @transform_0(%arg0: i32) -> (i32, i32, i32) {
    %c0_i32 = arith.constant 0 : i32
    %c0_i32_0 = arith.constant 0 : i32
    %c0_i32_1 = arith.constant 0 : i32
    return %arg0, %c0_i32, %c0_i32_0 : i32, i32, i32
  }
  func.func @transform_1(%arg0: i32) -> (i32, i32) {
    %c0_i32 = arith.constant 0 : i32
    %c0_i32_0 = arith.constant 0 : i32
    %c0_i32_1 = arith.constant 0 : i32
    return %c0_i32, %c0_i32_0 : i32, i32
  }
  func.func @transform_2(%arg0: i32) -> (i32, i32) {
    %c0_i32 = arith.constant 0 : i32
    %c0_i32_0 = arith.constant 0 : i32
    %c0_i32_1 = arith.constant 0 : i32
    return %c0_i32, %c0_i32_0 : i32, i32
  }
  func.func @transform_3(%arg0: i32) -> (i32, i32) {
    %c0_i32 = arith.constant 0 : i32
    %c0_i32_0 = arith.constant 0 : i32
    %c0_i32_1 = arith.constant 0 : i32
    return %c0_i32, %c0_i32_0 : i32, i32
  }
  func.func @transform_4(%arg0: i32) -> (i32, i32) {
    %c0_i32 = arith.constant 0 : i32
    %c0_i32_0 = arith.constant 0 : i32
    %c0_i32_1 = arith.constant 0 : i32
    return %c0_i32, %c0_i32_0 : i32, i32
  }
  func.func @transform_5(%arg0: i32) -> (i32, i32, i32) {
    %c0_i32 = arith.constant 0 : i32
    %c0_i32_0 = arith.constant 0 : i32
    %c0_i32_1 = arith.constant 0 : i32
    return %arg0, %c0_i32, %c0_i32_0 : i32, i32, i32
  }
}

</mosaic_0001>

<llo_original>
// kernel: decoder_apply.5
$region0: #{decoder_apply.5}
  #allocation0 [shape = 'u32[]', space=smem, size = 0x4, offset = 0x4, fixed_abs, tag = 'smem constant byte address 0x4 - core index']
  #allocation1 [shape = 'u32[144,128]{1,0:T(1,128)}', space=vmem, size = 0x12000, scoped, tag = 'internal scratch']
  %s0 = inlined_call_operand.hbm [shape: bf16[2,8,32], index: 0, kind: input, shape index: {}]
  %s1 = inlined_call_operand.hbm [shape: f32[1,32], index: 1, kind: input, shape index: {}]
  %s2 = inlined_call_operand.hbm [shape: f32[1,32], index: 2, kind: input, shape index: {}]
  %s3 = inlined_call_operand.hbm [shape: bf16[64,32], index: 3, kind: input, shape index: {}]
  %s4 = inlined_call_operand.hbm [shape: f32[1,64], index: 4, kind: input, shape index: {}]
  %s5 = inlined_call_operand.hbm [shape: f32[2,8,64], index: 5, kind: output, shape index: {}]
  %s6 = sld [smem:[#allocation0]]
  $region73: #{decoder_apply.5} parent=0
    _
  %s8 = ssub.s32 1, %s6
  %s9 = scalar_select 0, %s8, %s6
  $region1: #{decoder_apply.5} parent=0
    #allocation2 [shape = 'u8[4096]{0}', space=vmem, size = 0x1000, scoped, tag = 'input window, operand 0']
    #allocation3 [shape = 's32[2]{0}', space=sflag, size = 0x8, scoped, tag = 'scoped memory for decoder_apply.5']
    #allocation4 [shape = 's32[2]{0}', space=sflag, size = 0x8, scoped, tag = 'scoped memory for decoder_apply.5']
    #allocation5 [shape = 'u8[512]{0}', space=vmem, size = 0x400, scoped, tag = 'input window, operand 1, single buffered']
    #allocation6 [shape = 's32[1]{0}', space=sflag, size = 0x4, scoped, tag = 'scoped memory for decoder_apply.5']
    #allocation7 [shape = 'u8[512]{0}', space=vmem, size = 0x400, scoped, tag = 'input window, operand 2, single buffered']
    #allocation8 [shape = 'u8[16384]{0}', space=vmem, size = 0x4000, scoped, tag = 'input window, operand 3, single buffered']
    #allocation9 [shape = 's32[1]{0}', space=sflag, size = 0x4, scoped, tag = 'scoped memory for decoder_apply.5']
    #allocation10 [shape = 'u8[512]{0}', space=vmem, size = 0x400, scoped, tag = 'input window, operand 4, single buffered']
    #allocation11 [shape = 'u8[8192]{0}', space=vmem, size = 0x2000, scoped, tag = 'output window, operand 0']
    %10 = vsyncpa [#allocation3], 0
    %s11 = scalar_lea.sflag [#allocation3], 1
    %12 = vsyncpa %s11, 0
    %13 = vsyncpa [#allocation6], 0
    %14 = vsyncpa [#allocation9], 0
    %15 = vsyncpa [#allocation4], 0
    %s16 = scalar_lea.sflag [#allocation4], 1
    %17 = vsyncpa %s16, 0
    loop: start=0, step=1, limit=4
    $region2: #{decoder_apply.5} parent=1 // loop_pre_header
      _
    $region3: #{decoder_apply.5} parent=1 // loop_header
      %s19 = sphi 0, %s23
      %p20 = scmp.ge.s32.totalorder %s19, 4
      %s29 = sphi 0, %s31
      %s32 = sphi 0, %s29
      %s33 = sphi 0, %s32
      %s49 = sphi 0, %s33
      %s53 = sphi 0, %s53
      %s55 = sphi 0, %s53
      %s56 = sphi 0, %s55
      %s70 = sphi 0, %s56
      %s74 = sphi 0, %s74
      %s76 = sphi 0, %s74
      %s77 = sphi 0, %s76
      %s91 = sphi 0, %s77
      %s95 = sphi 0, %s95
      %s97 = sphi 0, %s95
      %s98 = sphi 0, %s97
      %s112 = sphi 0, %s98
      %s116 = sphi 0, %s116
      %s118 = sphi 0, %s116
      %s119 = sphi 0, %s118
      %s133 = sphi 0, %s119
      %s139 = sphi 0, %s141
      %s142 = sphi 0, %s139
      %s143 = sphi 0, %s142
      %s159 = sphi 0, %s143
    $region4: #{decoder_apply.5} parent=1 // loop_header_branch
      %22 = sbr.rel (%p20) target = $region8
    $region5: #{decoder_apply.5} parent=1 // loop_body
      %s24 = ssub.s32 %s19, 1
      %s25 = ssub.s32 %s19, 2
      %s26 = sadd.s32 %s19, 1
      %s27 = ssub.s32 %s19, %s26
      %p28 = scmp.eq.s32.totalorder %s27, 0
      %s30 = sadd.s32 %s29, 1
      %s31 = scalar_select %p28, %s29, %s30
      %p34 = pneg %p28
      %p35 = scmp.eq.s32.totalorder %s19, 1
      %p36 = por %p34, %p35
      %p37 = scmp.ne.s32.totalorder %s29, %s32
      %p38 = scmp.eq.s32.totalorder %s19, 0
      %p39 = por %p37, %p38
      %p40 = scmp.ne.s32.totalorder %s29, %s32
      %p41 = scmp.eq.s32.totalorder %s24, 1
      %p42 = por %p40, %p41
      %p43 = scmp.ne.s32.totalorder %s32, %s33
      %p44 = scmp.eq.s32.totalorder %s24, 0
      %p45 = por %p43, %p44
      %p46 = scmp.ne.s32.totalorder %s32, %s33
      %p47 = scmp.eq.s32.totalorder %s25, 1
      %p48 = por %p46, %p47
      %p50 = scmp.ne.s32.totalorder %s33, %s49
      %p51 = scmp.eq.s32.totalorder %s25, 0
      %p52 = por %p50, %p51
      %s54 = sadd.s32 %s53, 1
      %p57 = scmp.eq.s32.totalorder %s19, 1
      %p58 = scmp.ne.s32.totalorder %s53, %s55
      %p59 = scmp.eq.s32.totalorder %s19, 0
      %p60 = por %p58, %p59
      %p61 = scmp.ne.s32.totalorder %s53, %s55
      %p62 = scmp.eq.s32.totalorder %s24, 1
      %p63 = por %p61, %p62
      %p64 = scmp.ne.s32.totalorder %s55, %s56
      %p65 = scmp.eq.s32.totalorder %s24, 0
      %p66 = por %p64, %p65
      %p67 = scmp.ne.s32.totalorder %s55, %s56
      %p68 = scmp.eq.s32.totalorder %s25, 1
      %p69 = por %p67, %p68
      %p71 = scmp.ne.s32.totalorder %s56, %s70
      %p72 = scmp.eq.s32.totalorder %s25, 0
      %p73 = por %p71, %p72
      %s75 = sadd.s32 %s74, 1
      %p78 = scmp.eq.s32.totalorder %s19, 1
      %p79 = scmp.ne.s32.totalorder %s74, %s76
      %p80 = scmp.eq.s32.totalorder %s19, 0
      %p81 = por %p79, %p80
      %p82 = scmp.ne.s32.totalorder %s74, %s76
      %p83 = scmp.eq.s32.totalorder %s24, 1
      %p84 = por %p82, %p83
      %p85 = scmp.ne.s32.totalorder %s76, %s77
      %p86 = scmp.eq.s32.totalorder %s24, 0
      %p87 = por %p85, %p86
      %p88 = scmp.ne.s32.totalorder %s76, %s77
      %p89 = scmp.eq.s32.totalorder %s25, 1
      %p90 = por %p88, %p89
      %p92 = scmp.ne.s32.totalorder %s77, %s91
      %p93 = scmp.eq.s32.totalorder %s25, 0
      %p94 = por %p92, %p93
      %s96 = sadd.s32 %s95, 1
      %p99 = scmp.eq.s32.totalorder %s19, 1
      %p100 = scmp.ne.s32.totalorder %s95, %s97
      %p101 = scmp.eq.s32.totalorder %s19, 0
      %p102 = por %p100, %p101
      %p103 = scmp.ne.s32.totalorder %s95, %s97
      %p104 = scmp.eq.s32.totalorder %s24, 1
      %p105 = por %p103, %p104
      %p106 = scmp.ne.s32.totalorder %s97, %s98
      %p107 = scmp.eq.s32.totalorder %s24, 0
      %p108 = por %p106, %p107
      %p109 = scmp.ne.s32.totalorder %s97, %s98
      %p110 = scmp.eq.s32.totalorder %s25, 1
      %p111 = por %p109, %p110
      %p113 = scmp.ne.s32.totalorder %s98, %s112
      %p114 = scmp.eq.s32.totalorder %s25, 0
      %p115 = por %p113, %p114
      %s117 = sadd.s32 %s116, 1
      %p120 = scmp.eq.s32.totalorder %s19, 1
      %p121 = scmp.ne.s32.totalorder %s116, %s118
      %p122 = scmp.eq.s32.totalorder %s19, 0
      %p123 = por %p121, %p122
      %p124 = scmp.ne.s32.totalorder %s116, %s118
      %p125 = scmp.eq.s32.totalorder %s24, 1
      %p126 = por %p124, %p125
      %p127 = scmp.ne.s32.totalorder %s118, %s119
      %p128 = scmp.eq.s32.totalorder %s24, 0
      %p129 = por %p127, %p128
      %p130 = scmp.ne.s32.totalorder %s118, %s119
      %p131 = scmp.eq.s32.totalorder %s25, 1
      %p132 = por %p130, %p131
      %p134 = scmp.ne.s32.totalorder %s119, %s133
      %p135 = scmp.eq.s32.totalorder %s25, 0
      %p136 = por %p134, %p135
      %s137 = ssub.s32 %s19, %s26
      %p138 = scmp.eq.s32.totalorder %s137, 0
      %s140 = sadd.s32 %s139, 1
      %s141 = scalar_select %p138, %s139, %s140
      %p144 = pneg %p138
      %p145 = scmp.eq.s32.totalorder %s19, 1
      %p146 = por %p144, %p145
      %p147 = scmp.ne.s32.totalorder %s139, %s142
      %p148 = scmp.eq.s32.totalorder %s19, 0
      %p149 = por %p147, %p148
      %p150 = scmp.ne.s32.totalorder %s139, %s142
      %p151 = scmp.eq.s32.totalorder %s24, 1
      %p152 = por %p150, %p151
      %p153 = scmp.ne.s32.totalorder %s142, %s143
      %p154 = scmp.eq.s32.totalorder %s24, 0
      %p155 = por %p153, %p154
      %p156 = scmp.ne.s32.totalorder %s142, %s143
      %p157 = scmp.eq.s32.totalorder %s25, 1
      %p158 = por %p156, %p157
      %p160 = scmp.ne.s32.totalorder %s143, %s159
      %p161 = scmp.eq.s32.totalorder %s25, 0
      %p162 = por %p160, %p161
      %p163 = scmp.le.s32.totalorder 1, %s19
      %p164 = scmp.lt.s32.totalorder %s19, 3
      %p165 = pnand %p163, %p164
      %p166 = pneg %p165
      // Predicated region
      $region9: #{decoder_apply.5} parent=5 // pred_check
        _
      $region10: #{decoder_apply.5} parent=5 // pred_check_branch
        %168 = sbr.rel (%p165) target = $region12
      $region11: #{decoder_apply.5} parent=5 // pred_region
        %s169 = ssub.s32 %s19, 1
        // Predicated region
        $region13: #{decoder_apply.5} parent=11 // pred_check
          %p170 = pneg %p66
        $region14: #{decoder_apply.5} parent=11 // pred_check_branch
          %172 = sbr.rel (%p170) target = $region16
        $region15: #{decoder_apply.5} parent=11 // pred_region
          %s174 = ssub.s32 16, 16
          %175 = vsyncadd [#allocation6], %s174
          %s177 = sshll.u32 [#allocation5], 4
          %s178 = int_to_ptr.vmem [resolvable:$true] %s177
          %180 = dma.hbm_to_vmem [thread:$0]  %s1, 16, %s178, [#allocation6]
        $region16: #{decoder_apply.5} parent=11 // pred_fallthru
          _
        // Predicated region
        $region17: #{decoder_apply.5} parent=11 // pred_check
          %p181 = pneg %p87
        $region18: #{decoder_apply.5} parent=11 // pred_check_branch
          %183 = sbr.rel (%p181) target = $region20
        $region19: #{decoder_apply.5} parent=11 // pred_region
          %s185 = ssub.s32 16, 16
          %186 = vsyncadd [#allocation6], %s185
          %s188 = sshll.u32 [#allocation7], 4
          %s189 = int_to_ptr.vmem [resolvable:$true] %s188
          %191 = dma.hbm_to_vmem [thread:$0]  %s2, 16, %s189, [#allocation6]
        $region20: #{decoder_apply.5} parent=11 // pred_fallthru
          _
        // Predicated region
        $region21: #{decoder_apply.5} parent=11 // pred_check
          %p192 = pneg %p108
        $region22: #{decoder_apply.5} parent=11 // pred_check_branch
          %194 = sbr.rel (%p192) target = $region24
        $region23: #{decoder_apply.5} parent=11 // pred_region
          %s196 = ssub.s32 512, 512
          %197 = vsyncadd [#allocation9], %s196
          %s198 = sshll.u32 [#allocation8], 4
          %s199 = int_to_ptr.vmem [resolvable:$true] %s198
          %204 = dma.hbm_to_vmem [thread:$0]  %s3, 512, %s199, [#allocation9], 64, 64, 4
        $region24: #{decoder_apply.5} parent=11 // pred_fallthru
          _
        // Predicated region
        $region25: #{decoder_apply.5} parent=11 // pred_check
          %p205 = pneg %p129
        $region26: #{decoder_apply.5} parent=11 // pred_check_branch
          %207 = sbr.rel (%p205) target = $region28
        $region27: #{decoder_apply.5} parent=11 // pred_region
          %s209 = ssub.s32 16, 16
          %210 = vsyncadd [#allocation9], %s209
          %s212 = sshll.u32 [#allocation10], 4
          %s213 = int_to_ptr.vmem [resolvable:$true] %s212
          %215 = dma.hbm_to_vmem [thread:$0]  %s4, 16, %s213, [#allocation9]
        $region28: #{decoder_apply.5} parent=11 // pred_fallthru
          _
      $region12: #{decoder_apply.5} parent=5 // pred_fallthru
        _
      %p216 = scmp.lt.s32.totalorder %s19, 2
      // Predicated region
      $region29: #{decoder_apply.5} parent=5 // pred_check
        %p217 = pneg %p216
      $region30: #{decoder_apply.5} parent=5 // pred_check_branch
        %219 = sbr.rel (%p217) target = $region32
      $region31: #{decoder_apply.5} parent=5 // pred_region
        // Predicated region
        $region33: #{decoder_apply.5} parent=31 // pred_check
          %p220 = pneg %p39
        $region34: #{decoder_apply.5} parent=31 // pred_check_branch
          %222 = sbr.rel (%p220) target = $region36
        $region35: #{decoder_apply.5} parent=31 // pred_region
          %s223 = sand.u32 %s29, 1
          %s224 = scalar_lea.sflag [#allocation3], %s223
          %s225 = sand.u32 %s29, 1
          %s226 = smul.addr %s225, 4
          %s227 = scalar_lea.vmem [#allocation2], %s226
          %s229 = ssub.s32 64, 64
          %230 = vsyncadd %s224, %s229
          %s231 = smul.addr %s19, 64
          %s232 = scalar_lea.hbm %s0, %s231
          %s234 = sshll.u32 %s227, 4
          %s235 = int_to_ptr.vmem [resolvable:$true] %s234
          %237 = dma.hbm_to_vmem [thread:$0]  %s232, 64, %s235, %s224
        $region36: #{decoder_apply.5} parent=31 // pred_fallthru
          _
      $region32: #{decoder_apply.5} parent=5 // pred_fallthru
        _
      %p238 = scmp.le.s32.totalorder 1, %s19
      %p239 = scmp.lt.s32.totalorder %s19, 3
      %p240 = pnand %p238, %p239
      %p241 = pneg %p240
      // Predicated region
      $region37: #{decoder_apply.5} parent=5 // pred_check
        _
      $region38: #{decoder_apply.5} parent=5 // pred_check_branch
        %243 = sbr.rel (%p240) target = $region40
      $region39: #{decoder_apply.5} parent=5 // pred_region
        %s244 = ssub.s32 %s19, 1
        %s245 = sand.u32 %s32, 1
        %s246 = scalar_lea.sflag [#allocation3], %s245
        %s247 = sand.u32 %s32, 1
        %s248 = smul.addr %s247, 4
        %s249 = scalar_lea.vmem [#allocation2], %s248
        // Predicated region
        $region41: #{decoder_apply.5} parent=39 // pred_check
          %p250 = pneg %p45
        $region42: #{decoder_apply.5} parent=39 // pred_check_branch
          %252 = sbr.rel (%p250) target = $region44
        $region43: #{decoder_apply.5} parent=39 // pred_region
          %253 = dma.done %s246, 64
        $region44: #{decoder_apply.5} parent=39 // pred_fallthru
          _
        // Predicated region
        $region45: #{decoder_apply.5} parent=39 // pred_check
          %p254 = pneg %p66
        $region46: #{decoder_apply.5} parent=39 // pred_check_branch
          %256 = sbr.rel (%p254) target = $region48
        $region47: #{decoder_apply.5} parent=39 // pred_region
          %257 = dma.done [#allocation6], 16
        $region48: #{decoder_apply.5} parent=39 // pred_fallthru
          _
        // Predicated region
        $region49: #{decoder_apply.5} parent=39 // pred_check
          %p258 = pneg %p87
        $region50: #{decoder_apply.5} parent=39 // pred_check_branch
          %260 = sbr.rel (%p258) target = $region52
        $region51: #{decoder_apply.5} parent=39 // pred_region
          %261 = dma.done [#allocation6], 16
        $region52: #{decoder_apply.5} parent=39 // pred_fallthru
          _
        // Predicated region
        $region53: #{decoder_apply.5} parent=39 // pred_check
          %p262 = pneg %p108
        $region54: #{decoder_apply.5} parent=39 // pred_check_branch
          %264 = sbr.rel (%p262) target = $region56
        $region55: #{decoder_apply.5} parent=39 // pred_region
          %265 = dma.done [#allocation9], 512
        $region56: #{decoder_apply.5} parent=39 // pred_fallthru
          _
        // Predicated region
        $region57: #{decoder_apply.5} parent=39 // pred_check
          %p266 = pneg %p129
        $region58: #{decoder_apply.5} parent=39 // pred_check_branch
          %268 = sbr.rel (%p266) target = $region60
        $region59: #{decoder_apply.5} parent=39 // pred_region
          %269 = dma.done [#allocation9], 16
        $region60: #{decoder_apply.5} parent=39 // pred_fallthru
          _
        %s270 = sand.u32 %s32, 1
        %s271 = scalar_lea.sflag [#allocation3], %s270
        %s272 = sand.u32 %s32, 1
        %s273 = smul.addr %s272, 4
        %s274 = scalar_lea.vmem [#allocation2], %s273
        %p275 = pneg %p45
        %p276 = pneg %p42
        %p277 = pneg %p66
        %p278 = pneg %p63
        %p279 = pneg %p87
        %p280 = pneg %p84
        %p281 = pneg %p108
        %p282 = pneg %p105
        %p283 = pneg %p129
        %p284 = pneg %p126
        %p285 = pneg %p155
        %p286 = pneg %p152
        %s287 = sand.u32 %s142, 1
        %s288 = scalar_lea.sflag [#allocation4], %s287
        %s289 = sand.u32 %s142, 1
        %s290 = smul.addr %s289, 8
        %s291 = scalar_lea.vmem [#allocation11], %s290
        %v293 = vld [vmem:[%s249] sm:$0xf]
        %v294 = vunpack.c.l.bf16 %v293
        %vm295 = vcmask 261120
        %v296 = vsel %vm295, %v294, 0.0
        %297 = vadd.xlane.f32.xlu0 %v296
        %v298 = vpop.xlane.xlu0 %297
        %v299 = vrcp.pop 32.0
        %v300 = vmul.f32 %v298, %v299
        %v301 = vsub.f32 %v294, %v300
        %v302 = vmul.f32 %v301, %v301
        %v303 = vsel %vm295, %v302, 0.0
        %304 = vadd.xlane.f32.xlu0 %v303
        %v305 = vpop.xlane.xlu0 %304
        %v306 = vmul.f32 %v305, %v299
        %v307 = vadd.f32 %v306, 1e-06
        %v308 = vrsqrt.pop %v307
        %v309 = vmul.f32 %v301, %v308
        %v310 = vld [vmem:[#allocation5] sm:$0x1]
        %v312 = vlaneseq
        %v313 = vshrl.u32 %v312, 7
        %v314 = vsub.s32 0, %v313
        %v315 = vrot.slane %v310, %v314
        %v317 = vmul.f32 %v309, %v315
        %v318 = vld [vmem:[#allocation7] sm:$0x1]
        %v320 = vlaneseq
        %v321 = vshrl.u32 %v320, 7
        %v322 = vsub.s32 0, %v321
        %v323 = vrot.slane %v318, %v322
        %v325 = vadd.f32 %v317, %v323
        %v326 = vpack.c.bf16 %v325, %v325
        %v327 = vld [vmem:[#allocation8] sm:$0xf]
        %v328 = vld [vmem:[#allocation8 + $0x4] sm:$0xf]
        %v329 = vld [vmem:[#allocation8 + $0x8] sm:$0xf]
        %v330 = vld [vmem:[#allocation8 + $0xc] sm:$0xf]
        %v331 = vld [vmem:[#allocation8 + $0x10] sm:$0xf]
        %v332 = vld [vmem:[#allocation8 + $0x14] sm:$0xf]
        %v333 = vld [vmem:[#allocation8 + $0x18] sm:$0xf]
        %v334 = vld [vmem:[#allocation8 + $0x1c] sm:$0xf]
        %v335 = vld [vmem:[#allocation10] sm:$0x1]
        %v337 = vlaneseq
        %v338 = vshrl.u32 %v337, 7
        %v339 = vsub.s32 0, %v338
        %v340 = vrot.slane %v335, %v339
        %v350 = vunpack.c.l.b16 %v327
        %v351 = vunpack.c.l.b16 %v328
        %v352 = vunpack.c.l.b16 %v329
        %v353 = vunpack.c.l.b16 %v330
        %v354 = vunpack.c.l.b16 %v331
        %v355 = vunpack.c.l.b16 %v332
        %v356 = vunpack.c.l.b16 %v333
        %v357 = vunpack.c.l.b16 %v334
        %v358 = vpack.c.b16 %v351, %v350
        %v359 = vpack.c.b16 %v353, %v352
        %v360 = vpack.c.b16 %v355, %v354
        %v361 = vpack.c.b16 %v357, %v356
        %v363 = vsel %vm295, %v326, 0
        %v366 = vsel %vm295, %v358, 0
        %v369 = vsel %vm295, %v359, 0
        %v372 = vsel %vm295, %v360, 0
        %v375 = vsel %vm295, %v361, 0
        %377 = vmatprep.subr.bf16.mxu0 0
        %378 = vmatpush1.bf16.xpose.msra.mxu0 %v366
        %379 = vmatprep.subr.bf16.mxu0 0
        %380 = vmatpush1.bf16.xpose.msra.mxu0 %v369
        %381 = vmatprep.subr.bf16.mxu0 0
        %382 = vmatpush1.bf16.xpose.msra.mxu0 %v372
        %383 = vmatprep.subr.bf16.mxu0 0
        %384 = vmatpush1.bf16.xpose.msra.mxu0 %v375
        %385 = vmatprep.subr.bf16.mxu0 0
        %386 = vmatpush1.bf16.xpose.msra.mxu0 0
        %387 = vmatprep.subr.bf16.mxu0 0
        %388 = vmatpush1.bf16.xpose.msra.mxu0 0
        %389 = vmatprep.subr.bf16.mxu0 0
        %390 = vmatpush1.bf16.xpose.msra.mxu0 0
        %391 = vmatprep.subr.bf16.mxu0 0
        %392 = vmatpush1.bf16.xpose.msra.mxu0 0
        %393 = vmatprep.subr.bf16.mxu0 0
        %394 = vmatpush1.bf16.xpose.msra.mxu0 0
        %395 = vmatprep.subr.bf16.mxu0 0
        %396 = vmatpush1.bf16.xpose.msra.mxu0 0
        %397 = vmatprep.subr.bf16.mxu0 0
        %398 = vmatpush1.bf16.xpose.msra.mxu0 0
        %399 = vmatprep.subr.bf16.mxu0 0
        %400 = vmatpush1.bf16.xpose.msra.mxu0 0
        %401 = vmatprep.subr.bf16.mxu0 0
        %402 = vmatpush1.bf16.xpose.msra.mxu0 0
        %403 = vmatprep.subr.bf16.mxu0 0
        %404 = vmatpush1.bf16.xpose.msra.mxu0 0
        %405 = vmatprep.subr.bf16.mxu0 0
        %406 = vmatpush1.bf16.xpose.msra.mxu0 0
        %407 = vmatprep.subr.bf16.mxu0 0
        %408 = vmatpush1.bf16.xpose.msra.mxu0 0
        %409 = vmatprep.mubr.bf16.mxu0 0
        %410 = vmatmul.mubr.bf16.gmra.mrb[0].mxu0 %v363
        %v411 = vpop.f32.mrb[0].mxu0
        %v412 = vadd.f32 %v340, %v411
        %v413 = vpop.f32.mrb[0].mxu0
        %v414 = vpop.f32.mrb[0].mxu0
        %v415 = vpop.f32.mrb[0].mxu0
        %416 = vdwg.mxu0
        %vm417 = vcmask 523264
        %v418 = vsel %vm417, %v412, -inf
        %419 = vmax.xlane.f32.xlu0 %v418
        %v420 = vpop.xlane.xlu0 %419
        %v421 = vsub.f32 %v412, %v420
        %v422 = vmul.f32 %v421, 1.442695
        %v423 = vpow.pop %v422
        %v424 = vsel %vm417, %v423, 0.0
        %425 = vadd.xlane.f32.xlu0 %v424
        %v426 = vpop.xlane.xlu0 %425
        %v427 = vlog2.pop %v426
        %v428 = vmul.f32 %v427, 0.6931472
        %v429 = vsub.f32 %v421, %v428
        %430 = vst.msk [vmem:[%s291] sm:$0xff] %vm417, %v429
        %s431 = sand.u32 %s142, 1
        %s432 = scalar_lea.sflag [#allocation4], %s431
        %s433 = sand.u32 %s142, 1
        %s434 = smul.addr %s433, 8
        %s435 = scalar_lea.vmem [#allocation11], %s434
        // Predicated region
        $region61: #{decoder_apply.5} parent=39 // pred_check
          %p436 = pneg %p152
        $region62: #{decoder_apply.5} parent=39 // pred_check_branch
          %438 = sbr.rel (%p436) target = $region64
        $region63: #{decoder_apply.5} parent=39 // pred_region
          %s440 = ssub.s32 128, 128
          %441 = vsyncadd %s432, %s440
          %s442 = smul.addr %s24, 128
          %s443 = scalar_lea.hbm %s5, %s442
          %s445 = sshll.u32 %s435, 4
          %s446 = int_to_ptr.vmem [resolvable:$true] %s445
          %448 = dma.vmem_to_hbm [thread:$0]  %s446, 128, %s443, %s432
        $region64: #{decoder_apply.5} parent=39 // pred_fallthru
          _
      $region40: #{decoder_apply.5} parent=5 // pred_fallthru
        _
      %p449 = scmp.le.s32.totalorder 2, %s19
      // Predicated region
      $region65: #{decoder_apply.5} parent=5 // pred_check
        %p450 = pneg %p449
      $region66: #{decoder_apply.5} parent=5 // pred_check_branch
        %452 = sbr.rel (%p450) target = $region68
      $region67: #{decoder_apply.5} parent=5 // pred_region
        %s453 = ssub.s32 %s19, 2
        // Predicated region
        $region69: #{decoder_apply.5} parent=67 // pred_check
          %p454 = pneg %p158
        $region70: #{decoder_apply.5} parent=67 // pred_check_branch
          %456 = sbr.rel (%p454) target = $region72
        $region71: #{decoder_apply.5} parent=67 // pred_region
          %s457 = sand.u32 %s143, 1
          %s458 = scalar_lea.sflag [#allocation4], %s457
          %s459 = sand.u32 %s143, 1
          %s460 = smul.addr %s459, 8
          %s461 = scalar_lea.vmem [#allocation11], %s460
          %462 = dma.done %s458, 128
        $region72: #{decoder_apply.5} parent=67 // pred_fallthru
          _
      $region68: #{decoder_apply.5} parent=5 // pred_fallthru
        _
    $region6: #{decoder_apply.5} parent=1 // loop_footer
      %s23 = sadd.s32 1, %s19
    $region7: #{decoder_apply.5} parent=1 // loop_footer_branch
      %18 = sbr.rel target = $region3
    $region8: #{decoder_apply.5} parent=1 // loop_exit
      _
    %463 = vsyncpa [#allocation3], 1
    %s464 = scalar_lea.sflag [#allocation3], 1
    %465 = vsyncpa %s464, 1
    %466 = vsyncpa [#allocation6], 1
    %467 = vsyncpa [#allocation9], 1
    %468 = vsyncpa [#allocation4], 1
    %s469 = scalar_lea.sflag [#allocation4], 1
    %470 = vsyncpa %s469, 1

// kernel: decoder_apply.3
$region0: #{decoder_apply.3}
  #allocation0 [shape = 'u32[]', space=smem, size = 0x4, offset = 0x4, fixed_abs, tag = 'smem constant byte address 0x4 - core index']
  #allocation1 [shape = 'u32[144,128]{1,0:T(1,128)}', space=vmem, size = 0x12000, scoped, tag = 'internal scratch']
  %s0 = inlined_call_operand.hbm [shape: bf16[2,8,32], index: 0, kind: input, shape index: {}]
  %s1 = inlined_call_operand.hbm [shape: bf16[2,16,32], index: 1, kind: input, shape index: {}]
  %s2 = inlined_call_operand.hbm [shape: f32[2,8,8], index: 2, kind: input, shape index: {}]
  %s3 = inlined_call_operand.hbm [shape: f32[2,8,16], index: 3, kind: input, shape index: {}]
  %s4 = inlined_call_operand.hbm [shape: f32[1,32], index: 4, kind: input, shape index: {}]
  %s5 = inlined_call_operand.hbm [shape: f32[1,32], index: 5, kind: input, shape index: {}]
  %s6 = inlined_call_operand.hbm [shape: f32[1,32], index: 6, kind: input, shape index: {}]
  %s7 = inlined_call_operand.hbm [shape: f32[1,32], index: 7, kind: input, shape index: {}]
  %s8 = inlined_call_operand.hbm [shape: f32[1,32], index: 8, kind: input, shape index: {}]
  %s9 = inlined_call_operand.hbm [shape: f32[1,32], index: 9, kind: input, shape index: {}]
  %s10 = inlined_call_operand.hbm [shape: bf16[32,96], index: 10, kind: input, shape index: {}]
  %s11 = inlined_call_operand.hbm [shape: f32[1,96], index: 11, kind: input, shape index: {}]
  %s12 = inlined_call_operand.hbm [shape: bf16[32,32], index: 12, kind: input, shape index: {}]
  %s13 = inlined_call_operand.hbm [shape: f32[1,32], index: 13, kind: input, shape index: {}]
  %s14 = inlined_call_operand.hbm [shape: bf16[32,32], index: 14, kind: input, shape index: {}]
  %s15 = inlined_call_operand.hbm [shape: f32[1,32], index: 15, kind: input, shape index: {}]
  %s16 = inlined_call_operand.hbm [shape: bf16[32,64], index: 16, kind: input, shape index: {}]
  %s17 = inlined_call_operand.hbm [shape: f32[1,64], index: 17, kind: input, shape index: {}]
  %s18 = inlined_call_operand.hbm [shape: bf16[32,32], index: 18, kind: input, shape index: {}]
  %s19 = inlined_call_operand.hbm [shape: f32[1,32], index: 19, kind: input, shape index: {}]
  %s20 = inlined_call_operand.hbm [shape: bf16[32,64], index: 20, kind: input, shape index: {}]
  %s21 = inlined_call_operand.hbm [shape: f32[1,64], index: 21, kind: input, shape index: {}]
  %s22 = inlined_call_operand.hbm [shape: bf16[64,32], index: 22, kind: input, shape index: {}]
  %s23 = inlined_call_operand.hbm [shape: f32[1,32], index: 23, kind: input, shape index: {}]
  %s24 = inlined_call_operand.hbm [shape: bf16[2,8,32], index: 24, kind: output, shape index: {}]
  %s25 = sld [smem:[#allocation0]]
  $region225: #{decoder_apply.3} parent=0
    _
  %s27 = ssub.s32 1, %s25
  %s28 = scalar_select 0, %s27, %s25
  $region1: #{decoder_apply.3} parent=0
    #allocation2 [shape = 'u8[4096]{0}', space=vmem, size = 0x1000, scoped, tag = 'input window, operand 0']
    #allocation3 [shape = 's32[2]{0}', space=sflag, size = 0x8, scoped, tag = 'scoped memory for decoder_apply.3']
    #allocation4 [shape = 's32[2]{0}', space=sflag, size = 0x8, scoped, tag = 'scoped memory for decoder_apply.3']
    #allocation5 [shape = 'u8[8192]{0}', space=vmem, size = 0x2000, scoped, tag = 'input window, operand 1']
    #allocation6 [shape = 's32[2]{0}', space=sflag, size = 0x8, scoped, tag = 'scoped memory for decoder_apply.3']
    #allocation7 [shape = 'u8[8192]{0}', space=vmem, size = 0x2000, scoped, tag = 'input window, operand 2']
    #allocation8 [shape = 'u8[8192]{0}', space=vmem, size = 0x2000, scoped, tag = 'input window, operand 3']
    #allocation9 [shape = 's32[2]{0}', space=sflag, size = 0x8, scoped, tag = 'scoped memory for decoder_apply.3']
    #allocation10 [shape = 'u8[512]{0}', space=vmem, size = 0x400, scoped, tag = 'input window, operand 4, single buffered']
    #allocation11 [shape = 'u8[512]{0}', space=vmem, size = 0x400, scoped, tag = 'input window, operand 5, single buffered']
    #allocation12 [shape = 's32[1]{0}', space=sflag, size = 0x4, scoped, tag = 'scoped memory for decoder_apply.3']
    #allocation13 [shape = 'u8[512]{0}', space=vmem, size = 0x400, scoped, tag = 'input window, operand 6, single buffered']
    #allocation14 [shape = 'u8[512]{0}', space=vmem, size = 0x400, scoped, tag = 'input window, operand 7, single buffered']
    #allocation15 [shape = 's32[1]{0}', space=sflag, size = 0x4, scoped, tag = 'scoped memory for decoder_apply.3']
    #allocation16 [shape = 'u8[512]{0}', space=vmem, size = 0x400, scoped, tag = 'input window, operand 8, single buffered']
    #allocation17 [shape = 'u8[512]{0}', space=vmem, size = 0x400, scoped, tag = 'input window, operand 9, single buffered']
    #allocation18 [shape = 's32[1]{0}', space=sflag, size = 0x4, scoped, tag = 'scoped memory for decoder_apply.3']
    #allocation19 [shape = 'u8[8192]{0}', space=vmem, size = 0x2000, scoped, tag = 'input window, operand 10, single buffered']
    #allocation20 [shape = 'u8[512]{0}', space=vmem, size = 0x400, scoped, tag = 'input window, operand 11, single buffered']
    #allocation21 [shape = 's32[1]{0}', space=sflag, size = 0x4, scoped, tag = 'scoped memory for decoder_apply.3']
    #allocation22 [shape = 'u8[8192]{0}', space=vmem, size = 0x2000, scoped, tag = 'input window, operand 12, single buffered']
    #allocation23 [shape = 'u8[512]{0}', space=vmem, size = 0x400, scoped, tag = 'input window, operand 13, single buffered']
    #allocation24 [shape = 's32[1]{0}', space=sflag, size = 0x4, scoped, tag = 'scoped memory for decoder_apply.3']
    #allocation25 [shape = 'u8[8192]{0}', space=vmem, size = 0x2000, scoped, tag = 'input window, operand 14, single buffered']
    #allocation26 [shape = 'u8[512]{0}', space=vmem, size = 0x400, scoped, tag = 'input window, operand 15, single buffered']
    #allocation27 [shape = 's32[1]{0}', space=sflag, size = 0x4, scoped, tag = 'scoped memory for decoder_apply.3']
    #allocation28 [shape = 'u8[8192]{0}', space=vmem, size = 0x2000, scoped, tag = 'input window, operand 16, single buffered']
    #allocation29 [shape = 'u8[512]{0}', space=vmem, size = 0x400, scoped, tag = 'input window, operand 17, single buffered']
    #allocation30 [shape = 's32[1]{0}', space=sflag, size = 0x4, scoped, tag = 'scoped memory for decoder_apply.3']
    #allocation31 [shape = 'u8[8192]{0}', space=vmem, size = 0x2000, scoped, tag = 'input window, operand 18, single buffered']
    #allocation32 [shape = 'u8[512]{0}', space=vmem, size = 0x400, scoped, tag = 'input window, operand 19, single buffered']
    #allocation33 [shape = 's32[1]{0}', space=sflag, size = 0x4, scoped, tag = 'scoped memory for decoder_apply.3']
    #allocation34 [shape = 'u8[8192]{0}', space=vmem, size = 0x2000, scoped, tag = 'input window, operand 20, single buffered']
    #allocation35 [shape = 'u8[512]{0}', space=vmem, size = 0x400, scoped, tag = 'input window, operand 21, single buffered']
    #allocation36 [shape = 's32[1]{0}', space=sflag, size = 0x4, scoped, tag = 'scoped memory for decoder_apply.3']
    #allocation37 [shape = 'u8[16384]{0}', space=vmem, size = 0x4000, scoped, tag = 'input window, operand 22, single buffered']
    #allocation38 [shape = 'u8[512]{0}', space=vmem, size = 0x400, scoped, tag = 'input window, operand 23, single buffered']
    #allocation39 [shape = 's32[1]{0}', space=sflag, size = 0x4, scoped, tag = 'scoped memory for decoder_apply.3']
    #allocation40 [shape = 'u8[4096]{0}', space=vmem, size = 0x1000, scoped, tag = 'output window, operand 0']
    %29 = vsyncpa [#allocation3], 0
    %s30 = scalar_lea.sflag [#allocation3], 1
    %31 = vsyncpa %s30, 0
    %32 = vsyncpa [#allocation6], 0
    %s33 = scalar_lea.sflag [#allocation6], 1
    %34 = vsyncpa %s33, 0
    %35 = vsyncpa [#allocation9], 0
    %s36 = scalar_lea.sflag [#allocation9], 1
    %37 = vsyncpa %s36, 0
    %38 = vsyncpa [#allocation12], 0
    %39 = vsyncpa [#allocation15], 0
    %40 = vsyncpa [#allocation18], 0
    %41 = vsyncpa [#allocation21], 0
    %42 = vsyncpa [#allocation24], 0
    %43 = vsyncpa [#allocation27], 0
    %44 = vsyncpa [#allocation30], 0
    %45 = vsyncpa [#allocation33], 0
    %46 = vsyncpa [#allocation36], 0
    %47 = vsyncpa [#allocation39], 0
    %48 = vsyncpa [#allocation4], 0
    %s49 = scalar_lea.sflag [#allocation4], 1
    %50 = vsyncpa %s49, 0
    loop: start=0, step=1, limit=4
    $region2: #{decoder_apply.3} parent=1 // loop_pre_header
      _
    $region3: #{decoder_apply.3} parent=1 // loop_header
      %s52 = sphi 0, %s56
      %p53 = scmp.ge.s32.totalorder %s52, 4
      %s62 = sphi 0, %s64
      %s65 = sphi 0, %s62
      %s66 = sphi 0, %s65
      %s82 = sphi 0, %s66
      %s88 = sphi 0, %s90
      %s91 = sphi 0, %s88
      %s92 = sphi 0, %s91
      %s108 = sphi 0, %s92
      %s114 = sphi 0, %s116
      %s117 = sphi 0, %s114
      %s118 = sphi 0, %s117
      %s134 = sphi 0, %s118
      %s140 = sphi 0, %s142
      %s143 = sphi 0, %s140
      %s144 = sphi 0, %s143
      %s160 = sphi 0, %s144
      %s164 = sphi 0, %s164
      %s166 = sphi 0, %s164
      %s167 = sphi 0, %s166
      %s181 = sphi 0, %s167
      %s185 = sphi 0, %s185
      %s187 = sphi 0, %s185
      %s188 = sphi 0, %s187
      %s202 = sphi 0, %s188
      %s206 = sphi 0, %s206
      %s208 = sphi 0, %s206
      %s209 = sphi 0, %s208
      %s223 = sphi 0, %s209
      %s227 = sphi 0, %s227
      %s229 = sphi 0, %s227
      %s230 = sphi 0, %s229
      %s244 = sphi 0, %s230
      %s248 = sphi 0, %s248
      %s250 = sphi 0, %s248
      %s251 = sphi 0, %s250
      %s265 = sphi 0, %s251
      %s269 = sphi 0, %s269
      %s271 = sphi 0, %s269
      %s272 = sphi 0, %s271
      %s286 = sphi 0, %s272
      %s290 = sphi 0, %s290
      %s292 = sphi 0, %s290
      %s293 = sphi 0, %s292
      %s307 = sphi 0, %s293
      %s311 = sphi 0, %s311
      %s313 = sphi 0, %s311
      %s314 = sphi 0, %s313
      %s328 = sphi 0, %s314
      %s332 = sphi 0, %s332
      %s334 = sphi 0, %s332
      %s335 = sphi 0, %s334
      %s349 = sphi 0, %s335
      %s353 = sphi 0, %s353
      %s355 = sphi 0, %s353
      %s356 = sphi 0, %s355
      %s370 = sphi 0, %s356
      %s374 = sphi 0, %s374
      %s376 = sphi 0, %s374
      %s377 = sphi 0, %s376
      %s391 = sphi 0, %s377
      %s395 = sphi 0, %s395
      %s397 = sphi 0, %s395
      %s398 = sphi 0, %s397
      %s412 = sphi 0, %s398
      %s416 = sphi 0, %s416
      %s418 = sphi 0, %s416
      %s419 = sphi 0, %s418
      %s433 = sphi 0, %s419
      %s437 = sphi 0, %s437
      %s439 = sphi 0, %s437
      %s440 = sphi 0, %s439
      %s454 = sphi 0, %s440
      %s458 = sphi 0, %s458
      %s460 = sphi 0, %s458
      %s461 = sphi 0, %s460
      %s475 = sphi 0, %s461
      %s479 = sphi 0, %s479
      %s481 = sphi 0, %s479
      %s482 = sphi 0, %s481
      %s496 = sphi 0, %s482
      %s500 = sphi 0, %s500
      %s502 = sphi 0, %s500
      %s503 = sphi 0, %s502
      %s517 = sphi 0, %s503
      %s521 = sphi 0, %s521
      %s523 = sphi 0, %s521
      %s524 = sphi 0, %s523
      %s538 = sphi 0, %s524
      %s542 = sphi 0, %s542
      %s544 = sphi 0, %s542
      %s545 = sphi 0, %s544
      %s559 = sphi 0, %s545
      %s563 = sphi 0, %s563
      %s565 = sphi 0, %s563
      %s566 = sphi 0, %s565
      %s580 = sphi 0, %s566
      %s586 = sphi 0, %s588
      %s589 = sphi 0, %s586
      %s590 = sphi 0, %s589
      %s606 = sphi 0, %s590
    $region4: #{decoder_apply.3} parent=1 // loop_header_branch
      %55 = sbr.rel (%p53) target = $region8
    $region5: #{decoder_apply.3} parent=1 // loop_body
      %s57 = ssub.s32 %s52, 1
      %s58 = ssub.s32 %s52, 2
      %s59 = sadd.s32 %s52, 1
      %s60 = ssub.s32 %s52, %s59
      %p61 = scmp.eq.s32.totalorder %s60, 0
      %s63 = sadd.s32 %s62, 1
      %s64 = scalar_select %p61, %s62, %s63
      %p67 = pneg %p61
      %p68 = scmp.eq.s32.totalorder %s52, 1
      %p69 = por %p67, %p68
      %p70 = scmp.ne.s32.totalorder %s62, %s65
      %p71 = scmp.eq.s32.totalorder %s52, 0
      %p72 = por %p70, %p71
      %p73 = scmp.ne.s32.totalorder %s62, %s65
      %p74 = scmp.eq.s32.totalorder %s57, 1
      %p75 = por %p73, %p74
      %p76 = scmp.ne.s32.totalorder %s65, %s66
      %p77 = scmp.eq.s32.totalorder %s57, 0
      %p78 = por %p76, %p77
      %p79 = scmp.ne.s32.totalorder %s65, %s66
      %p80 = scmp.eq.s32.totalorder %s58, 1
      %p81 = por %p79, %p80
      %p83 = scmp.ne.s32.totalorder %s66, %s82
      %p84 = scmp.eq.s32.totalorder %s58, 0
      %p85 = por %p83, %p84
      %s86 = ssub.s32 %s52, %s59
      %p87 = scmp.eq.s32.totalorder %s86, 0
      %s89 = sadd.s32 %s88, 1
      %s90 = scalar_select %p87, %s88, %s89
      %p93 = pneg %p87
      %p94 = scmp.eq.s32.totalorder %s52, 1
      %p95 = por %p93, %p94
      %p96 = scmp.ne.s32.totalorder %s88, %s91
      %p97 = scmp.eq.s32.totalorder %s52, 0
      %p98 = por %p96, %p97
      %p99 = scmp.ne.s32.totalorder %s88, %s91
      %p100 = scmp.eq.s32.totalorder %s57, 1
      %p101 = por %p99, %p100
      %p102 = scmp.ne.s32.totalorder %s91, %s92
      %p103 = scmp.eq.s32.totalorder %s57, 0
      %p104 = por %p102, %p103
      %p105 = scmp.ne.s32.totalorder %s91, %s92
      %p106 = scmp.eq.s32.totalorder %s58, 1
      %p107 = por %p105, %p106
      %p109 = scmp.ne.s32.totalorder %s92, %s108
      %p110 = scmp.eq.s32.totalorder %s58, 0
      %p111 = por %p109, %p110
      %s112 = ssub.s32 %s52, %s59
      %p113 = scmp.eq.s32.totalorder %s112, 0
      %s115 = sadd.s32 %s114, 1
      %s116 = scalar_select %p113, %s114, %s115
      %p119 = pneg %p113
      %p120 = scmp.eq.s32.totalorder %s52, 1
      %p121 = por %p119, %p120
      %p122 = scmp.ne.s32.totalorder %s114, %s117
      %p123 = scmp.eq.s32.totalorder %s52, 0
      %p124 = por %p122, %p123
      %p125 = scmp.ne.s32.totalorder %s114, %s117
      %p126 = scmp.eq.s32.totalorder %s57, 1
      %p127 = por %p125, %p126
      %p128 = scmp.ne.s32.totalorder %s117, %s118
      %p129 = scmp.eq.s32.totalorder %s57, 0
      %p130 = por %p128, %p129
      %p131 = scmp.ne.s32.totalorder %s117, %s118
      %p132 = scmp.eq.s32.totalorder %s58, 1
      %p133 = por %p131, %p132
      %p135 = scmp.ne.s32.totalorder %s118, %s134
      %p136 = scmp.eq.s32.totalorder %s58, 0
      %p137 = por %p135, %p136
      %s138 = ssub.s32 %s52, %s59
      %p139 = scmp.eq.s32.totalorder %s138, 0
      %s141 = sadd.s32 %s140, 1
      %s142 = scalar_select %p139, %s140, %s141
      %p145 = pneg %p139
      %p146 = scmp.eq.s32.totalorder %s52, 1
      %p147 = por %p145, %p146
      %p148 = scmp.ne.s32.totalorder %s140, %s143
      %p149 = scmp.eq.s32.totalorder %s52, 0
      %p150 = por %p148, %p149
      %p151 = scmp.ne.s32.totalorder %s140, %s143
      %p152 = scmp.eq.s32.totalorder %s57, 1
      %p153 = por %p151, %p152
      %p154 = scmp.ne.s32.totalorder %s143, %s144
      %p155 = scmp.eq.s32.totalorder %s57, 0
      %p156 = por %p154, %p155
      %p157 = scmp.ne.s32.totalorder %s143, %s144
      %p158 = scmp.eq.s32.totalorder %s58, 1
      %p159 = por %p157, %p158
      %p161 = scmp.ne.s32.totalorder %s144, %s160
      %p162 = scmp.eq.s32.totalorder %s58, 0
      %p163 = por %p161, %p162
      %s165 = sadd.s32 %s164, 1
      %p168 = scmp.eq.s32.totalorder %s52, 1
      %p169 = scmp.ne.s32.totalorder %s164, %s166
      %p170 = scmp.eq.s32.totalorder %s52, 0
      %p171 = por %p169, %p170
      %p172 = scmp.ne.s32.totalorder %s164, %s166
      %p173 = scmp.eq.s32.totalorder %s57, 1
      %p174 = por %p172, %p173
      %p175 = scmp.ne.s32.totalorder %s166, %s167
      %p176 = scmp.eq.s32.totalorder %s57, 0
      %p177 = por %p175, %p176
      %p178 = scmp.ne.s32.totalorder %s166, %s167
      %p179 = scmp.eq.s32.totalorder %s58, 1
      %p180 = por %p178, %p179
      %p182 = scmp.ne.s32.totalorder %s167, %s181
      %p183 = scmp.eq.s32.totalorder %s58, 0
      %p184 = por %p182, %p183
      %s186 = sadd.s32 %s185, 1
      %p189 = scmp.eq.s32.totalorder %s52, 1
      %p190 = scmp.ne.s32.totalorder %s185, %s187
      %p191 = scmp.eq.s32.totalorder %s52, 0
      %p192 = por %p190, %p191
      %p193 = scmp.ne.s32.totalorder %s185, %s187
      %p194 = scmp.eq.s32.totalorder %s57, 1
      %p195 = por %p193, %p194
      %p196 = scmp.ne.s32.totalorder %s187, %s188
      %p197 = scmp.eq.s32.totalorder %s57, 0
      %p198 = por %p196, %p197
      %p199 = scmp.ne.s32.totalorder %s187, %s188
      %p200 = scmp.eq.s32.totalorder %s58, 1
      %p201 = por %p199, %p200
      %p203 = scmp.ne.s32.totalorder %s188, %s202
      %p204 = scmp.eq.s32.totalorder %s58, 0
      %p205 = por %p203, %p204
      %s207 = sadd.s32 %s206, 1
      %p210 = scmp.eq.s32.totalorder %s52, 1
      %p211 = scmp.ne.s32.totalorder %s206, %s208
      %p212 = scmp.eq.s32.totalorder %s52, 0
      %p213 = por %p211, %p212
      %p214 = scmp.ne.s32.totalorder %s206, %s208
      %p215 = scmp.eq.s32.totalorder %s57, 1
      %p216 = por %p214, %p215
      %p217 = scmp.ne.s32.totalorder %s208, %s209
      %p218 = scmp.eq.s32.totalorder %s57, 0
      %p219 = por %p217, %p218
      %p220 = scmp.ne.s32.totalorder %s208, %s209
      %p221 = scmp.eq.s32.totalorder %s58, 1
      %p222 = por %p220, %p221
      %p224 = scmp.ne.s32.totalorder %s209, %s223
      %p225 = scmp.eq.s32.totalorder %s58, 0
      %p226 = por %p224, %p225
      %s228 = sadd.s32 %s227, 1
      %p231 = scmp.eq.s32.totalorder %s52, 1
      %p232 = scmp.ne.s32.totalorder %s227, %s229
      %p233 = scmp.eq.s32.totalorder %s52, 0
      %p234 = por %p232, %p233
      %p235 = scmp.ne.s32.totalorder %s227, %s229
      %p236 = scmp.eq.s32.totalorder %s57, 1
      %p237 = por %p235, %p236
      %p238 = scmp.ne.s32.totalorder %s229, %s230
      %p239 = scmp.eq.s32.totalorder %s57, 0
      %p240 = por %p238, %p239
      %p241 = scmp.ne.s32.totalorder %s229, %s230
      %p242 = scmp.eq.s32.totalorder %s58, 1
      %p243 = por %p241, %p242
      %p245 = scmp.ne.s32.totalorder %s230, %s244
      %p246 = scmp.eq.s32.totalorder %s58, 0
      %p247 = por %p245, %p246
      %s249 = sadd.s32 %s248, 1
      %p252 = scmp.eq.s32.totalorder %s52, 1
      %p253 = scmp.ne.s32.totalorder %s248, %s250
      %p254 = scmp.eq.s32.totalorder %s52, 0
      %p255 = por %p253, %p254
      %p256 = scmp.ne.s32.totalorder %s248, %s250
      %p257 = scmp.eq.s32.totalorder %s57, 1
      %p258 = por %p256, %p257
      %p259 = scmp.ne.s32.totalorder %s250, %s251
      %p260 = scmp.eq.s32.totalorder %s57, 0
      %p261 = por %p259, %p260
      %p262 = scmp.ne.s32.totalorder %s250, %s251
      %p263 = scmp.eq.s32.totalorder %s58, 1
      %p264 = por %p262, %p263
      %p266 = scmp.ne.s32.totalorder %s251, %s265
      %p267 = scmp.eq.s32.totalorder %s58, 0
      %p268 = por %p266, %p267
      %s270 = sadd.s32 %s269, 1
      %p273 = scmp.eq.s32.totalorder %s52, 1
      %p274 = scmp.ne.s32.totalorder %s269, %s271
      %p275 = scmp.eq.s32.totalorder %s52, 0
      %p276 = por %p274, %p275
      %p277 = scmp.ne.s32.totalorder %s269, %s271
      %p278 = scmp.eq.s32.totalorder %s57, 1
      %p279 = por %p277, %p278
      %p280 = scmp.ne.s32.totalorder %s271, %s272
      %p281 = scmp.eq.s32.totalorder %s57, 0
      %p282 = por %p280, %p281
      %p283 = scmp.ne.s32.totalorder %s271, %s272
      %p284 = scmp.eq.s32.totalorder %s58, 1
      %p285 = por %p283, %p284
      %p287 = scmp.ne.s32.totalorder %s272, %s286
      %p288 = scmp.eq.s32.totalorder %s58, 0
      %p289 = por %p287, %p288
      %s291 = sadd.s32 %s290, 1
      %p294 = scmp.eq.s32.totalorder %s52, 1
      %p295 = scmp.ne.s32.totalorder %s290, %s292
      %p296 = scmp.eq.s32.totalorder %s52, 0
      %p297 = por %p295, %p296
      %p298 = scmp.ne.s32.totalorder %s290, %s292
      %p299 = scmp.eq.s32.totalorder %s57, 1
      %p300 = por %p298, %p299
      %p301 = scmp.ne.s32.totalorder %s292, %s293
      %p302 = scmp.eq.s32.totalorder %s57, 0
      %p303 = por %p301, %p302
      %p304 = scmp.ne.s32.totalorder %s292, %s293
      %p305 = scmp.eq.s32.totalorder %s58, 1
      %p306 = por %p304, %p305
      %p308 = scmp.ne.s32.totalorder %s293, %s307
      %p309 = scmp.eq.s32.totalorder %s58, 0
      %p310 = por %p308, %p309
      %s312 = sadd.s32 %s311, 1
      %p315 = scmp.eq.s32.totalorder %s52, 1
      %p316 = scmp.ne.s32.totalorder %s311, %s313
      %p317 = scmp.eq.s32.totalorder %s52, 0
      %p318 = por %p316, %p317
      %p319 = scmp.ne.s32.totalorder %s311, %s313
      %p320 = scmp.eq.s32.totalorder %s57, 1
      %p321 = por %p319, %p320
      %p322 = scmp.ne.s32.totalorder %s313, %s314
      %p323 = scmp.eq.s32.totalorder %s57, 0
      %p324 = por %p322, %p323
      %p325 = scmp.ne.s32.totalorder %s313, %s314
      %p326 = scmp.eq.s32.totalorder %s58, 1
      %p327 = por %p325, %p326
      %p329 = scmp.ne.s32.totalorder %s314, %s328
      %p330 = scmp.eq.s32.totalorder %s58, 0
      %p331 = por %p329, %p330
      %s333 = sadd.s32 %s332, 1
      %p336 = scmp.eq.s32.totalorder %s52, 1
      %p337 = scmp.ne.s32.totalorder %s332, %s334
      %p338 = scmp.eq.s32.totalorder %s52, 0
      %p339 = por %p337, %p338
      %p340 = scmp.ne.s32.totalorder %s332, %s334
      %p341 = scmp.eq.s32.totalorder %s57, 1
      %p342 = por %p340, %p341
      %p343 = scmp.ne.s32.totalorder %s334, %s335
      %p344 = scmp.eq.s32.totalorder %s57, 0
      %p345 = por %p343, %p344
      %p346 = scmp.ne.s32.totalorder %s334, %s335
      %p347 = scmp.eq.s32.totalorder %s58, 1
      %p348 = por %p346, %p347
      %p350 = scmp.ne.s32.totalorder %s335, %s349
      %p351 = scmp.eq.s32.totalorder %s58, 0
      %p352 = por %p350, %p351
      %s354 = sadd.s32 %s353, 1
      %p357 = scmp.eq.s32.totalorder %s52, 1
      %p358 = scmp.ne.s32.totalorder %s353, %s355
      %p359 = scmp.eq.s32.totalorder %s52, 0
      %p360 = por %p358, %p359
      %p361 = scmp.ne.s32.totalorder %s353, %s355
      %p362 = scmp.eq.s32.totalorder %s57, 1
      %p363 = por %p361, %p362
      %p364 = scmp.ne.s32.totalorder %s355, %s356
      %p365 = scmp.eq.s32.totalorder %s57, 0
      %p366 = por %p364, %p365
      %p367 = scmp.ne.s32.totalorder %s355, %s356
      %p368 = scmp.eq.s32.totalorder %s58, 1
      %p369 = por %p367, %p368
      %p371 = scmp.ne.s32.totalorder %s356, %s370
      %p372 = scmp.eq.s32.totalorder %s58, 0
      %p373 = por %p371, %p372
      %s375 = sadd.s32 %s374, 1
      %p378 = scmp.eq.s32.totalorder %s52, 1
      %p379 = scmp.ne.s32.totalorder %s374, %s376
      %p380 = scmp.eq.s32.totalorder %s52, 0
      %p381 = por %p379, %p380
      %p382 = scmp.ne.s32.totalorder %s374, %s376
      %p383 = scmp.eq.s32.totalorder %s57, 1
      %p384 = por %p382, %p383
      %p385 = scmp.ne.s32.totalorder %s376, %s377
      %p386 = scmp.eq.s32.totalorder %s57, 0
      %p387 = por %p385, %p386
      %p388 = scmp.ne.s32.totalorder %s376, %s377
      %p389 = scmp.eq.s32.totalorder %s58, 1
      %p390 = por %p388, %p389
      %p392 = scmp.ne.s32.totalorder %s377, %s391
      %p393 = scmp.eq.s32.totalorder %s58, 0
      %p394 = por %p392, %p393
      %s396 = sadd.s32 %s395, 1
      %p399 = scmp.eq.s32.totalorder %s52, 1
      %p400 = scmp.ne.s32.totalorder %s395, %s397
      %p401 = scmp.eq.s32.totalorder %s52, 0
      %p402 = por %p400, %p401
      %p403 = scmp.ne.s32.totalorder %s395, %s397
      %p404 = scmp.eq.s32.totalorder %s57, 1
      %p405 = por %p403, %p404
      %p406 = scmp.ne.s32.totalorder %s397, %s398
      %p407 = scmp.eq.s32.totalorder %s57, 0
      %p408 = por %p406, %p407
      %p409 = scmp.ne.s32.totalorder %s397, %s398
      %p410 = scmp.eq.s32.totalorder %s58, 1
      %p411 = por %p409, %p410
      %p413 = scmp.ne.s32.totalorder %s398, %s412
      %p414 = scmp.eq.s32.totalorder %s58, 0
      %p415 = por %p413, %p414
      %s417 = sadd.s32 %s416, 1
      %p420 = scmp.eq.s32.totalorder %s52, 1
      %p421 = scmp.ne.s32.totalorder %s416, %s418
      %p422 = scmp.eq.s32.totalorder %s52, 0
      %p423 = por %p421, %p422
      %p424 = scmp.ne.s32.totalorder %s416, %s418
      %p425 = scmp.eq.s32.totalorder %s57, 1
      %p426 = por %p424, %p425
      %p427 = scmp.ne.s32.totalorder %s418, %s419
      %p428 = scmp.eq.s32.totalorder %s57, 0
      %p429 = por %p427, %p428
      %p430 = scmp.ne.s32.totalorder %s418, %s419
      %p431 = scmp.eq.s32.totalorder %s58, 1
      %p432 = por %p430, %p431
      %p434 = scmp.ne.s32.totalorder %s419, %s433
      %p435 = scmp.eq.s32.totalorder %s58, 0
      %p436 = por %p434, %p435
      %s438 = sadd.s32 %s437, 1
      %p441 = scmp.eq.s32.totalorder %s52, 1
      %p442 = scmp.ne.s32.totalorder %s437, %s439
      %p443 = scmp.eq.s32.totalorder %s52, 0
      %p444 = por %p442, %p443
      %p445 = scmp.ne.s32.totalorder %s437, %s439
      %p446 = scmp.eq.s32.totalorder %s57, 1
      %p447 = por %p445, %p446
      %p448 = scmp.ne.s32.totalorder %s439, %s440
      %p449 = scmp.eq.s32.totalorder %s57, 0
      %p450 = por %p448, %p449
      %p451 = scmp.ne.s32.totalorder %s439, %s440
      %p452 = scmp.eq.s32.totalorder %s58, 1
      %p453 = por %p451, %p452
      %p455 = scmp.ne.s32.totalorder %s440, %s454
      %p456 = scmp.eq.s32.totalorder %s58, 0
      %p457 = por %p455, %p456
      %s459 = sadd.s32 %s458, 1
      %p462 = scmp.eq.s32.totalorder %s52, 1
      %p463 = scmp.ne.s32.totalorder %s458, %s460
      %p464 = scmp.eq.s32.totalorder %s52, 0
      %p465 = por %p463, %p464
      %p466 = scmp.ne.s32.totalorder %s458, %s460
      %p467 = scmp.eq.s32.totalorder %s57, 1
      %p468 = por %p466, %p467
      %p469 = scmp.ne.s32.totalorder %s460, %s461
      %p470 = scmp.eq.s32.totalorder %s57, 0
      %p471 = por %p469, %p470
      %p472 = scmp.ne.s32.totalorder %s460, %s461
      %p473 = scmp.eq.s32.totalorder %s58, 1
      %p474 = por %p472, %p473
      %p476 = scmp.ne.s32.totalorder %s461, %s475
      %p477 = scmp.eq.s32.totalorder %s58, 0
      %p478 = por %p476, %p477
      %s480 = sadd.s32 %s479, 1
      %p483 = scmp.eq.s32.totalorder %s52, 1
      %p484 = scmp.ne.s32.totalorder %s479, %s481
      %p485 = scmp.eq.s32.totalorder %s52, 0
      %p486 = por %p484, %p485
      %p487 = scmp.ne.s32.totalorder %s479, %s481
      %p488 = scmp.eq.s32.totalorder %s57, 1
      %p489 = por %p487, %p488
      %p490 = scmp.ne.s32.totalorder %s481, %s482
      %p491 = scmp.eq.s32.totalorder %s57, 0
      %p492 = por %p490, %p491
      %p493 = scmp.ne.s32.totalorder %s481, %s482
      %p494 = scmp.eq.s32.totalorder %s58, 1
      %p495 = por %p493, %p494
      %p497 = scmp.ne.s32.totalorder %s482, %s496
      %p498 = scmp.eq.s32.totalorder %s58, 0
      %p499 = por %p497, %p498
      %s501 = sadd.s32 %s500, 1
      %p504 = scmp.eq.s32.totalorder %s52, 1
      %p505 = scmp.ne.s32.totalorder %s500, %s502
      %p506 = scmp.eq.s32.totalorder %s52, 0
      %p507 = por %p505, %p506
      %p508 = scmp.ne.s32.totalorder %s500, %s502
      %p509 = scmp.eq.s32.totalorder %s57, 1
      %p510 = por %p508, %p509
      %p511 = scmp.ne.s32.totalorder %s502, %s503
      %p512 = scmp.eq.s32.totalorder %s57, 0
      %p513 = por %p511, %p512
      %p514 = scmp.ne.s32.totalorder %s502, %s503
      %p515 = scmp.eq.s32.totalorder %s58, 1
      %p516 = por %p514, %p515
      %p518 = scmp.ne.s32.totalorder %s503, %s517
      %p519 = scmp.eq.s32.totalorder %s58, 0
      %p520 = por %p518, %p519
      %s522 = sadd.s32 %s521, 1
      %p525 = scmp.eq.s32.totalorder %s52, 1
      %p526 = scmp.ne.s32.totalorder %s521, %s523
      %p527 = scmp.eq.s32.totalorder %s52, 0
      %p528 = por %p526, %p527
      %p529 = scmp.ne.s32.totalorder %s521, %s523
      %p530 = scmp.eq.s32.totalorder %s57, 1
      %p531 = por %p529, %p530
      %p532 = scmp.ne.s32.totalorder %s523, %s524
      %p533 = scmp.eq.s32.totalorder %s57, 0
      %p534 = por %p532, %p533
      %p535 = scmp.ne.s32.totalorder %s523, %s524
      %p536 = scmp.eq.s32.totalorder %s58, 1
      %p537 = por %p535, %p536
      %p539 = scmp.ne.s32.totalorder %s524, %s538
      %p540 = scmp.eq.s32.totalorder %s58, 0
      %p541 = por %p539, %p540
      %s543 = sadd.s32 %s542, 1
      %p546 = scmp.eq.s32.totalorder %s52, 1
      %p547 = scmp.ne.s32.totalorder %s542, %s544
      %p548 = scmp.eq.s32.totalorder %s52, 0
      %p549 = por %p547, %p548
      %p550 = scmp.ne.s32.totalorder %s542, %s544
      %p551 = scmp.eq.s32.totalorder %s57, 1
      %p552 = por %p550, %p551
      %p553 = scmp.ne.s32.totalorder %s544, %s545
      %p554 = scmp.eq.s32.totalorder %s57, 0
      %p555 = por %p553, %p554
      %p556 = scmp.ne.s32.totalorder %s544, %s545
      %p557 = scmp.eq.s32.totalorder %s58, 1
      %p558 = por %p556, %p557
      %p560 = scmp.ne.s32.totalorder %s545, %s559
      %p561 = scmp.eq.s32.totalorder %s58, 0
      %p562 = por %p560, %p561
      %s564 = sadd.s32 %s563, 1
      %p567 = scmp.eq.s32.totalorder %s52, 1
      %p568 = scmp.ne.s32.totalorder %s563, %s565
      %p569 = scmp.eq.s32.totalorder %s52, 0
      %p570 = por %p568, %p569
      %p571 = scmp.ne.s32.totalorder %s563, %s565
      %p572 = scmp.eq.s32.totalorder %s57, 1
      %p573 = por %p571, %p572
      %p574 = scmp.ne.s32.totalorder %s565, %s566
      %p575 = scmp.eq.s32.totalorder %s57, 0
      %p576 = por %p574, %p575
      %p577 = scmp.ne.s32.totalorder %s565, %s566
      %p578 = scmp.eq.s32.totalorder %s58, 1
      %p579 = por %p577, %p578
      %p581 = scmp.ne.s32.totalorder %s566, %s580
      %p582 = scmp.eq.s32.totalorder %s58, 0
      %p583 = por %p581, %p582
      %s584 = ssub.s32 %s52, %s59
      %p585 = scmp.eq.s32.totalorder %s584, 0
      %s587 = sadd.s32 %s586, 1
      %s588 = scalar_select %p585, %s586, %s587
      %p591 = pneg %p585
      %p592 = scmp.eq.s32.totalorder %s52, 1
      %p593 = por %p591, %p592
      %p594 = scmp.ne.s32.totalorder %s586, %s589
      %p595 = scmp.eq.s32.totalorder %s52, 0
      %p596 = por %p594, %p595
      %p597 = scmp.ne.s32.totalorder %s586, %s589
      %p598 = scmp.eq.s32.totalorder %s57, 1
      %p599 = por %p597, %p598
      %p600 = scmp.ne.s32.totalorder %s589, %s590
      %p601 = scmp.eq.s32.totalorder %s57, 0
      %p602 = por %p600, %p601
      %p603 = scmp.ne.s32.totalorder %s589, %s590
      %p604 = scmp.eq.s32.totalorder %s58, 1
      %p605 = por %p603, %p604
      %p607 = scmp.ne.s32.totalorder %s590, %s606
      %p608 = scmp.eq.s32.totalorder %s58, 0
      %p609 = por %p607, %p608
      %p610 = scmp.le.s32.totalorder 1, %s52
      %p611 = scmp.lt.s32.totalorder %s52, 3
      %p612 = pnand %p610, %p611
      %p613 = pneg %p612
      // Predicated region
      $region9: #{decoder_apply.3} parent=5 // pred_check
        _
      $region10: #{decoder_apply.3} parent=5 // pred_check_branch
        %615 = sbr.rel (%p612) target = $region12
      $region11: #{decoder_apply.3} parent=5 // pred_region
        %s616 = ssub.s32 %s52, 1
        // Predicated region
        $region13: #{decoder_apply.3} parent=11 // pred_check
          %p617 = pneg %p177
        $region14: #{decoder_apply.3} parent=11 // pred_check_branch
          %619 = sbr.rel (%p617) target = $region16
        $region15: #{decoder_apply.3} parent=11 // pred_region
          %s621 = ssub.s32 16, 16
          %622 = vsyncadd [#allocation9], %s621
          %s624 = sshll.u32 [#allocation10], 4
          %s625 = int_to_ptr.vmem [resolvable:$true] %s624
          %627 = dma.hbm_to_vmem [thread:$0]  %s4, 16, %s625, [#allocation9]
        $region16: #{decoder_apply.3} parent=11 // pred_fallthru
          _
        // Predicated region
        $region17: #{decoder_apply.3} parent=11 // pred_check
          %p628 = pneg %p198
        $region18: #{decoder_apply.3} parent=11 // pred_check_branch
          %630 = sbr.rel (%p628) target = $region20
        $region19: #{decoder_apply.3} parent=11 // pred_region
          %s632 = ssub.s32 16, 16
          %633 = vsyncadd [#allocation12], %s632
          %s635 = sshll.u32 [#allocation11], 4
          %s636 = int_to_ptr.vmem [resolvable:$true] %s635
          %638 = dma.hbm_to_vmem [thread:$0]  %s5, 16, %s636, [#allocation12]
        $region20: #{decoder_apply.3} parent=11 // pred_fallthru
          _
        // Predicated region
        $region21: #{decoder_apply.3} parent=11 // pred_check
          %p639 = pneg %p219
        $region22: #{decoder_apply.3} parent=11 // pred_check_branch
          %641 = sbr.rel (%p639) target = $region24
        $region23: #{decoder_apply.3} parent=11 // pred_region
          %s643 = ssub.s32 16, 16
          %644 = vsyncadd [#allocation12], %s643
          %s646 = sshll.u32 [#allocation13], 4
          %s647 = int_to_ptr.vmem [resolvable:$true] %s646
          %649 = dma.hbm_to_vmem [thread:$0]  %s6, 16, %s647, [#allocation12]
        $region24: #{decoder_apply.3} parent=11 // pred_fallthru
          _
        // Predicated region
        $region25: #{decoder_apply.3} parent=11 // pred_check
          %p650 = pneg %p240
        $region26: #{decoder_apply.3} parent=11 // pred_check_branch
          %652 = sbr.rel (%p650) target = $region28
        $region27: #{decoder_apply.3} parent=11 // pred_region
          %s654 = ssub.s32 16, 16
          %655 = vsyncadd [#allocation15], %s654
          %s657 = sshll.u32 [#allocation14], 4
          %s658 = int_to_ptr.vmem [resolvable:$true] %s657
          %660 = dma.hbm_to_vmem [thread:$0]  %s7, 16, %s658, [#allocation15]
        $region28: #{decoder_apply.3} parent=11 // pred_fallthru
          _
        // Predicated region
        $region29: #{decoder_apply.3} parent=11 // pred_check
          %p661 = pneg %p261
        $region30: #{decoder_apply.3} parent=11 // pred_check_branch
          %663 = sbr.rel (%p661) target = $region32
        $region31: #{decoder_apply.3} parent=11 // pred_region
          %s665 = ssub.s32 16, 16
          %666 = vsyncadd [#allocation15], %s665
          %s668 = sshll.u32 [#allocation16], 4
          %s669 = int_to_ptr.vmem [resolvable:$true] %s668
          %671 = dma.hbm_to_vmem [thread:$0]  %s8, 16, %s669, [#allocation15]
        $region32: #{decoder_apply.3} parent=11 // pred_fallthru
          _
        // Predicated region
        $region33: #{decoder_apply.3} parent=11 // pred_check
          %p672 = pneg %p282
        $region34: #{decoder_apply.3} parent=11 // pred_check_branch
          %674 = sbr.rel (%p672) target = $region36
        $region35: #{decoder_apply.3} parent=11 // pred_region
          %s676 = ssub.s32 16, 16
          %677 = vsyncadd [#allocation18], %s676
          %s679 = sshll.u32 [#allocation17], 4
          %s680 = int_to_ptr.vmem [resolvable:$true] %s679
          %682 = dma.hbm_to_vmem [thread:$0]  %s9, 16, %s680, [#allocation18]
        $region36: #{decoder_apply.3} parent=11 // pred_fallthru
          _
        // Predicated region
        $region37: #{decoder_apply.3} parent=11 // pred_check
          %p683 = pneg %p303
        $region38: #{decoder_apply.3} parent=11 // pred_check_branch
          %685 = sbr.rel (%p683) target = $region40
        $region39: #{decoder_apply.3} parent=11 // pred_region
          %s687 = ssub.s32 256, 256
          %688 = vsyncadd [#allocation18], %s687
          %s689 = sshll.u32 [#allocation19], 4
          %s690 = int_to_ptr.vmem [resolvable:$true] %s689
          %695 = dma.hbm_to_vmem [thread:$0]  %s10, 256, %s690, [#allocation18], 64, 64, 4
        $region40: #{decoder_apply.3} parent=11 // pred_fallthru
          _
        // Predicated region
        $region41: #{decoder_apply.3} parent=11 // pred_check
          %p696 = pneg %p324
        $region42: #{decoder_apply.3} parent=11 // pred_check_branch
          %698 = sbr.rel (%p696) target = $region44
        $region43: #{decoder_apply.3} parent=11 // pred_region
          %s700 = ssub.s32 16, 16
          %701 = vsyncadd [#allocation21], %s700
          %s703 = sshll.u32 [#allocation20], 4
          %s704 = int_to_ptr.vmem [resolvable:$true] %s703
          %706 = dma.hbm_to_vmem [thread:$0]  %s11, 16, %s704, [#allocation21]
        $region44: #{decoder_apply.3} parent=11 // pred_fallthru
          _
        // Predicated region
        $region45: #{decoder_apply.3} parent=11 // pred_check
          %p707 = pneg %p345
        $region46: #{decoder_apply.3} parent=11 // pred_check_branch
          %709 = sbr.rel (%p707) target = $region48
        $region47: #{decoder_apply.3} parent=11 // pred_region
          %s711 = ssub.s32 256, 256
          %712 = vsyncadd [#allocation21], %s711
          %s713 = sshll.u32 [#allocation22], 4
          %s714 = int_to_ptr.vmem [resolvable:$true] %s713
          %719 = dma.hbm_to_vmem [thread:$0]  %s12, 256, %s714, [#allocation21], 64, 64, 4
        $region48: #{decoder_apply.3} parent=11 // pred_fallthru
          _
        // Predicated region
        $region49: #{decoder_apply.3} parent=11 // pred_check
          %p720 = pneg %p366
        $region50: #{decoder_apply.3} parent=11 // pred_check_branch
          %722 = sbr.rel (%p720) target = $region52
        $region51: #{decoder_apply.3} parent=11 // pred_region
          %s724 = ssub.s32 16, 16
          %725 = vsyncadd [#allocation24], %s724
          %s727 = sshll.u32 [#allocation23], 4
          %s728 = int_to_ptr.vmem [resolvable:$true] %s727
          %730 = dma.hbm_to_vmem [thread:$0]  %s13, 16, %s728, [#allocation24]
        $region52: #{decoder_apply.3} parent=11 // pred_fallthru
          _
        // Predicated region
        $region53: #{decoder_apply.3} parent=11 // pred_check
          %p731 = pneg %p387
        $region54: #{decoder_apply.3} parent=11 // pred_check_branch
          %733 = sbr.rel (%p731) target = $region56
        $region55: #{decoder_apply.3} parent=11 // pred_region
          %s735 = ssub.s32 256, 256
          %736 = vsyncadd [#allocation24], %s735
          %s737 = sshll.u32 [#allocation25], 4
          %s738 = int_to_ptr.vmem [resolvable:$true] %s737
          %743 = dma.hbm_to_vmem [thread:$0]  %s14, 256, %s738, [#allocation24], 64, 64, 4
        $region56: #{decoder_apply.3} parent=11 // pred_fallthru
          _
        // Predicated region
        $region57: #{decoder_apply.3} parent=11 // pred_check
          %p744 = pneg %p408
        $region58: #{decoder_apply.3} parent=11 // pred_check_branch
          %746 = sbr.rel (%p744) target = $region60
        $region59: #{decoder_apply.3} parent=11 // pred_region
          %s748 = ssub.s32 16, 16
          %749 = vsyncadd [#allocation27], %s748
          %s751 = sshll.u32 [#allocation26], 4
          %s752 = int_to_ptr.vmem [resolvable:$true] %s751
          %754 = dma.hbm_to_vmem [thread:$0]  %s15, 16, %s752, [#allocation27]
        $region60: #{decoder_apply.3} parent=11 // pred_fallthru
          _
        // Predicated region
        $region61: #{decoder_apply.3} parent=11 // pred_check
          %p755 = pneg %p429
        $region62: #{decoder_apply.3} parent=11 // pred_check_branch
          %757 = sbr.rel (%p755) target = $region64
        $region63: #{decoder_apply.3} parent=11 // pred_region
          %s759 = ssub.s32 256, 256
          %760 = vsyncadd [#allocation27], %s759
          %s761 = sshll.u32 [#allocation28], 4
          %s762 = int_to_ptr.vmem [resolvable:$true] %s761
          %767 = dma.hbm_to_vmem [thread:$0]  %s16, 256, %s762, [#allocation27], 64, 64, 4
        $region64: #{decoder_apply.3} parent=11 // pred_fallthru
          _
        // Predicated region
        $region65: #{decoder_apply.3} parent=11 // pred_check
          %p768 = pneg %p450
        $region66: #{decoder_apply.3} parent=11 // pred_check_branch
          %770 = sbr.rel (%p768) target = $region68
        $region67: #{decoder_apply.3} parent=11 // pred_region
          %s772 = ssub.s32 16, 16
          %773 = vsyncadd [#allocation30], %s772
          %s775 = sshll.u32 [#allocation29], 4
          %s776 = int_to_ptr.vmem [resolvable:$true] %s775
          %778 = dma.hbm_to_vmem [thread:$0]  %s17, 16, %s776, [#allocation30]
        $region68: #{decoder_apply.3} parent=11 // pred_fallthru
          _
        // Predicated region
        $region69: #{decoder_apply.3} parent=11 // pred_check
          %p779 = pneg %p471
        $region70: #{decoder_apply.3} parent=11 // pred_check_branch
          %781 = sbr.rel (%p779) target = $region72
        $region71: #{decoder_apply.3} parent=11 // pred_region
          %s783 = ssub.s32 256, 256
          %784 = vsyncadd [#allocation30], %s783
          %s785 = sshll.u32 [#allocation31], 4
          %s786 = int_to_ptr.vmem [resolvable:$true] %s785
          %791 = dma.hbm_to_vmem [thread:$0]  %s18, 256, %s786, [#allocation30], 64, 64, 4
        $region72: #{decoder_apply.3} parent=11 // pred_fallthru
          _
        // Predicated region
        $region73: #{decoder_apply.3} parent=11 // pred_check
          %p792 = pneg %p492
        $region74: #{decoder_apply.3} parent=11 // pred_check_branch
          %794 = sbr.rel (%p792) target = $region76
        $region75: #{decoder_apply.3} parent=11 // pred_region
          %s796 = ssub.s32 16, 16
          %797 = vsyncadd [#allocation33], %s796
          %s799 = sshll.u32 [#allocation32], 4
          %s800 = int_to_ptr.vmem [resolvable:$true] %s799
          %802 = dma.hbm_to_vmem [thread:$0]  %s19, 16, %s800, [#allocation33]
        $region76: #{decoder_apply.3} parent=11 // pred_fallthru
          _
        // Predicated region
        $region77: #{decoder_apply.3} parent=11 // pred_check
          %p803 = pneg %p513
        $region78: #{decoder_apply.3} parent=11 // pred_check_branch
          %805 = sbr.rel (%p803) target = $region80
        $region79: #{decoder_apply.3} parent=11 // pred_region
          %s807 = ssub.s32 256, 256
          %808 = vsyncadd [#allocation33], %s807
          %s809 = sshll.u32 [#allocation34], 4
          %s810 = int_to_ptr.vmem [resolvable:$true] %s809
          %815 = dma.hbm_to_vmem [thread:$0]  %s20, 256, %s810, [#allocation33], 64, 64, 4
        $region80: #{decoder_apply.3} parent=11 // pred_fallthru
          _
        // Predicated region
        $region81: #{decoder_apply.3} parent=11 // pred_check
          %p816 = pneg %p534
        $region82: #{decoder_apply.3} parent=11 // pred_check_branch
          %818 = sbr.rel (%p816) target = $region84
        $region83: #{decoder_apply.3} parent=11 // pred_region
          %s820 = ssub.s32 16, 16
          %821 = vsyncadd [#allocation36], %s820
          %s823 = sshll.u32 [#allocation35], 4
          %s824 = int_to_ptr.vmem [resolvable:$true] %s823
          %826 = dma.hbm_to_vmem [thread:$0]  %s21, 16, %s824, [#allocation36]
        $region84: #{decoder_apply.3} parent=11 // pred_fallthru
          _
        // Predicated region
        $region85: #{decoder_apply.3} parent=11 // pred_check
          %p827 = pneg %p555
        $region86: #{decoder_apply.3} parent=11 // pred_check_branch
          %829 = sbr.rel (%p827) target = $region88
        $region87: #{decoder_apply.3} parent=11 // pred_region
          %s831 = ssub.s32 512, 512
          %832 = vsyncadd [#allocation36], %s831
          %s833 = sshll.u32 [#allocation37], 4
          %s834 = int_to_ptr.vmem [resolvable:$true] %s833
          %839 = dma.hbm_to_vmem [thread:$0]  %s22, 512, %s834, [#allocation36], 64, 64, 4
        $region88: #{decoder_apply.3} parent=11 // pred_fallthru
          _
        // Predicated region
        $region89: #{decoder_apply.3} parent=11 // pred_check
          %p840 = pneg %p576
        $region90: #{decoder_apply.3} parent=11 // pred_check_branch
          %842 = sbr.rel (%p840) target = $region92
        $region91: #{decoder_apply.3} parent=11 // pred_region
          %s844 = ssub.s32 16, 16
          %845 = vsyncadd [#allocation39], %s844
          %s847 = sshll.u32 [#allocation38], 4
          %s848 = int_to_ptr.vmem [resolvable:$true] %s847
          %850 = dma.hbm_to_vmem [thread:$0]  %s23, 16, %s848, [#allocation39]
        $region92: #{decoder_apply.3} parent=11 // pred_fallthru
          _
      $region12: #{decoder_apply.3} parent=5 // pred_fallthru
        _
      %p851 = scmp.lt.s32.totalorder %s52, 2
      // Predicated region
      $region93: #{decoder_apply.3} parent=5 // pred_check
        %p852 = pneg %p851
      $region94: #{decoder_apply.3} parent=5 // pred_check_branch
        %854 = sbr.rel (%p852) target = $region96
      $region95: #{decoder_apply.3} parent=5 // pred_region
        // Predicated region
        $region97: #{decoder_apply.3} parent=95 // pred_check
          %p855 = pneg %p72
        $region98: #{decoder_apply.3} parent=95 // pred_check_branch
          %857 = sbr.rel (%p855) target = $region100
        $region99: #{decoder_apply.3} parent=95 // pred_region
          %s858 = sand.u32 %s62, 1
          %s859 = scalar_lea.sflag [#allocation3], %s858
          %s860 = sand.u32 %s62, 1
          %s861 = smul.addr %s860, 4
          %s862 = scalar_lea.vmem [#allocation2], %s861
          %s864 = ssub.s32 64, 64
          %865 = vsyncadd %s859, %s864
          %s866 = smul.addr %s52, 64
          %s867 = scalar_lea.hbm %s0, %s866
          %s869 = sshll.u32 %s862, 4
          %s870 = int_to_ptr.vmem [resolvable:$true] %s869
          %872 = dma.hbm_to_vmem [thread:$0]  %s867, 64, %s870, %s859
        $region100: #{decoder_apply.3} parent=95 // pred_fallthru
          _
        // Predicated region
        $region101: #{decoder_apply.3} parent=95 // pred_check
          %p873 = pneg %p98
        $region102: #{decoder_apply.3} parent=95 // pred_check_branch
          %875 = sbr.rel (%p873) target = $region104
        $region103: #{decoder_apply.3} parent=95 // pred_region
          %s876 = sand.u32 %s52, 1
          %s877 = scalar_lea.sflag [#allocation6], %s876
          %s878 = sand.u32 %s88, 1
          %s879 = smul.addr %s878, 8
          %s880 = scalar_lea.vmem [#allocation5], %s879
          %s882 = ssub.s32 128, 128
          %883 = vsyncadd %s877, %s882
          %s884 = smul.addr %s52, 2
          %s885 = smul.addr %s884, 64
          %s886 = scalar_lea.hbm %s1, %s885
          %s887 = sshll.u32 %s880, 4
          %s888 = int_to_ptr.vmem [resolvable:$true] %s887
          %893 = dma.hbm_to_vmem [thread:$0]  %s886, 128, %s888, %s877, 64, 64, 4
        $region104: #{decoder_apply.3} parent=95 // pred_fallthru
          _
        // Predicated region
        $region105: #{decoder_apply.3} parent=95 // pred_check
          %p894 = pneg %p124
        $region106: #{decoder_apply.3} parent=95 // pred_check_branch
          %896 = sbr.rel (%p894) target = $region108
        $region107: #{decoder_apply.3} parent=95 // pred_region
          %s897 = sand.u32 %s52, 1
          %s898 = scalar_lea.sflag [#allocation6], %s897
          %s899 = sand.u32 %s114, 1
          %s900 = smul.addr %s899, 8
          %s901 = scalar_lea.vmem [#allocation7], %s900
          %s903 = ssub.s32 128, 128
          %904 = vsyncadd %s898, %s903
          %s905 = smul.addr %s52, 128
          %s906 = scalar_lea.hbm %s2, %s905
          %s908 = sshll.u32 %s901, 4
          %s909 = int_to_ptr.vmem [resolvable:$true] %s908
          %911 = dma.hbm_to_vmem [thread:$0]  %s906, 128, %s909, %s898
        $region108: #{decoder_apply.3} parent=95 // pred_fallthru
          _
        // Predicated region
        $region109: #{decoder_apply.3} parent=95 // pred_check
          %p912 = pneg %p150
        $region110: #{decoder_apply.3} parent=95 // pred_check_branch
          %914 = sbr.rel (%p912) target = $region112
        $region111: #{decoder_apply.3} parent=95 // pred_region
          %s915 = sand.u32 %s52, 1
          %s916 = scalar_lea.sflag [#allocation9], %s915
          %s917 = sand.u32 %s140, 1
          %s918 = smul.addr %s917, 8
          %s919 = scalar_lea.vmem [#allocation8], %s918
          %s921 = ssub.s32 128, 128
          %922 = vsyncadd %s916, %s921
          %s923 = smul.addr %s52, 128
          %s924 = scalar_lea.hbm %s3, %s923
          %s926 = sshll.u32 %s919, 4
          %s927 = int_to_ptr.vmem [resolvable:$true] %s926
          %929 = dma.hbm_to_vmem [thread:$0]  %s924, 128, %s927, %s916
        $region112: #{decoder_apply.3} parent=95 // pred_fallthru
          _
      $region96: #{decoder_apply.3} parent=5 // pred_fallthru
        _
      %p930 = scmp.le.s32.totalorder 1, %s52
      %p931 = scmp.lt.s32.totalorder %s52, 3
      %p932 = pnand %p930, %p931
      %p933 = pneg %p932
      // Predicated region
      $region113: #{decoder_apply.3} parent=5 // pred_check
        _
      $region114: #{decoder_apply.3} parent=5 // pred_check_branch
        %935 = sbr.rel (%p932) target = $region116
      $region115: #{decoder_apply.3} parent=5 // pred_region
        %s936 = ssub.s32 %s52, 1
        %s937 = sand.u32 %s65, 1
        %s938 = scalar_lea.sflag [#allocation3], %s937
        %s939 = sand.u32 %s65, 1
        %s940 = smul.addr %s939, 4
        %s941 = scalar_lea.vmem [#allocation2], %s940
        // Predicated region
        $region117: #{decoder_apply.3} parent=115 // pred_check
          %p942 = pneg %p78
        $region118: #{decoder_apply.3} parent=115 // pred_check_branch
          %944 = sbr.rel (%p942) target = $region120
        $region119: #{decoder_apply.3} parent=115 // pred_region
          %945 = dma.done %s938, 64
        $region120: #{decoder_apply.3} parent=115 // pred_fallthru
          _
        %s946 = sand.u32 %s57, 1
        %s947 = scalar_lea.sflag [#allocation6], %s946
        %s948 = sand.u32 %s91, 1
        %s949 = smul.addr %s948, 8
        %s950 = scalar_lea.vmem [#allocation5], %s949
        // Predicated region
        $region121: #{decoder_apply.3} parent=115 // pred_check
          %p951 = pneg %p104
        $region122: #{decoder_apply.3} parent=115 // pred_check_branch
          %953 = sbr.rel (%p951) target = $region124
        $region123: #{decoder_apply.3} parent=115 // pred_region
          %954 = dma.done %s947, 128
        $region124: #{decoder_apply.3} parent=115 // pred_fallthru
          _
        %s955 = sand.u32 %s57, 1
        %s956 = scalar_lea.sflag [#allocation6], %s955
        %s957 = sand.u32 %s117, 1
        %s958 = smul.addr %s957, 8
        %s959 = scalar_lea.vmem [#allocation7], %s958
        // Predicated region
        $region125: #{decoder_apply.3} parent=115 // pred_check
          %p960 = pneg %p130
        $region126: #{decoder_apply.3} parent=115 // pred_check_branch
          %962 = sbr.rel (%p960) target = $region128
        $region127: #{decoder_apply.3} parent=115 // pred_region
          %963 = dma.done %s956, 128
        $region128: #{decoder_apply.3} parent=115 // pred_fallthru
          _
        %s964 = sand.u32 %s57, 1
        %s965 = scalar_lea.sflag [#allocation9], %s964
        %s966 = sand.u32 %s143, 1
        %s967 = smul.addr %s966, 8
        %s968 = scalar_lea.vmem [#allocation8], %s967
        // Predicated region
        $region129: #{decoder_apply.3} parent=115 // pred_check
          %p969 = pneg %p156
        $region130: #{decoder_apply.3} parent=115 // pred_check_branch
          %971 = sbr.rel (%p969) target = $region132
        $region131: #{decoder_apply.3} parent=115 // pred_region
          %972 = dma.done %s965, 128
        $region132: #{decoder_apply.3} parent=115 // pred_fallthru
          _
        // Predicated region
        $region133: #{decoder_apply.3} parent=115 // pred_check
          %p973 = pneg %p177
        $region134: #{decoder_apply.3} parent=115 // pred_check_branch
          %975 = sbr.rel (%p973) target = $region136
        $region135: #{decoder_apply.3} parent=115 // pred_region
          %976 = dma.done [#allocation9], 16
        $region136: #{decoder_apply.3} parent=115 // pred_fallthru
          _
        // Predicated region
        $region137: #{decoder_apply.3} parent=115 // pred_check
          %p977 = pneg %p198
        $region138: #{decoder_apply.3} parent=115 // pred_check_branch
          %979 = sbr.rel (%p977) target = $region140
        $region139: #{decoder_apply.3} parent=115 // pred_region
          %980 = dma.done [#allocation12], 16
        $region140: #{decoder_apply.3} parent=115 // pred_fallthru
          _
        // Predicated region
        $region141: #{decoder_apply.3} parent=115 // pred_check
          %p981 = pneg %p219
        $region142: #{decoder_apply.3} parent=115 // pred_check_branch
          %983 = sbr.rel (%p981) target = $region144
        $region143: #{decoder_apply.3} parent=115 // pred_region
          %984 = dma.done [#allocation12], 16
        $region144: #{decoder_apply.3} parent=115 // pred_fallthru
          _
        // Predicated region
        $region145: #{decoder_apply.3} parent=115 // pred_check
          %p985 = pneg %p240
        $region146: #{decoder_apply.3} parent=115 // pred_check_branch
          %987 = sbr.rel (%p985) target = $region148
        $region147: #{decoder_apply.3} parent=115 // pred_region
          %988 = dma.done [#allocation15], 16
        $region148: #{decoder_apply.3} parent=115 // pred_fallthru
          _
        // Predicated region
        $region149: #{decoder_apply.3} parent=115 // pred_check
          %p989 = pneg %p261
        $region150: #{decoder_apply.3} parent=115 // pred_check_branch
          %991 = sbr.rel (%p989) target = $region152
        $region151: #{decoder_apply.3} parent=115 // pred_region
          %992 = dma.done [#allocation15], 16
        $region152: #{decoder_apply.3} parent=115 // pred_fallthru
          _
        // Predicated region
        $region153: #{decoder_apply.3} parent=115 // pred_check
          %p993 = pneg %p282
        $region154: #{decoder_apply.3} parent=115 // pred_check_branch
          %995 = sbr.rel (%p993) target = $region156
        $region155: #{decoder_apply.3} parent=115 // pred_region
          %996 = dma.done [#allocation18], 16
        $region156: #{decoder_apply.3} parent=115 // pred_fallthru
          _
        // Predicated region
        $region157: #{decoder_apply.3} parent=115 // pred_check
          %p997 = pneg %p303
        $region158: #{decoder_apply.3} parent=115 // pred_check_branch
          %999 = sbr.rel (%p997) target = $region160
        $region159: #{decoder_apply.3} parent=115 // pred_region
          %1000 = dma.done [#allocation18], 256
        $region160: #{decoder_apply.3} parent=115 // pred_fallthru
          _
        // Predicated region
        $region161: #{decoder_apply.3} parent=115 // pred_check
          %p1001 = pneg %p324
        $region162: #{decoder_apply.3} parent=115 // pred_check_branch
          %1003 = sbr.rel (%p1001) target = $region164
        $region163: #{decoder_apply.3} parent=115 // pred_region
          %1004 = dma.done [#allocation21], 16
        $region164: #{decoder_apply.3} parent=115 // pred_fallthru
          _
        // Predicated region
        $region165: #{decoder_apply.3} parent=115 // pred_check
          %p1005 = pneg %p345
        $region166: #{decoder_apply.3} parent=115 // pred_check_branch
          %1007 = sbr.rel (%p1005) target = $region168
        $region167: #{decoder_apply.3} parent=115 // pred_region
          %1008 = dma.done [#allocation21], 256
        $region168: #{decoder_apply.3} parent=115 // pred_fallthru
          _
        // Predicated region
        $region169: #{decoder_apply.3} parent=115 // pred_check
          %p1009 = pneg %p366
        $region170: #{decoder_apply.3} parent=115 // pred_check_branch
          %1011 = sbr.rel (%p1009) target = $region172
        $region171: #{decoder_apply.3} parent=115 // pred_region
          %1012 = dma.done [#allocation24], 16
        $region172: #{decoder_apply.3} parent=115 // pred_fallthru
          _
        // Predicated region
        $region173: #{decoder_apply.3} parent=115 // pred_check
          %p1013 = pneg %p387
        $region174: #{decoder_apply.3} parent=115 // pred_check_branch
          %1015 = sbr.rel (%p1013) target = $region176
        $region175: #{decoder_apply.3} parent=115 // pred_region
          %1016 = dma.done [#allocation24], 256
        $region176: #{decoder_apply.3} parent=115 // pred_fallthru
          _
        // Predicated region
        $region177: #{decoder_apply.3} parent=115 // pred_check
          %p1017 = pneg %p408
        $region178: #{decoder_apply.3} parent=115 // pred_check_branch
          %1019 = sbr.rel (%p1017) target = $region180
        $region179: #{decoder_apply.3} parent=115 // pred_region
          %1020 = dma.done [#allocation27], 16
        $region180: #{decoder_apply.3} parent=115 // pred_fallthru
          _
        // Predicated region
        $region181: #{decoder_apply.3} parent=115 // pred_check
          %p1021 = pneg %p429
        $region182: #{decoder_apply.3} parent=115 // pred_check_branch
          %1023 = sbr.rel (%p1021) target = $region184
        $region183: #{decoder_apply.3} parent=115 // pred_region
          %1024 = dma.done [#allocation27], 256
        $region184: #{decoder_apply.3} parent=115 // pred_fallthru
          _
        // Predicated region
        $region185: #{decoder_apply.3} parent=115 // pred_check
          %p1025 = pneg %p450
        $region186: #{decoder_apply.3} parent=115 // pred_check_branch
          %1027 = sbr.rel (%p1025) target = $region188
        $region187: #{decoder_apply.3} parent=115 // pred_region
          %1028 = dma.done [#allocation30], 16
        $region188: #{decoder_apply.3} parent=115 // pred_fallthru
          _
        // Predicated region
        $region189: #{decoder_apply.3} parent=115 // pred_check
          %p1029 = pneg %p471
        $region190: #{decoder_apply.3} parent=115 // pred_check_branch
          %1031 = sbr.rel (%p1029) target = $region192
        $region191: #{decoder_apply.3} parent=115 // pred_region
          %1032 = dma.done [#allocation30], 256
        $region192: #{decoder_apply.3} parent=115 // pred_fallthru
          _
        // Predicated region
        $region193: #{decoder_apply.3} parent=115 // pred_check
          %p1033 = pneg %p492
        $region194: #{decoder_apply.3} parent=115 // pred_check_branch
          %1035 = sbr.rel (%p1033) target = $region196
        $region195: #{decoder_apply.3} parent=115 // pred_region
          %1036 = dma.done [#allocation33], 16
        $region196: #{decoder_apply.3} parent=115 // pred_fallthru
          _
        // Predicated region
        $region197: #{decoder_apply.3} parent=115 // pred_check
          %p1037 = pneg %p513
        $region198: #{decoder_apply.3} parent=115 // pred_check_branch
          %1039 = sbr.rel (%p1037) target = $region200
        $region199: #{decoder_apply.3} parent=115 // pred_region
          %1040 = dma.done [#allocation33], 256
        $region200: #{decoder_apply.3} parent=115 // pred_fallthru
          _
        // Predicated region
        $region201: #{decoder_apply.3} parent=115 // pred_check
          %p1041 = pneg %p534
        $region202: #{decoder_apply.3} parent=115 // pred_check_branch
          %1043 = sbr.rel (%p1041) target = $region204
        $region203: #{decoder_apply.3} parent=115 // pred_region
          %1044 = dma.done [#allocation36], 16
        $region204: #{decoder_apply.3} parent=115 // pred_fallthru
          _
        // Predicated region
        $region205: #{decoder_apply.3} parent=115 // pred_check
          %p1045 = pneg %p555
        $region206: #{decoder_apply.3} parent=115 // pred_check_branch
          %1047 = sbr.rel (%p1045) target = $region208
        $region207: #{decoder_apply.3} parent=115 // pred_region
          %1048 = dma.done [#allocation36], 512
        $region208: #{decoder_apply.3} parent=115 // pred_fallthru
          _
        // Predicated region
        $region209: #{decoder_apply.3} parent=115 // pred_check
          %p1049 = pneg %p576
        $region210: #{decoder_apply.3} parent=115 // pred_check_branch
          %1051 = sbr.rel (%p1049) target = $region212
        $region211: #{decoder_apply.3} parent=115 // pred_region
          %1052 = dma.done [#allocation39], 16
        $region212: #{decoder_apply.3} parent=115 // pred_fallthru
          _
        %s1053 = sand.u32 %s65, 1
        %s1054 = scalar_lea.sflag [#allocation3], %s1053
        %s1055 = sand.u32 %s65, 1
        %s1056 = smul.addr %s1055, 4
        %s1057 = scalar_lea.vmem [#allocation2], %s1056
        %p1058 = pneg %p78
        %p1059 = pneg %p75
        %s1060 = sand.u32 %s57, 1
        %s1061 = scalar_lea.sflag [#allocation6], %s1060
        %s1062 = sand.u32 %s91, 1
        %s1063 = smul.addr %s1062, 8
        %s1064 = scalar_lea.vmem [#allocation5], %s1063
        %p1065 = pneg %p104
        %p1066 = pneg %p101
        %s1067 = sand.u32 %s57, 1
        %s1068 = scalar_lea.sflag [#allocation6], %s1067
        %s1069 = sand.u32 %s117, 1
        %s1070 = smul.addr %s1069, 8
        %s1071 = scalar_lea.vmem [#allocation7], %s1070
        %p1072 = pneg %p130
        %p1073 = pneg %p127
        %s1074 = sand.u32 %s57, 1
        %s1075 = scalar_lea.sflag [#allocation9], %s1074
        %s1076 = sand.u32 %s143, 1
        %s1077 = smul.addr %s1076, 8
        %s1078 = scalar_lea.vmem [#allocation8], %s1077
        %p1079 = pneg %p156
        %p1080 = pneg %p153
        %p1081 = pneg %p177
        %p1082 = pneg %p174
        %p1083 = pneg %p198
        %p1084 = pneg %p195
        %p1085 = pneg %p219
        %p1086 = pneg %p216
        %p1087 = pneg %p240
        %p1088 = pneg %p237
        %p1089 = pneg %p261
        %p1090 = pneg %p258
        %p1091 = pneg %p282
        %p1092 = pneg %p279
        %p1093 = pneg %p303
        %p1094 = pneg %p300
        %p1095 = pneg %p324
        %p1096 = pneg %p321
        %p1097 = pneg %p345
        %p1098 = pneg %p342
        %p1099 = pneg %p366
        %p1100 = pneg %p363
        %p1101 = pneg %p387
        %p1102 = pneg %p384
        %p1103 = pneg %p408
        %p1104 = pneg %p405
        %p1105 = pneg %p429
        %p1106 = pneg %p426
        %p1107 = pneg %p450
        %p1108 = pneg %p447
        %p1109 = pneg %p471
        %p1110 = pneg %p468
        %p1111 = pneg %p492
        %p1112 = pneg %p489
        %p1113 = pneg %p513
        %p1114 = pneg %p510
        %p1115 = pneg %p534
        %p1116 = pneg %p531
        %p1117 = pneg %p555
        %p1118 = pneg %p552
        %p1119 = pneg %p576
        %p1120 = pneg %p573
        %p1121 = pneg %p602
        %p1122 = pneg %p599
        %s1123 = sand.u32 %s589, 1
        %s1124 = scalar_lea.sflag [#allocation4], %s1123
        %s1125 = sand.u32 %s589, 1
        %s1126 = smul.addr %s1125, 4
        %s1127 = scalar_lea.vmem [#allocation40], %s1126
        %v1129 = vld [vmem:[%s941] sm:$0xf]
        %v1130 = vunpack.c.l.bf16 %v1129
        %v1131 = vld [vmem:[%s950] sm:$0xf]
        %v1132 = vld [vmem:[%s950 + $0x4] sm:$0xf]
        %v1133 = vld [vmem:[%s959] sm:$0xff]
        %v1134 = vld [vmem:[%s968] sm:$0xff]
        %vm1135 = vcmask 261120
        %v1136 = vsel %vm1135, %v1130, 0.0
        %1137 = vadd.xlane.f32.xlu0 %v1136
        %v1138 = vpop.xlane.xlu0 %1137
        %v1139 = vrcp.pop 32.0
        %v1140 = vmul.f32 %v1138, %v1139
        %v1141 = vsub.f32 %v1130, %v1140
        %v1142 = vmul.f32 %v1141, %v1141
        %v1143 = vsel %vm1135, %v1142, 0.0
        %1144 = vadd.xlane.f32.xlu0 %v1143
        %v1145 = vpop.xlane.xlu0 %1144
        %v1146 = vmul.f32 %v1145, %v1139
        %v1147 = vadd.f32 %v1146, 1e-06
        %v1148 = vrsqrt.pop %v1147
        %v1149 = vmul.f32 %v1141, %v1148
        %v1150 = vld [vmem:[#allocation10] sm:$0x1]
        %v1152 = vlaneseq
        %v1153 = vshrl.u32 %v1152, 7
        %v1154 = vsub.s32 0, %v1153
        %v1155 = vrot.slane %v1150, %v1154
        %v1157 = vmul.f32 %v1149, %v1155
        %v1158 = vld [vmem:[#allocation11] sm:$0x1]
        %v1160 = vlaneseq
        %v1161 = vshrl.u32 %v1160, 7
        %v1162 = vsub.s32 0, %v1161
        %v1163 = vrot.slane %v1158, %v1162
        %v1165 = vadd.f32 %v1157, %v1163
        %v1166 = vld [vmem:[#allocation19] sm:$0xf]
        %v1167 = vld [vmem:[#allocation19 + $0x4] sm:$0xf]
        %v1168 = vld [vmem:[#allocation19 + $0x8] sm:$0xf]
        %v1169 = vld [vmem:[#allocation19 + $0xc] sm:$0xf]
        %v1170 = vpack.c.bf16 %v1165, %v1165
        %v1171 = vld [vmem:[#allocation20] sm:$0x1]
        %v1173 = vlaneseq
        %v1174 = vshrl.u32 %v1173, 7
        %v1175 = vsub.s32 0, %v1174
        %v1176 = vrot.slane %v1171, %v1175
        %v1182 = vunpack.c.l.b16 %v1166
        %v1183 = vunpack.c.l.b16 %v1167
        %v1184 = vunpack.c.l.b16 %v1168
        %v1185 = vunpack.c.l.b16 %v1169
        %v1186 = vpack.c.b16 %v1183, %v1182
        %v1187 = vpack.c.b16 %v1185, %v1184
        %v1191 = vsel %vm1135, %v1170, 0
        %1193 = vmatprep.subr.bf16.mxu0 0
        %1194 = vmatpush1.bf16.msra.mxu0 %v1186
        %1195 = vmatprep.subr.bf16.mxu0 0
        %1196 = vmatpush1.bf16.msra.mxu0 %v1187
        %1197 = vmatprep.subr.bf16.mxu0 0
        %1198 = vmatpush1.bf16.msra.mxu0 0
        %1199 = vmatprep.subr.bf16.mxu0 0
        %1200 = vmatpush1.bf16.msra.mxu0 0
        %1201 = vmatprep.subr.bf16.mxu0 0
        %1202 = vmatpush1.bf16.msra.mxu0 0
        %1203 = vmatprep.subr.bf16.mxu0 0
        %1204 = vmatpush1.bf16.msra.mxu0 0
        %1205 = vmatprep.subr.bf16.mxu0 0
        %1206 = vmatpush1.bf16.msra.mxu0 0
        %1207 = vmatprep.subr.bf16.mxu0 0
        %1208 = vmatpush1.bf16.msra.mxu0 0
        %1209 = vmatprep.subr.bf16.mxu0 0
        %1210 = vmatpush1.bf16.msra.mxu0 0
        %1211 = vmatprep.subr.bf16.mxu0 0
        %1212 = vmatpush1.bf16.msra.mxu0 0
        %1213 = vmatprep.subr.bf16.mxu0 0
        %1214 = vmatpush1.bf16.msra.mxu0 0
        %1215 = vmatprep.subr.bf16.mxu0 0
        %1216 = vmatpush1.bf16.msra.mxu0 0
        %1217 = vmatprep.subr.bf16.mxu0 0
        %1218 = vmatpush1.bf16.msra.mxu0 0
        %1219 = vmatprep.subr.bf16.mxu0 0
        %1220 = vmatpush1.bf16.msra.mxu0 0
        %1221 = vmatprep.subr.bf16.mxu0 0
        %1222 = vmatpush1.bf16.msra.mxu0 0
        %1223 = vmatprep.subr.bf16.mxu0 0
        %1224 = vmatpush1.bf16.msra.mxu0 0
        %1225 = vmatprep.mubr.bf16.mxu0 0
        %1226 = vmatmul.mubr.bf16.gmra.mrb[0].mxu0 %v1191
        %v1227 = vpop.f32.mrb[0].mxu0
        %v1228 = vadd.f32 %v1176, %v1227
        %v1229 = vpop.f32.mrb[0].mxu0
        %v1230 = vpop.f32.mrb[0].mxu0
        %v1231 = vpop.f32.mrb[0].mxu0
        %1232 = vdwg.mxu0
        %v1233 = vld [vmem:[#allocation22] sm:$0xf]
        %v1234 = vld [vmem:[#allocation22 + $0x4] sm:$0xf]
        %v1235 = vld [vmem:[#allocation22 + $0x8] sm:$0xf]
        %v1236 = vld [vmem:[#allocation22 + $0xc] sm:$0xf]
        %v1237 = vmul.f32 %v1228, 0.35355338
        %1239 = vrot.lane.b32.xlu0 %v1228, 96
        %v1240 = vpop.permute.xlu0 %1239
        %vm1241 = vcmask 64512
        %v1243 = vsel %vm1241, %v1237, 0
        %v1245 = vsel %vm1241, %v1240, 0
        %1247 = vmatprep.subr.mxu0 0.0
        %1248 = vmatpush1.xpose.msra.mxu0 %v1245
        %1249 = vmatprep.subr.mxu0 0.0
        %1250 = vmatpush1.xpose.msra.mxu0 0.0
        %1251 = vmatprep.subr.mxu0 0.0
        %1252 = vmatpush1.xpose.msra.mxu0 0.0
        %1253 = vmatprep.subr.mxu0 0.0
        %1254 = vmatpush1.xpose.msra.mxu0 0.0
        %1255 = vmatprep.subr.mxu0 0.0
        %1256 = vmatpush1.xpose.msra.mxu0 0.0
        %1257 = vmatprep.subr.mxu0 0.0
        %1258 = vmatpush1.xpose.msra.mxu0 0.0
        %1259 = vmatprep.subr.mxu0 0.0
        %1260 = vmatpush1.xpose.msra.mxu0 0.0
        %1261 = vmatprep.subr.mxu0 0.0
        %1262 = vmatpush1.xpose.msra.mxu0 0.0
        %1263 = vmatprep.subr.mxu0 0.0
        %1264 = vmatpush1.xpose.msra.mxu0 0.0
        %1265 = vmatprep.subr.mxu0 0.0
        %1266 = vmatpush1.xpose.msra.mxu0 0.0
        %1267 = vmatprep.subr.mxu0 0.0
        %1268 = vmatpush1.xpose.msra.mxu0 0.0
        %1269 = vmatprep.subr.mxu0 0.0
        %1270 = vmatpush1.xpose.msra.mxu0 0.0
        %1271 = vmatprep.subr.mxu0 0.0
        %1272 = vmatpush1.xpose.msra.mxu0 0.0
        %1273 = vmatprep.subr.mxu0 0.0
        %1274 = vmatpush1.xpose.msra.mxu0 0.0
        %1275 = vmatprep.subr.mxu0 0.0
        %1276 = vmatpush1.xpose.msra.mxu0 0.0
        %1277 = vmatprep.subr.mxu0 0.0
        %1278 = vmatpush1.xpose.msra.mxu0 0.0
        %1279 = vmatprep.subr.mxu0 0.0
        %1280 = vmatpush1.xpose.msra.mxu0 0.0
        %1281 = vmatprep.subr.mxu0 0.0
        %1282 = vmatpush1.xpose.msra.mxu0 0.0
        %1283 = vmatprep.subr.mxu0 0.0
        %1284 = vmatpush1.xpose.msra.mxu0 0.0
        %1285 = vmatprep.subr.mxu0 0.0
        %1286 = vmatpush1.xpose.msra.mxu0 0.0
        %1287 = vmatprep.subr.mxu0 0.0
        %1288 = vmatpush1.xpose.msra.mxu0 0.0
        %1289 = vmatprep.subr.mxu0 0.0
        %1290 = vmatpush1.xpose.msra.mxu0 0.0
        %1291 = vmatprep.subr.mxu0 0.0
        %1292 = vmatpush1.xpose.msra.mxu0 0.0
        %1293 = vmatprep.subr.mxu0 0.0
        %1294 = vmatpush1.xpose.msra.mxu0 0.0
        %1295 = vmatprep.subr.mxu0 0.0
        %1296 = vmatpush1.xpose.msra.mxu0 0.0
        %1297 = vmatprep.subr.mxu0 0.0
        %1298 = vmatpush1.xpose.msra.mxu0 0.0
        %1299 = vmatprep.subr.mxu0 0.0
        %1300 = vmatpush1.xpose.msra.mxu0 0.0
        %1301 = vmatprep.subr.mxu0 0.0
        %1302 = vmatpush1.xpose.msra.mxu0 0.0
        %1303 = vmatprep.subr.mxu0 0.0
        %1304 = vmatpush1.xpose.msra.mxu0 0.0
        %1305 = vmatprep.subr.mxu0 0.0
        %1306 = vmatpush1.xpose.msra.mxu0 0.0
        %1307 = vmatprep.subr.mxu0 0.0
        %1308 = vmatpush1.xpose.msra.mxu0 0.0
        %1309 = vmatprep.subr.mxu0 0.0
        %1310 = vmatpush1.xpose.msra.mxu0 0.0
        %1311 = vmatprep.mubr.f32.mxu0 0.0
        %1312 = vmatmul.mubr.f32.gmra.mrb[0].mxu0 %v1243
        %v1313 = vpop.f32.mrb[0].mxu0
        %v1314 = vadd.f32 %v1133, %v1313
        %v1315 = vpop.f32.mrb[0].mxu0
        %1316 = vdwg.mxu0
        %v1317 = vsel %vm1241, %v1314, -inf
        %1318 = vmax.xlane.f32.xlu0 %v1317
        %v1319 = vpop.xlane.xlu0 %1318
        %v1320 = vsub.f32 %v1314, %v1319
        %v1321 = vmul.f32 %v1320, 1.442695
        %v1322 = vpow.pop %v1321
        %v1323 = vsel %vm1241, %v1322, 0.0
        %1324 = vadd.xlane.f32.xlu0 %v1323
        %v1325 = vpop.xlane.xlu0 %1324
        %v1326 = vrcp.pop %v1325
        %v1327 = vmul.f32 %v1322, %v1326
        %1328 = vrot.lane.b32.xlu0 %v1228, 64
        %v1329 = vpop.permute.xlu0 %1328
        %v1332 = vsel %vm1241, %v1327, 0
        %1334 = vmatprep.subr.mxu0 0.0
        %1335 = vmatpush1.msra.mxu0 %v1329
        %1336 = vmatprep.subr.mxu0 0.0
        %1337 = vmatpush1.msra.mxu0 0.0
        %1338 = vmatprep.subr.mxu0 0.0
        %1339 = vmatpush1.msra.mxu0 0.0
        %1340 = vmatprep.subr.mxu0 0.0
        %1341 = vmatpush1.msra.mxu0 0.0
        %1342 = vmatprep.subr.mxu0 0.0
        %1343 = vmatpush1.msra.mxu0 0.0
        %1344 = vmatprep.subr.mxu0 0.0
        %1345 = vmatpush1.msra.mxu0 0.0
        %1346 = vmatprep.subr.mxu0 0.0
        %1347 = vmatpush1.msra.mxu0 0.0
        %1348 = vmatprep.subr.mxu0 0.0
        %1349 = vmatpush1.msra.mxu0 0.0
        %1350 = vmatprep.subr.mxu0 0.0
        %1351 = vmatpush1.msra.mxu0 0.0
        %1352 = vmatprep.subr.mxu0 0.0
        %1353 = vmatpush1.msra.mxu0 0.0
        %1354 = vmatprep.subr.mxu0 0.0
        %1355 = vmatpush1.msra.mxu0 0.0
        %1356 = vmatprep.subr.mxu0 0.0
        %1357 = vmatpush1.msra.mxu0 0.0
        %1358 = vmatprep.subr.mxu0 0.0
        %1359 = vmatpush1.msra.mxu0 0.0
        %1360 = vmatprep.subr.mxu0 0.0
        %1361 = vmatpush1.msra.mxu0 0.0
        %1362 = vmatprep.subr.mxu0 0.0
        %1363 = vmatpush1.msra.mxu0 0.0
        %1364 = vmatprep.subr.mxu0 0.0
        %1365 = vmatpush1.msra.mxu0 0.0
        %1366 = vmatprep.subr.mxu0 0.0
        %1367 = vmatpush1.msra.mxu0 0.0
        %1368 = vmatprep.subr.mxu0 0.0
        %1369 = vmatpush1.msra.mxu0 0.0
        %1370 = vmatprep.subr.mxu0 0.0
        %1371 = vmatpush1.msra.mxu0 0.0
        %1372 = vmatprep.subr.mxu0 0.0
        %1373 = vmatpush1.msra.mxu0 0.0
        %1374 = vmatprep.subr.mxu0 0.0
        %1375 = vmatpush1.msra.mxu0 0.0
        %1376 = vmatprep.subr.mxu0 0.0
        %1377 = vmatpush1.msra.mxu0 0.0
        %1378 = vmatprep.subr.mxu0 0.0
        %1379 = vmatpush1.msra.mxu0 0.0
        %1380 = vmatprep.subr.mxu0 0.0
        %1381 = vmatpush1.msra.mxu0 0.0
        %1382 = vmatprep.subr.mxu0 0.0
        %1383 = vmatpush1.msra.mxu0 0.0
        %1384 = vmatprep.subr.mxu0 0.0
        %1385 = vmatpush1.msra.mxu0 0.0
        %1386 = vmatprep.subr.mxu0 0.0
        %1387 = vmatpush1.msra.mxu0 0.0
        %1388 = vmatprep.subr.mxu0 0.0
        %1389 = vmatpush1.msra.mxu0 0.0
        %1390 = vmatprep.subr.mxu0 0.0
        %1391 = vmatpush1.msra.mxu0 0.0
        %1392 = vmatprep.subr.mxu0 0.0
        %1393 = vmatpush1.msra.mxu0 0.0
        %1394 = vmatprep.subr.mxu0 0.0
        %1395 = vmatpush1.msra.mxu0 0.0
        %1396 = vmatprep.subr.mxu0 0.0
        %1397 = vmatpush1.msra.mxu0 0.0
        %1398 = vmatprep.mubr.f32.mxu0 0.0
        %1399 = vmatmul.mubr.f32.gmra.mrb[0].mxu0 %v1332
        %v1400 = vpop.f32.mrb[0].mxu0
        %v1401 = vadd.f32 0.0, %v1400
        %v1402 = vpop.f32.mrb[0].mxu0
        %1403 = vdwg.mxu0
        %v1404 = vpack.c.bf16 %v1401, %v1401
        %1405 = vrot.lane.b32.xlu0 %v1237, 120
        %v1406 = vpop.permute.xlu0 %1405
        %1407 = vrot.lane.b32.xlu0 %v1228, 88
        %v1408 = vpop.permute.xlu0 %1407
        %v1409 = vsel %vm1241, %v1406, 0
        %v1411 = vsel %vm1241, %v1408, 0
        %1413 = vmatprep.subr.mxu0 0.0
        %1414 = vmatpush1.xpose.msra.mxu0 %v1411
        %1415 = vmatprep.subr.mxu0 0.0
        %1416 = vmatpush1.xpose.msra.mxu0 0.0
        %1417 = vmatprep.subr.mxu0 0.0
        %1418 = vmatpush1.xpose.msra.mxu0 0.0
        %1419 = vmatprep.subr.mxu0 0.0
        %1420 = vmatpush1.xpose.msra.mxu0 0.0
        %1421 = vmatprep.subr.mxu0 0.0
        %1422 = vmatpush1.xpose.msra.mxu0 0.0
        %1423 = vmatprep.subr.mxu0 0.0
        %1424 = vmatpush1.xpose.msra.mxu0 0.0
        %1425 = vmatprep.subr.mxu0 0.0
        %1426 = vmatpush1.xpose.msra.mxu0 0.0
        %1427 = vmatprep.subr.mxu0 0.0
        %1428 = vmatpush1.xpose.msra.mxu0 0.0
        %1429 = vmatprep.subr.mxu0 0.0
        %1430 = vmatpush1.xpose.msra.mxu0 0.0
        %1431 = vmatprep.subr.mxu0 0.0
        %1432 = vmatpush1.xpose.msra.mxu0 0.0
        %1433 = vmatprep.subr.mxu0 0.0
        %1434 = vmatpush1.xpose.msra.mxu0 0.0
        %1435 = vmatprep.subr.mxu0 0.0
        %1436 = vmatpush1.xpose.msra.mxu0 0.0
        %1437 = vmatprep.subr.mxu0 0.0
        %1438 = vmatpush1.xpose.msra.mxu0 0.0
        %1439 = vmatprep.subr.mxu0 0.0
        %1440 = vmatpush1.xpose.msra.mxu0 0.0
        %1441 = vmatprep.subr.mxu0 0.0
        %1442 = vmatpush1.xpose.msra.mxu0 0.0
        %1443 = vmatprep.subr.mxu0 0.0
        %1444 = vmatpush1.xpose.msra.mxu0 0.0
        %1445 = vmatprep.subr.mxu0 0.0
        %1446 = vmatpush1.xpose.msra.mxu0 0.0
        %1447 = vmatprep.subr.mxu0 0.0
        %1448 = vmatpush1.xpose.msra.mxu0 0.0
        %1449 = vmatprep.subr.mxu0 0.0
        %1450 = vmatpush1.xpose.msra.mxu0 0.0
        %1451 = vmatprep.subr.mxu0 0.0
        %1452 = vmatpush1.xpose.msra.mxu0 0.0
        %1453 = vmatprep.subr.mxu0 0.0
        %1454 = vmatpush1.xpose.msra.mxu0 0.0
        %1455 = vmatprep.subr.mxu0 0.0
        %1456 = vmatpush1.xpose.msra.mxu0 0.0
        %1457 = vmatprep.subr.mxu0 0.0
        %1458 = vmatpush1.xpose.msra.mxu0 0.0
        %1459 = vmatprep.subr.mxu0 0.0
        %1460 = vmatpush1.xpose.msra.mxu0 0.0
        %1461 = vmatprep.subr.mxu0 0.0
        %1462 = vmatpush1.xpose.msra.mxu0 0.0
        %1463 = vmatprep.subr.mxu0 0.0
        %1464 = vmatpush1.xpose.msra.mxu0 0.0
        %1465 = vmatprep.subr.mxu0 0.0
        %1466 = vmatpush1.xpose.msra.mxu0 0.0
        %1467 = vmatprep.subr.mxu0 0.0
        %1468 = vmatpush1.xpose.msra.mxu0 0.0
        %1469 = vmatprep.subr.mxu0 0.0
        %1470 = vmatpush1.xpose.msra.mxu0 0.0
        %1471 = vmatprep.subr.mxu0 0.0
        %1472 = vmatpush1.xpose.msra.mxu0 0.0
        %1473 = vmatprep.subr.mxu0 0.0
        %1474 = vmatpush1.xpose.msra.mxu0 0.0
        %1475 = vmatprep.subr.mxu0 0.0
        %1476 = vmatpush1.xpose.msra.mxu0 0.0
        %1477 = vmatprep.mubr.f32.mxu0 0.0
        %1478 = vmatmul.mubr.f32.gmra.mrb[0].mxu0 %v1409
        %v1479 = vpop.f32.mrb[0].mxu0
        %v1480 = vadd.f32 %v1133, %v1479
        %v1481 = vpop.f32.mrb[0].mxu0
        %1482 = vdwg.mxu0
        %v1483 = vsel %vm1241, %v1480, -inf
        %1484 = vmax.xlane.f32.xlu0 %v1483
        %v1485 = vpop.xlane.xlu0 %1484
        %v1486 = vsub.f32 %v1480, %v1485
        %v1487 = vmul.f32 %v1486, 1.442695
        %v1488 = vpow.pop %v1487
        %v1489 = vsel %vm1241, %v1488, 0.0
        %1490 = vadd.xlane.f32.xlu0 %v1489
        %v1491 = vpop.xlane.xlu0 %1490
        %v1492 = vrcp.pop %v1491
        %v1493 = vmul.f32 %v1488, %v1492
        %1494 = vrot.lane.b32.xlu0 %v1228, 56
        %v1495 = vpop.permute.xlu0 %1494
        %v1498 = vsel %vm1241, %v1493, 0
        %1500 = vmatprep.subr.mxu0 0.0
        %1501 = vmatpush1.msra.mxu0 %v1495
        %1502 = vmatprep.subr.mxu0 0.0
        %1503 = vmatpush1.msra.mxu0 0.0
        %1504 = vmatprep.subr.mxu0 0.0
        %1505 = vmatpush1.msra.mxu0 0.0
        %1506 = vmatprep.subr.mxu0 0.0
        %1507 = vmatpush1.msra.mxu0 0.0
        %1508 = vmatprep.subr.mxu0 0.0
        %1509 = vmatpush1.msra.mxu0 0.0
        %1510 = vmatprep.subr.mxu0 0.0
        %1511 = vmatpush1.msra.mxu0 0.0
        %1512 = vmatprep.subr.mxu0 0.0
        %1513 = vmatpush1.msra.mxu0 0.0
        %1514 = vmatprep.subr.mxu0 0.0
        %1515 = vmatpush1.msra.mxu0 0.0
        %1516 = vmatprep.subr.mxu0 0.0
        %1517 = vmatpush1.msra.mxu0 0.0
        %1518 = vmatprep.subr.mxu0 0.0
        %1519 = vmatpush1.msra.mxu0 0.0
        %1520 = vmatprep.subr.mxu0 0.0
        %1521 = vmatpush1.msra.mxu0 0.0
        %1522 = vmatprep.subr.mxu0 0.0
        %1523 = vmatpush1.msra.mxu0 0.0
        %1524 = vmatprep.subr.mxu0 0.0
        %1525 = vmatpush1.msra.mxu0 0.0
        %1526 = vmatprep.subr.mxu0 0.0
        %1527 = vmatpush1.msra.mxu0 0.0
        %1528 = vmatprep.subr.mxu0 0.0
        %1529 = vmatpush1.msra.mxu0 0.0
        %1530 = vmatprep.subr.mxu0 0.0
        %1531 = vmatpush1.msra.mxu0 0.0
        %1532 = vmatprep.subr.mxu0 0.0
        %1533 = vmatpush1.msra.mxu0 0.0
        %1534 = vmatprep.subr.mxu0 0.0
        %1535 = vmatpush1.msra.mxu0 0.0
        %1536 = vmatprep.subr.mxu0 0.0
        %1537 = vmatpush1.msra.mxu0 0.0
        %1538 = vmatprep.subr.mxu0 0.0
        %1539 = vmatpush1.msra.mxu0 0.0
        %1540 = vmatprep.subr.mxu0 0.0
        %1541 = vmatpush1.msra.mxu0 0.0
        %1542 = vmatprep.subr.mxu0 0.0
        %1543 = vmatpush1.msra.mxu0 0.0
        %1544 = vmatprep.subr.mxu0 0.0
        %1545 = vmatpush1.msra.mxu0 0.0
        %1546 = vmatprep.subr.mxu0 0.0
        %1547 = vmatpush1.msra.mxu0 0.0
        %1548 = vmatprep.subr.mxu0 0.0
        %1549 = vmatpush1.msra.mxu0 0.0
        %1550 = vmatprep.subr.mxu0 0.0
        %1551 = vmatpush1.msra.mxu0 0.0
        %1552 = vmatprep.subr.mxu0 0.0
        %1553 = vmatpush1.msra.mxu0 0.0
        %1554 = vmatprep.subr.mxu0 0.0
        %1555 = vmatpush1.msra.mxu0 0.0
        %1556 = vmatprep.subr.mxu0 0.0
        %1557 = vmatpush1.msra.mxu0 0.0
        %1558 = vmatprep.subr.mxu0 0.0
        %1559 = vmatpush1.msra.mxu0 0.0
        %1560 = vmatprep.subr.mxu0 0.0
        %1561 = vmatpush1.msra.mxu0 0.0
        %1562 = vmatprep.subr.mxu0 0.0
        %1563 = vmatpush1.msra.mxu0 0.0
        %1564 = vmatprep.mubr.f32.mxu0 0.0
        %1565 = vmatmul.mubr.f32.gmra.mrb[0].mxu0 %v1498
        %v1566 = vpop.f32.mrb[0].mxu0
        %v1567 = vadd.f32 0.0, %v1566
        %v1568 = vpop.f32.mrb[0].mxu0
        %1569 = vdwg.mxu0
        %v1570 = vpack.c.bf16 %v1567, %v1567
        %v1572 = vsel %vm1241, %v1570, 0
        %vm1574 = vcmask 1043456
        %v1576 = vsel %vm1574, %v1234, 0
        %1578 = vmatprep.subr.bf16.mxu0 0
        %1579 = vmatpush1.bf16.msra.mxu0 %v1576
        %1580 = vmatprep.subr.bf16.mxu0 0
        %1581 = vmatpush1.bf16.msra.mxu0 0
        %1582 = vmatprep.subr.bf16.mxu0 0
        %1583 = vmatpush1.bf16.msra.mxu0 0
        %1584 = vmatprep.subr.bf16.mxu0 0
        %1585 = vmatpush1.bf16.msra.mxu0 0
        %1586 = vmatprep.subr.bf16.mxu0 0
        %1587 = vmatpush1.bf16.msra.mxu0 0
        %1588 = vmatprep.subr.bf16.mxu0 0
        %1589 = vmatpush1.bf16.msra.mxu0 0
        %1590 = vmatprep.subr.bf16.mxu0 0
        %1591 = vmatpush1.bf16.msra.mxu0 0
        %1592 = vmatprep.subr.bf16.mxu0 0
        %1593 = vmatpush1.bf16.msra.mxu0 0
        %1594 = vmatprep.subr.bf16.mxu0 0
        %1595 = vmatpush1.bf16.msra.mxu0 0
        %1596 = vmatprep.subr.bf16.mxu0 0
        %1597 = vmatpush1.bf16.msra.mxu0 0
        %1598 = vmatprep.subr.bf16.mxu0 0
        %1599 = vmatpush1.bf16.msra.mxu0 0
        %1600 = vmatprep.subr.bf16.mxu0 0
        %1601 = vmatpush1.bf16.msra.mxu0 0
        %1602 = vmatprep.subr.bf16.mxu0 0
        %1603 = vmatpush1.bf16.msra.mxu0 0
        %1604 = vmatprep.subr.bf16.mxu0 0
        %1605 = vmatpush1.bf16.msra.mxu0 0
        %1606 = vmatprep.subr.bf16.mxu0 0
        %1607 = vmatpush1.bf16.msra.mxu0 0
        %1608 = vmatprep.subr.bf16.mxu0 0
        %1609 = vmatpush1.bf16.msra.mxu0 0
        %1610 = vmatprep.mubr.bf16.mxu0 0
        %1611 = vmatmul.mubr.bf16.gmra.mrb[0].mxu0 %v1572
        %v1612 = vpop.f32.mrb[0].mxu0
        %v1613 = vadd.f32 0.0, %v1612
        %v1614 = vpop.f32.mrb[0].mxu0
        %v1615 = vpop.f32.mrb[0].mxu0
        %v1616 = vpop.f32.mrb[0].mxu0
        %1617 = vdwg.mxu0
        %v1619 = vsel %vm1241, %v1404, 0
        %v1622 = vsel %vm1574, %v1233, 0
        %1624 = vmatprep.subr.bf16.mxu0 0
        %1625 = vmatpush1.bf16.msra.mxu0 %v1622
        %1626 = vmatprep.subr.bf16.mxu0 0
        %1627 = vmatpush1.bf16.msra.mxu0 0
        %1628 = vmatprep.subr.bf16.mxu0 0
        %1629 = vmatpush1.bf16.msra.mxu0 0
        %1630 = vmatprep.subr.bf16.mxu0 0
        %1631 = vmatpush1.bf16.msra.mxu0 0
        %1632 = vmatprep.subr.bf16.mxu0 0
        %1633 = vmatpush1.bf16.msra.mxu0 0
        %1634 = vmatprep.subr.bf16.mxu0 0
        %1635 = vmatpush1.bf16.msra.mxu0 0
        %1636 = vmatprep.subr.bf16.mxu0 0
        %1637 = vmatpush1.bf16.msra.mxu0 0
        %1638 = vmatprep.subr.bf16.mxu0 0
        %1639 = vmatpush1.bf16.msra.mxu0 0
        %1640 = vmatprep.subr.bf16.mxu0 0
        %1641 = vmatpush1.bf16.msra.mxu0 0
        %1642 = vmatprep.subr.bf16.mxu0 0
        %1643 = vmatpush1.bf16.msra.mxu0 0
        %1644 = vmatprep.subr.bf16.mxu0 0
        %1645 = vmatpush1.bf16.msra.mxu0 0
        %1646 = vmatprep.subr.bf16.mxu0 0
        %1647 = vmatpush1.bf16.msra.mxu0 0
        %1648 = vmatprep.subr.bf16.mxu0 0
        %1649 = vmatpush1.bf16.msra.mxu0 0
        %1650 = vmatprep.subr.bf16.mxu0 0
        %1651 = vmatpush1.bf16.msra.mxu0 0
        %1652 = vmatprep.subr.bf16.mxu0 0
        %1653 = vmatpush1.bf16.msra.mxu0 0
        %1654 = vmatprep.subr.bf16.mxu0 0
        %1655 = vmatpush1.bf16.msra.mxu0 0
        %1656 = vmatprep.mubr.bf16.mxu0 0
        %1657 = vmatmul.mubr.bf16.gmra.mrb[0].mxu0 %v1619
        %v1658 = vpop.f32.mrb[0].mxu0
        %v1659 = vadd.f32 %v1613, %v1658
        %v1660 = vpop.f32.mrb[0].mxu0
        %v1661 = vpop.f32.mrb[0].mxu0
        %v1662 = vpop.f32.mrb[0].mxu0
        %1663 = vdwg.mxu0
        %1664 = vrot.lane.b32.xlu0 %v1237, 112
        %v1665 = vpop.permute.xlu0 %1664
        %1666 = vrot.lane.b32.xlu0 %v1228, 80
        %v1667 = vpop.permute.xlu0 %1666
        %v1668 = vsel %vm1241, %v1665, 0
        %v1670 = vsel %vm1241, %v1667, 0
        %1672 = vmatprep.subr.mxu0 0.0
        %1673 = vmatpush1.xpose.msra.mxu0 %v1670
        %1674 = vmatprep.subr.mxu0 0.0
        %1675 = vmatpush1.xpose.msra.mxu0 0.0
        %1676 = vmatprep.subr.mxu0 0.0
        %1677 = vmatpush1.xpose.msra.mxu0 0.0
        %1678 = vmatprep.subr.mxu0 0.0
        %1679 = vmatpush1.xpose.msra.mxu0 0.0
        %1680 = vmatprep.subr.mxu0 0.0
        %1681 = vmatpush1.xpose.msra.mxu0 0.0
        %1682 = vmatprep.subr.mxu0 0.0
        %1683 = vmatpush1.xpose.msra.mxu0 0.0
        %1684 = vmatprep.subr.mxu0 0.0
        %1685 = vmatpush1.xpose.msra.mxu0 0.0
        %1686 = vmatprep.subr.mxu0 0.0
        %1687 = vmatpush1.xpose.msra.mxu0 0.0
        %1688 = vmatprep.subr.mxu0 0.0
        %1689 = vmatpush1.xpose.msra.mxu0 0.0
        %1690 = vmatprep.subr.mxu0 0.0
        %1691 = vmatpush1.xpose.msra.mxu0 0.0
        %1692 = vmatprep.subr.mxu0 0.0
        %1693 = vmatpush1.xpose.msra.mxu0 0.0
        %1694 = vmatprep.subr.mxu0 0.0
        %1695 = vmatpush1.xpose.msra.mxu0 0.0
        %1696 = vmatprep.subr.mxu0 0.0
        %1697 = vmatpush1.xpose.msra.mxu0 0.0
        %1698 = vmatprep.subr.mxu0 0.0
        %1699 = vmatpush1.xpose.msra.mxu0 0.0
        %1700 = vmatprep.subr.mxu0 0.0
        %1701 = vmatpush1.xpose.msra.mxu0 0.0
        %1702 = vmatprep.subr.mxu0 0.0
        %1703 = vmatpush1.xpose.msra.mxu0 0.0
        %1704 = vmatprep.subr.mxu0 0.0
        %1705 = vmatpush1.xpose.msra.mxu0 0.0
        %1706 = vmatprep.subr.mxu0 0.0
        %1707 = vmatpush1.xpose.msra.mxu0 0.0
        %1708 = vmatprep.subr.mxu0 0.0
        %1709 = vmatpush1.xpose.msra.mxu0 0.0
        %1710 = vmatprep.subr.mxu0 0.0
        %1711 = vmatpush1.xpose.msra.mxu0 0.0
        %1712 = vmatprep.subr.mxu0 0.0
        %1713 = vmatpush1.xpose.msra.mxu0 0.0
        %1714 = vmatprep.subr.mxu0 0.0
        %1715 = vmatpush1.xpose.msra.mxu0 0.0
        %1716 = vmatprep.subr.mxu0 0.0
        %1717 = vmatpush1.xpose.msra.mxu0 0.0
        %1718 = vmatprep.subr.mxu0 0.0
        %1719 = vmatpush1.xpose.msra.mxu0 0.0
        %1720 = vmatprep.subr.mxu0 0.0
        %1721 = vmatpush1.xpose.msra.mxu0 0.0
        %1722 = vmatprep.subr.mxu0 0.0
        %1723 = vmatpush1.xpose.msra.mxu0 0.0
        %1724 = vmatprep.subr.mxu0 0.0
        %1725 = vmatpush1.xpose.msra.mxu0 0.0
        %1726 = vmatprep.subr.mxu0 0.0
        %1727 = vmatpush1.xpose.msra.mxu0 0.0
        %1728 = vmatprep.subr.mxu0 0.0
        %1729 = vmatpush1.xpose.msra.mxu0 0.0
        %1730 = vmatprep.subr.mxu0 0.0
        %1731 = vmatpush1.xpose.msra.mxu0 0.0
        %1732 = vmatprep.subr.mxu0 0.0
        %1733 = vmatpush1.xpose.msra.mxu0 0.0
        %1734 = vmatprep.subr.mxu0 0.0
        %1735 = vmatpush1.xpose.msra.mxu0 0.0
        %1736 = vmatprep.mubr.f32.mxu0 0.0
        %1737 = vmatmul.mubr.f32.gmra.mrb[0].mxu0 %v1668
        %v1738 = vpop.f32.mrb[0].mxu0
        %v1739 = vadd.f32 %v1133, %v1738
        %v1740 = vpop.f32.mrb[0].mxu0
        %1741 = vdwg.mxu0
        %v1742 = vsel %vm1241, %v1739, -inf
        %1743 = vmax.xlane.f32.xlu0 %v1742
        %v1744 = vpop.xlane.xlu0 %1743
        %v1745 = vsub.f32 %v1739, %v1744
        %v1746 = vmul.f32 %v1745, 1.442695
        %v1747 = vpow.pop %v1746
        %v1748 = vsel %vm1241, %v1747, 0.0
        %1749 = vadd.xlane.f32.xlu0 %v1748
        %v1750 = vpop.xlane.xlu0 %1749
        %v1751 = vrcp.pop %v1750
        %v1752 = vmul.f32 %v1747, %v1751
        %1753 = vrot.lane.b32.xlu0 %v1228, 48
        %v1754 = vpop.permute.xlu0 %1753
        %v1757 = vsel %vm1241, %v1752, 0
        %1759 = vmatprep.subr.mxu0 0.0
        %1760 = vmatpush1.msra.mxu0 %v1754
        %1761 = vmatprep.subr.mxu0 0.0
        %1762 = vmatpush1.msra.mxu0 0.0
        %1763 = vmatprep.subr.mxu0 0.0
        %1764 = vmatpush1.msra.mxu0 0.0
        %1765 = vmatprep.subr.mxu0 0.0
        %1766 = vmatpush1.msra.mxu0 0.0
        %1767 = vmatprep.subr.mxu0 0.0
        %1768 = vmatpush1.msra.mxu0 0.0
        %1769 = vmatprep.subr.mxu0 0.0
        %1770 = vmatpush1.msra.mxu0 0.0
        %1771 = vmatprep.subr.mxu0 0.0
        %1772 = vmatpush1.msra.mxu0 0.0
        %1773 = vmatprep.subr.mxu0 0.0
        %1774 = vmatpush1.msra.mxu0 0.0
        %1775 = vmatprep.subr.mxu0 0.0
        %1776 = vmatpush1.msra.mxu0 0.0
        %1777 = vmatprep.subr.mxu0 0.0
        %1778 = vmatpush1.msra.mxu0 0.0
        %1779 = vmatprep.subr.mxu0 0.0
        %1780 = vmatpush1.msra.mxu0 0.0
        %1781 = vmatprep.subr.mxu0 0.0
        %1782 = vmatpush1.msra.mxu0 0.0
        %1783 = vmatprep.subr.mxu0 0.0
        %1784 = vmatpush1.msra.mxu0 0.0
        %1785 = vmatprep.subr.mxu0 0.0
        %1786 = vmatpush1.msra.mxu0 0.0
        %1787 = vmatprep.subr.mxu0 0.0
        %1788 = vmatpush1.msra.mxu0 0.0
        %1789 = vmatprep.subr.mxu0 0.0
        %1790 = vmatpush1.msra.mxu0 0.0
        %1791 = vmatprep.subr.mxu0 0.0
        %1792 = vmatpush1.msra.mxu0 0.0
        %1793 = vmatprep.subr.mxu0 0.0
        %1794 = vmatpush1.msra.mxu0 0.0
        %1795 = vmatprep.subr.mxu0 0.0
        %1796 = vmatpush1.msra.mxu0 0.0
        %1797 = vmatprep.subr.mxu0 0.0
        %1798 = vmatpush1.msra.mxu0 0.0
        %1799 = vmatprep.subr.mxu0 0.0
        %1800 = vmatpush1.msra.mxu0 0.0
        %1801 = vmatprep.subr.mxu0 0.0
        %1802 = vmatpush1.msra.mxu0 0.0
        %1803 = vmatprep.subr.mxu0 0.0
        %1804 = vmatpush1.msra.mxu0 0.0
        %1805 = vmatprep.subr.mxu0 0.0
        %1806 = vmatpush1.msra.mxu0 0.0
        %1807 = vmatprep.subr.mxu0 0.0
        %1808 = vmatpush1.msra.mxu0 0.0
        %1809 = vmatprep.subr.mxu0 0.0
        %1810 = vmatpush1.msra.mxu0 0.0
        %1811 = vmatprep.subr.mxu0 0.0
        %1812 = vmatpush1.msra.mxu0 0.0
        %1813 = vmatprep.subr.mxu0 0.0
        %1814 = vmatpush1.msra.mxu0 0.0
        %1815 = vmatprep.subr.mxu0 0.0
        %1816 = vmatpush1.msra.mxu0 0.0
        %1817 = vmatprep.subr.mxu0 0.0
        %1818 = vmatpush1.msra.mxu0 0.0
        %1819 = vmatprep.subr.mxu0 0.0
        %1820 = vmatpush1.msra.mxu0 0.0
        %1821 = vmatprep.subr.mxu0 0.0
        %1822 = vmatpush1.msra.mxu0 0.0
        %1823 = vmatprep.mubr.f32.mxu0 0.0
        %1824 = vmatmul.mubr.f32.gmra.mrb[0].mxu0 %v1757
        %v1825 = vpop.f32.mrb[0].mxu0
        %v1826 = vadd.f32 0.0, %v1825
        %v1827 = vpop.f32.mrb[0].mxu0
        %1828 = vdwg.mxu0
        %v1829 = vpack.c.bf16 %v1826, %v1826
        %v1831 = vsel %vm1241, %v1829, 0
        %v1834 = vsel %vm1574, %v1235, 0
        %1836 = vmatprep.subr.bf16.mxu0 0
        %1837 = vmatpush1.bf16.msra.mxu0 %v1834
        %1838 = vmatprep.subr.bf16.mxu0 0
        %1839 = vmatpush1.bf16.msra.mxu0 0
        %1840 = vmatprep.subr.bf16.mxu0 0
        %1841 = vmatpush1.bf16.msra.mxu0 0
        %1842 = vmatprep.subr.bf16.mxu0 0
        %1843 = vmatpush1.bf16.msra.mxu0 0
        %1844 = vmatprep.subr.bf16.mxu0 0
        %1845 = vmatpush1.bf16.msra.mxu0 0
        %1846 = vmatprep.subr.bf16.mxu0 0
        %1847 = vmatpush1.bf16.msra.mxu0 0
        %1848 = vmatprep.subr.bf16.mxu0 0
        %1849 = vmatpush1.bf16.msra.mxu0 0
        %1850 = vmatprep.subr.bf16.mxu0 0
        %1851 = vmatpush1.bf16.msra.mxu0 0
        %1852 = vmatprep.subr.bf16.mxu0 0
        %1853 = vmatpush1.bf16.msra.mxu0 0
        %1854 = vmatprep.subr.bf16.mxu0 0
        %1855 = vmatpush1.bf16.msra.mxu0 0
        %1856 = vmatprep.subr.bf16.mxu0 0
        %1857 = vmatpush1.bf16.msra.mxu0 0
        %1858 = vmatprep.subr.bf16.mxu0 0
        %1859 = vmatpush1.bf16.msra.mxu0 0
        %1860 = vmatprep.subr.bf16.mxu0 0
        %1861 = vmatpush1.bf16.msra.mxu0 0
        %1862 = vmatprep.subr.bf16.mxu0 0
        %1863 = vmatpush1.bf16.msra.mxu0 0
        %1864 = vmatprep.subr.bf16.mxu0 0
        %1865 = vmatpush1.bf16.msra.mxu0 0
        %1866 = vmatprep.subr.bf16.mxu0 0
        %1867 = vmatpush1.bf16.msra.mxu0 0
        %1868 = vmatprep.mubr.bf16.mxu0 0
        %1869 = vmatmul.mubr.bf16.gmra.mrb[0].mxu0 %v1831
        %v1870 = vpop.f32.mrb[0].mxu0
        %v1871 = vadd.f32 0.0, %v1870
        %v1872 = vpop.f32.mrb[0].mxu0
        %v1873 = vpop.f32.mrb[0].mxu0
        %v1874 = vpop.f32.mrb[0].mxu0
        %1875 = vdwg.mxu0
        %v1876 = vadd.f32 %v1659, %v1871
        %1877 = vrot.lane.b32.xlu0 %v1237, 104
        %v1878 = vpop.permute.xlu0 %1877
        %1879 = vrot.lane.b32.xlu0 %v1228, 72
        %v1880 = vpop.permute.xlu0 %1879
        %v1881 = vsel %vm1241, %v1878, 0
        %v1883 = vsel %vm1241, %v1880, 0
        %1885 = vmatprep.subr.mxu0 0.0
        %1886 = vmatpush1.xpose.msra.mxu0 %v1883
        %1887 = vmatprep.subr.mxu0 0.0
        %1888 = vmatpush1.xpose.msra.mxu0 0.0
        %1889 = vmatprep.subr.mxu0 0.0
        %1890 = vmatpush1.xpose.msra.mxu0 0.0
        %1891 = vmatprep.subr.mxu0 0.0
        %1892 = vmatpush1.xpose.msra.mxu0 0.0
        %1893 = vmatprep.subr.mxu0 0.0
        %1894 = vmatpush1.xpose.msra.mxu0 0.0
        %1895 = vmatprep.subr.mxu0 0.0
        %1896 = vmatpush1.xpose.msra.mxu0 0.0
        %1897 = vmatprep.subr.mxu0 0.0
        %1898 = vmatpush1.xpose.msra.mxu0 0.0
        %1899 = vmatprep.subr.mxu0 0.0
        %1900 = vmatpush1.xpose.msra.mxu0 0.0
        %1901 = vmatprep.subr.mxu0 0.0
        %1902 = vmatpush1.xpose.msra.mxu0 0.0
        %1903 = vmatprep.subr.mxu0 0.0
        %1904 = vmatpush1.xpose.msra.mxu0 0.0
        %1905 = vmatprep.subr.mxu0 0.0
        %1906 = vmatpush1.xpose.msra.mxu0 0.0
        %1907 = vmatprep.subr.mxu0 0.0
        %1908 = vmatpush1.xpose.msra.mxu0 0.0
        %1909 = vmatprep.subr.mxu0 0.0
        %1910 = vmatpush1.xpose.msra.mxu0 0.0
        %1911 = vmatprep.subr.mxu0 0.0
        %1912 = vmatpush1.xpose.msra.mxu0 0.0
        %1913 = vmatprep.subr.mxu0 0.0
        %1914 = vmatpush1.xpose.msra.mxu0 0.0
        %1915 = vmatprep.subr.mxu0 0.0
        %1916 = vmatpush1.xpose.msra.mxu0 0.0
        %1917 = vmatprep.subr.mxu0 0.0
        %1918 = vmatpush1.xpose.msra.mxu0 0.0
        %1919 = vmatprep.subr.mxu0 0.0
        %1920 = vmatpush1.xpose.msra.mxu0 0.0
        %1921 = vmatprep.subr.mxu0 0.0
        %1922 = vmatpush1.xpose.msra.mxu0 0.0
        %1923 = vmatprep.subr.mxu0 0.0
        %1924 = vmatpush1.xpose.msra.mxu0 0.0
        %1925 = vmatprep.subr.mxu0 0.0
        %1926 = vmatpush1.xpose.msra.mxu0 0.0
        %1927 = vmatprep.subr.mxu0 0.0
        %1928 = vmatpush1.xpose.msra.mxu0 0.0
        %1929 = vmatprep.subr.mxu0 0.0
        %1930 = vmatpush1.xpose.msra.mxu0 0.0
        %1931 = vmatprep.subr.mxu0 0.0
        %1932 = vmatpush1.xpose.msra.mxu0 0.0
        %1933 = vmatprep.subr.mxu0 0.0
        %1934 = vmatpush1.xpose.msra.mxu0 0.0
        %1935 = vmatprep.subr.mxu0 0.0
        %1936 = vmatpush1.xpose.msra.mxu0 0.0
        %1937 = vmatprep.subr.mxu0 0.0
        %1938 = vmatpush1.xpose.msra.mxu0 0.0
        %1939 = vmatprep.subr.mxu0 0.0
        %1940 = vmatpush1.xpose.msra.mxu0 0.0
        %1941 = vmatprep.subr.mxu0 0.0
        %1942 = vmatpush1.xpose.msra.mxu0 0.0
        %1943 = vmatprep.subr.mxu0 0.0
        %1944 = vmatpush1.xpose.msra.mxu0 0.0
        %1945 = vmatprep.subr.mxu0 0.0
        %1946 = vmatpush1.xpose.msra.mxu0 0.0
        %1947 = vmatprep.subr.mxu0 0.0
        %1948 = vmatpush1.xpose.msra.mxu0 0.0
        %1949 = vmatprep.mubr.f32.mxu0 0.0
        %1950 = vmatmul.mubr.f32.gmra.mrb[0].mxu0 %v1881
        %v1951 = vpop.f32.mrb[0].mxu0
        %v1952 = vadd.f32 %v1133, %v1951
        %v1953 = vpop.f32.mrb[0].mxu0
        %1954 = vdwg.mxu0
        %v1955 = vsel %vm1241, %v1952, -inf
        %1956 = vmax.xlane.f32.xlu0 %v1955
        %v1957 = vpop.xlane.xlu0 %1956
        %v1958 = vsub.f32 %v1952, %v1957
        %v1959 = vmul.f32 %v1958, 1.442695
        %v1960 = vpow.pop %v1959
        %v1961 = vsel %vm1241, %v1960, 0.0
        %1962 = vadd.xlane.f32.xlu0 %v1961
        %v1963 = vpop.xlane.xlu0 %1962
        %v1964 = vrcp.pop %v1963
        %v1965 = vmul.f32 %v1960, %v1964
        %1966 = vrot.lane.b32.xlu0 %v1228, 40
        %v1967 = vpop.permute.xlu0 %1966
        %v1970 = vsel %vm1241, %v1965, 0
        %1972 = vmatprep.subr.mxu0 0.0
        %1973 = vmatpush1.msra.mxu0 %v1967
        %1974 = vmatprep.subr.mxu0 0.0
        %1975 = vmatpush1.msra.mxu0 0.0
        %1976 = vmatprep.subr.mxu0 0.0
        %1977 = vmatpush1.msra.mxu0 0.0
        %1978 = vmatprep.subr.mxu0 0.0
        %1979 = vmatpush1.msra.mxu0 0.0
        %1980 = vmatprep.subr.mxu0 0.0
        %1981 = vmatpush1.msra.mxu0 0.0
        %1982 = vmatprep.subr.mxu0 0.0
        %1983 = vmatpush1.msra.mxu0 0.0
        %1984 = vmatprep.subr.mxu0 0.0
        %1985 = vmatpush1.msra.mxu0 0.0
        %1986 = vmatprep.subr.mxu0 0.0
        %1987 = vmatpush1.msra.mxu0 0.0
        %1988 = vmatprep.subr.mxu0 0.0
        %1989 = vmatpush1.msra.mxu0 0.0
        %1990 = vmatprep.subr.mxu0 0.0
        %1991 = vmatpush1.msra.mxu0 0.0
        %1992 = vmatprep.subr.mxu0 0.0
        %1993 = vmatpush1.msra.mxu0 0.0
        %1994 = vmatprep.subr.mxu0 0.0
        %1995 = vmatpush1.msra.mxu0 0.0
        %1996 = vmatprep.subr.mxu0 0.0
        %1997 = vmatpush1.msra.mxu0 0.0
        %1998 = vmatprep.subr.mxu0 0.0
        %1999 = vmatpush1.msra.mxu0 0.0
        %2000 = vmatprep.subr.mxu0 0.0
        %2001 = vmatpush1.msra.mxu0 0.0
        %2002 = vmatprep.subr.mxu0 0.0
        %2003 = vmatpush1.msra.mxu0 0.0
        %2004 = vmatprep.subr.mxu0 0.0
        %2005 = vmatpush1.msra.mxu0 0.0
        %2006 = vmatprep.subr.mxu0 0.0
        %2007 = vmatpush1.msra.mxu0 0.0
        %2008 = vmatprep.subr.mxu0 0.0
        %2009 = vmatpush1.msra.mxu0 0.0
        %2010 = vmatprep.subr.mxu0 0.0
        %2011 = vmatpush1.msra.mxu0 0.0
        %2012 = vmatprep.subr.mxu0 0.0
        %2013 = vmatpush1.msra.mxu0 0.0
        %2014 = vmatprep.subr.mxu0 0.0
        %2015 = vmatpush1.msra.mxu0 0.0
        %2016 = vmatprep.subr.mxu0 0.0
        %2017 = vmatpush1.msra.mxu0 0.0
        %2018 = vmatprep.subr.mxu0 0.0
        %2019 = vmatpush1.msra.mxu0 0.0
        %2020 = vmatprep.subr.mxu0 0.0
        %2021 = vmatpush1.msra.mxu0 0.0
        %2022 = vmatprep.subr.mxu0 0.0
        %2023 = vmatpush1.msra.mxu0 0.0
        %2024 = vmatprep.subr.mxu0 0.0
        %2025 = vmatpush1.msra.mxu0 0.0
        %2026 = vmatprep.subr.mxu0 0.0
        %2027 = vmatpush1.msra.mxu0 0.0
        %2028 = vmatprep.subr.mxu0 0.0
        %2029 = vmatpush1.msra.mxu0 0.0
        %2030 = vmatprep.subr.mxu0 0.0
        %2031 = vmatpush1.msra.mxu0 0.0
        %2032 = vmatprep.subr.mxu0 0.0
        %2033 = vmatpush1.msra.mxu0 0.0
        %2034 = vmatprep.subr.mxu0 0.0
        %2035 = vmatpush1.msra.mxu0 0.0
        %2036 = vmatprep.mubr.f32.mxu0 0.0
        %2037 = vmatmul.mubr.f32.gmra.mrb[0].mxu0 %v1970
        %v2038 = vpop.f32.mrb[0].mxu0
        %v2039 = vadd.f32 0.0, %v2038
        %v2040 = vpop.f32.mrb[0].mxu0
        %2041 = vdwg.mxu0
        %v2042 = vpack.c.bf16 %v2039, %v2039
        %v2044 = vsel %vm1241, %v2042, 0
        %v2047 = vsel %vm1574, %v1236, 0
        %2049 = vmatprep.subr.bf16.mxu0 0
        %2050 = vmatpush1.bf16.msra.mxu0 %v2047
        %2051 = vmatprep.subr.bf16.mxu0 0
        %2052 = vmatpush1.bf16.msra.mxu0 0
        %2053 = vmatprep.subr.bf16.mxu0 0
        %2054 = vmatpush1.bf16.msra.mxu0 0
        %2055 = vmatprep.subr.bf16.mxu0 0
        %2056 = vmatpush1.bf16.msra.mxu0 0
        %2057 = vmatprep.subr.bf16.mxu0 0
        %2058 = vmatpush1.bf16.msra.mxu0 0
        %2059 = vmatprep.subr.bf16.mxu0 0
        %2060 = vmatpush1.bf16.msra.mxu0 0
        %2061 = vmatprep.subr.bf16.mxu0 0
        %2062 = vmatpush1.bf16.msra.mxu0 0
        %2063 = vmatprep.subr.bf16.mxu0 0
        %2064 = vmatpush1.bf16.msra.mxu0 0
        %2065 = vmatprep.subr.bf16.mxu0 0
        %2066 = vmatpush1.bf16.msra.mxu0 0
        %2067 = vmatprep.subr.bf16.mxu0 0
        %2068 = vmatpush1.bf16.msra.mxu0 0
        %2069 = vmatprep.subr.bf16.mxu0 0
        %2070 = vmatpush1.bf16.msra.mxu0 0
        %2071 = vmatprep.subr.bf16.mxu0 0
        %2072 = vmatpush1.bf16.msra.mxu0 0
        %2073 = vmatprep.subr.bf16.mxu0 0
        %2074 = vmatpush1.bf16.msra.mxu0 0
        %2075 = vmatprep.subr.bf16.mxu0 0
        %2076 = vmatpush1.bf16.msra.mxu0 0
        %2077 = vmatprep.subr.bf16.mxu0 0
        %2078 = vmatpush1.bf16.msra.mxu0 0
        %2079 = vmatprep.subr.bf16.mxu0 0
        %2080 = vmatpush1.bf16.msra.mxu0 0
        %2081 = vmatprep.mubr.bf16.mxu0 0
        %2082 = vmatmul.mubr.bf16.gmra.mrb[0].mxu0 %v2044
        %v2083 = vpop.f32.mrb[0].mxu0
        %v2084 = vadd.f32 0.0, %v2083
        %v2085 = vpop.f32.mrb[0].mxu0
        %v2086 = vpop.f32.mrb[0].mxu0
        %v2087 = vpop.f32.mrb[0].mxu0
        %2088 = vdwg.mxu0
        %v2089 = vadd.f32 %v1876, %v2084
        %v2090 = vld [vmem:[#allocation23] sm:$0x1]
        %v2092 = vlaneseq
        %v2093 = vshrl.u32 %v2092, 7
        %v2094 = vsub.s32 0, %v2093
        %v2095 = vrot.slane %v2090, %v2094
        %v2097 = vadd.f32 %v2089, %v2095
        %v2098 = vadd.f32 %v2097, %v1130
        %v2099 = vsel %vm1135, %v2098, 0.0
        %2100 = vadd.xlane.f32.xlu0 %v2099
        %v2101 = vpop.xlane.xlu0 %2100
        %v2102 = vmul.f32 %v2101, %v1139
        %v2103 = vsub.f32 %v2098, %v2102
        %v2104 = vmul.f32 %v2103, %v2103
        %v2105 = vsel %vm1135, %v2104, 0.0
        %2106 = vadd.xlane.f32.xlu0 %v2105
        %v2107 = vpop.xlane.xlu0 %2106
        %v2108 = vmul.f32 %v2107, %v1139
        %v2109 = vadd.f32 %v2108, 1e-06
        %v2110 = vrsqrt.pop %v2109
        %v2111 = vmul.f32 %v2103, %v2110
        %v2112 = vld [vmem:[#allocation13] sm:$0x1]
        %v2114 = vlaneseq
        %v2115 = vshrl.u32 %v2114, 7
        %v2116 = vsub.s32 0, %v2115
        %v2117 = vrot.slane %v2112, %v2116
        %v2119 = vmul.f32 %v2111, %v2117
        %v2120 = vld [vmem:[#allocation14] sm:$0x1]
        %v2122 = vlaneseq
        %v2123 = vshrl.u32 %v2122, 7
        %v2124 = vsub.s32 0, %v2123
        %v2125 = vrot.slane %v2120, %v2124
        %v2127 = vadd.f32 %v2119, %v2125
        %v2128 = vld [vmem:[#allocation25] sm:$0xf]
        %v2129 = vld [vmem:[#allocation25 + $0x4] sm:$0xf]
        %v2130 = vld [vmem:[#allocation25 + $0x8] sm:$0xf]
        %v2131 = vld [vmem:[#allocation25 + $0xc] sm:$0xf]
        %v2132 = vpack.c.bf16 %v2127, %v2127
        %v2133 = vld [vmem:[#allocation26] sm:$0x1]
        %v2135 = vlaneseq
        %v2136 = vshrl.u32 %v2135, 7
        %v2137 = vsub.s32 0, %v2136
        %v2138 = vrot.slane %v2133, %v2137
        %v2144 = vunpack.c.l.b16 %v2128
        %v2145 = vunpack.c.l.b16 %v2129
        %v2146 = vunpack.c.l.b16 %v2130
        %v2147 = vunpack.c.l.b16 %v2131
        %v2148 = vpack.c.b16 %v2145, %v2144
        %v2149 = vpack.c.b16 %v2147, %v2146
        %v2153 = vsel %vm1135, %v2132, 0
        %2155 = vmatprep.subr.bf16.mxu0 0
        %2156 = vmatpush1.bf16.msra.mxu0 %v2148
        %2157 = vmatprep.subr.bf16.mxu0 0
        %2158 = vmatpush1.bf16.msra.mxu0 %v2149
        %2159 = vmatprep.subr.bf16.mxu0 0
        %2160 = vmatpush1.bf16.msra.mxu0 0
        %2161 = vmatprep.subr.bf16.mxu0 0
        %2162 = vmatpush1.bf16.msra.mxu0 0
        %2163 = vmatprep.subr.bf16.mxu0 0
        %2164 = vmatpush1.bf16.msra.mxu0 0
        %2165 = vmatprep.subr.bf16.mxu0 0
        %2166 = vmatpush1.bf16.msra.mxu0 0
        %2167 = vmatprep.subr.bf16.mxu0 0
        %2168 = vmatpush1.bf16.msra.mxu0 0
        %2169 = vmatprep.subr.bf16.mxu0 0
        %2170 = vmatpush1.bf16.msra.mxu0 0
        %2171 = vmatprep.subr.bf16.mxu0 0
        %2172 = vmatpush1.bf16.msra.mxu0 0
        %2173 = vmatprep.subr.bf16.mxu0 0
        %2174 = vmatpush1.bf16.msra.mxu0 0
        %2175 = vmatprep.subr.bf16.mxu0 0
        %2176 = vmatpush1.bf16.msra.mxu0 0
        %2177 = vmatprep.subr.bf16.mxu0 0
        %2178 = vmatpush1.bf16.msra.mxu0 0
        %2179 = vmatprep.subr.bf16.mxu0 0
        %2180 = vmatpush1.bf16.msra.mxu0 0
        %2181 = vmatprep.subr.bf16.mxu0 0
        %2182 = vmatpush1.bf16.msra.mxu0 0
        %2183 = vmatprep.subr.bf16.mxu0 0
        %2184 = vmatpush1.bf16.msra.mxu0 0
        %2185 = vmatprep.subr.bf16.mxu0 0
        %2186 = vmatpush1.bf16.msra.mxu0 0
        %2187 = vmatprep.mubr.bf16.mxu0 0
        %2188 = vmatmul.mubr.bf16.gmra.mrb[0].mxu0 %v2153
        %v2189 = vpop.f32.mrb[0].mxu0
        %v2190 = vadd.f32 %v2138, %v2189
        %v2191 = vpop.f32.mrb[0].mxu0
        %v2192 = vpop.f32.mrb[0].mxu0
        %v2193 = vpop.f32.mrb[0].mxu0
        %2194 = vdwg.mxu0
        %v2195 = vld [vmem:[#allocation28] sm:$0xf]
        %v2196 = vld [vmem:[#allocation28 + $0x4] sm:$0xf]
        %v2197 = vld [vmem:[#allocation28 + $0x8] sm:$0xf]
        %v2198 = vld [vmem:[#allocation28 + $0xc] sm:$0xf]
        %v2199 = vld [vmem:[#allocation29] sm:$0x1]
        %v2201 = vlaneseq
        %v2202 = vshrl.u32 %v2201, 7
        %v2203 = vsub.s32 0, %v2202
        %v2204 = vrot.slane %v2199, %v2203
        %v2208 = vunpack.c.l.b16 %v1131
        %v2209 = vunpack.c.l.b16 %v1132
        %v2210 = vpack.c.b16 %v2209, %v2208
        %v2215 = vunpack.c.l.b16 %v2195
        %v2216 = vunpack.c.l.b16 %v2196
        %v2217 = vunpack.c.l.b16 %v2197
        %v2218 = vunpack.c.l.b16 %v2198
        %v2219 = vpack.c.b16 %v2216, %v2215
        %v2220 = vpack.c.b16 %v2218, %v2217
        %v2224 = vsel %vm1135, %v2210, 0
        %2226 = vmatprep.subr.bf16.mxu0 0
        %2227 = vmatpush1.bf16.msra.mxu0 %v2219
        %2228 = vmatprep.subr.bf16.mxu0 0
        %2229 = vmatpush1.bf16.msra.mxu0 %v2220
        %2230 = vmatprep.subr.bf16.mxu0 0
        %2231 = vmatpush1.bf16.msra.mxu0 0
        %2232 = vmatprep.subr.bf16.mxu0 0
        %2233 = vmatpush1.bf16.msra.mxu0 0
        %2234 = vmatprep.subr.bf16.mxu0 0
        %2235 = vmatpush1.bf16.msra.mxu0 0
        %2236 = vmatprep.subr.bf16.mxu0 0
        %2237 = vmatpush1.bf16.msra.mxu0 0
        %2238 = vmatprep.subr.bf16.mxu0 0
        %2239 = vmatpush1.bf16.msra.mxu0 0
        %2240 = vmatprep.subr.bf16.mxu0 0
        %2241 = vmatpush1.bf16.msra.mxu0 0
        %2242 = vmatprep.subr.bf16.mxu0 0
        %2243 = vmatpush1.bf16.msra.mxu0 0
        %2244 = vmatprep.subr.bf16.mxu0 0
        %2245 = vmatpush1.bf16.msra.mxu0 0
        %2246 = vmatprep.subr.bf16.mxu0 0
        %2247 = vmatpush1.bf16.msra.mxu0 0
        %2248 = vmatprep.subr.bf16.mxu0 0
        %2249 = vmatpush1.bf16.msra.mxu0 0
        %2250 = vmatprep.subr.bf16.mxu0 0
        %2251 = vmatpush1.bf16.msra.mxu0 0
        %2252 = vmatprep.subr.bf16.mxu0 0
        %2253 = vmatpush1.bf16.msra.mxu0 0
        %2254 = vmatprep.subr.bf16.mxu0 0
        %2255 = vmatpush1.bf16.msra.mxu0 0
        %2256 = vmatprep.subr.bf16.mxu0 0
        %2257 = vmatpush1.bf16.msra.mxu0 0
        %2258 = vmatprep.mubr.bf16.mxu0 0
        %2259 = vmatmul.mubr.bf16.gmra.mrb[0].mxu0 %v2224
        %v2260 = vpop.f32.mrb[0].mxu0
        %v2261 = vadd.f32 %v2204, %v2260
        %v2262 = vpop.f32.mrb[0].mxu0
        %v2263 = vpop.f32.mrb[0].mxu0
        %v2264 = vadd.f32 %v2204, %v2263
        %v2265 = vpop.f32.mrb[0].mxu0
        %2266 = vdwg.mxu0
        %v2267 = vld [vmem:[#allocation31] sm:$0xf]
        %v2268 = vld [vmem:[#allocation31 + $0x4] sm:$0xf]
        %v2269 = vld [vmem:[#allocation31 + $0x8] sm:$0xf]
        %v2270 = vld [vmem:[#allocation31 + $0xc] sm:$0xf]
        %v2271 = vmul.f32 %v2190, 0.35355338
        %v2273 = vsel %vm1241, %v2271, 0
        %v2276 = vsel %vm1241, %v2261, 0
        %v2279 = vsel %vm1241, %v2264, 0
        %2281 = vmatprep.subr.mxu0 0.0
        %2282 = vmatpush1.xpose.msra.mxu0 %v2276
        %2283 = vmatprep.subr.mxu0 0.0
        %2284 = vmatpush1.xpose.msra.mxu0 %v2279
        %2285 = vmatprep.subr.mxu0 0.0
        %2286 = vmatpush1.xpose.msra.mxu0 0.0
        %2287 = vmatprep.subr.mxu0 0.0
        %2288 = vmatpush1.xpose.msra.mxu0 0.0
        %2289 = vmatprep.subr.mxu0 0.0
        %2290 = vmatpush1.xpose.msra.mxu0 0.0
        %2291 = vmatprep.subr.mxu0 0.0
        %2292 = vmatpush1.xpose.msra.mxu0 0.0
        %2293 = vmatprep.subr.mxu0 0.0
        %2294 = vmatpush1.xpose.msra.mxu0 0.0
        %2295 = vmatprep.subr.mxu0 0.0
        %2296 = vmatpush1.xpose.msra.mxu0 0.0
        %2297 = vmatprep.subr.mxu0 0.0
        %2298 = vmatpush1.xpose.msra.mxu0 0.0
        %2299 = vmatprep.subr.mxu0 0.0
        %2300 = vmatpush1.xpose.msra.mxu0 0.0
        %2301 = vmatprep.subr.mxu0 0.0
        %2302 = vmatpush1.xpose.msra.mxu0 0.0
        %2303 = vmatprep.subr.mxu0 0.0
        %2304 = vmatpush1.xpose.msra.mxu0 0.0
        %2305 = vmatprep.subr.mxu0 0.0
        %2306 = vmatpush1.xpose.msra.mxu0 0.0
        %2307 = vmatprep.subr.mxu0 0.0
        %2308 = vmatpush1.xpose.msra.mxu0 0.0
        %2309 = vmatprep.subr.mxu0 0.0
        %2310 = vmatpush1.xpose.msra.mxu0 0.0
        %2311 = vmatprep.subr.mxu0 0.0
        %2312 = vmatpush1.xpose.msra.mxu0 0.0
        %2313 = vmatprep.subr.mxu0 0.0
        %2314 = vmatpush1.xpose.msra.mxu0 0.0
        %2315 = vmatprep.subr.mxu0 0.0
        %2316 = vmatpush1.xpose.msra.mxu0 0.0
        %2317 = vmatprep.subr.mxu0 0.0
        %2318 = vmatpush1.xpose.msra.mxu0 0.0
        %2319 = vmatprep.subr.mxu0 0.0
        %2320 = vmatpush1.xpose.msra.mxu0 0.0
        %2321 = vmatprep.subr.mxu0 0.0
        %2322 = vmatpush1.xpose.msra.mxu0 0.0
        %2323 = vmatprep.subr.mxu0 0.0
        %2324 = vmatpush1.xpose.msra.mxu0 0.0
        %2325 = vmatprep.subr.mxu0 0.0
        %2326 = vmatpush1.xpose.msra.mxu0 0.0
        %2327 = vmatprep.subr.mxu0 0.0
        %2328 = vmatpush1.xpose.msra.mxu0 0.0
        %2329 = vmatprep.subr.mxu0 0.0
        %2330 = vmatpush1.xpose.msra.mxu0 0.0
        %2331 = vmatprep.subr.mxu0 0.0
        %2332 = vmatpush1.xpose.msra.mxu0 0.0
        %2333 = vmatprep.subr.mxu0 0.0
        %2334 = vmatpush1.xpose.msra.mxu0 0.0
        %2335 = vmatprep.subr.mxu0 0.0
        %2336 = vmatpush1.xpose.msra.mxu0 0.0
        %2337 = vmatprep.subr.mxu0 0.0
        %2338 = vmatpush1.xpose.msra.mxu0 0.0
        %2339 = vmatprep.subr.mxu0 0.0
        %2340 = vmatpush1.xpose.msra.mxu0 0.0
        %2341 = vmatprep.subr.mxu0 0.0
        %2342 = vmatpush1.xpose.msra.mxu0 0.0
        %2343 = vmatprep.subr.mxu0 0.0
        %2344 = vmatpush1.xpose.msra.mxu0 0.0
        %2345 = vmatprep.mubr.f32.mxu0 0.0
        %2346 = vmatmul.mubr.f32.gmra.mrb[0].mxu0 %v2273
        %v2347 = vpop.f32.mrb[0].mxu0
        %v2348 = vadd.f32 %v1134, %v2347
        %v2349 = vpop.f32.mrb[0].mxu0
        %2350 = vdwg.mxu0
        %vm2351 = vcmask 130048
        %v2352 = vsel %vm2351, %v2348, -inf
        %2353 = vmax.xlane.f32.xlu0 %v2352
        %v2354 = vpop.xlane.xlu0 %2353
        %v2355 = vsub.f32 %v2348, %v2354
        %v2356 = vmul.f32 %v2355, 1.442695
        %v2357 = vpow.pop %v2356
        %v2358 = vsel %vm2351, %v2357, 0.0
        %2359 = vadd.xlane.f32.xlu0 %v2358
        %v2360 = vpop.xlane.xlu0 %2359
        %v2361 = vrcp.pop %v2360
        %v2362 = vmul.f32 %v2357, %v2361
        %2363 = vrot.lane.b32.xlu0 %v2261, 96
        %v2364 = vpop.permute.xlu0 %2363
        %2365 = vrot.lane.b32.xlu0 %v2264, 96
        %v2366 = vpop.permute.xlu0 %2365
        %v2370 = vsel %vm2351, %v2362, 0
        %2372 = vmatprep.subr.mxu0 0.0
        %2373 = vmatpush1.msra.mxu0 %v2364
        %2374 = vmatprep.subr.mxu0 0.0
        %2375 = vmatpush1.msra.mxu0 %v2366
        %2376 = vmatprep.subr.mxu0 0.0
        %2377 = vmatpush1.msra.mxu0 0.0
        %2378 = vmatprep.subr.mxu0 0.0
        %2379 = vmatpush1.msra.mxu0 0.0
        %2380 = vmatprep.subr.mxu0 0.0
        %2381 = vmatpush1.msra.mxu0 0.0
        %2382 = vmatprep.subr.mxu0 0.0
        %2383 = vmatpush1.msra.mxu0 0.0
        %2384 = vmatprep.subr.mxu0 0.0
        %2385 = vmatpush1.msra.mxu0 0.0
        %2386 = vmatprep.subr.mxu0 0.0
        %2387 = vmatpush1.msra.mxu0 0.0
        %2388 = vmatprep.subr.mxu0 0.0
        %2389 = vmatpush1.msra.mxu0 0.0
        %2390 = vmatprep.subr.mxu0 0.0
        %2391 = vmatpush1.msra.mxu0 0.0
        %2392 = vmatprep.subr.mxu0 0.0
        %2393 = vmatpush1.msra.mxu0 0.0
        %2394 = vmatprep.subr.mxu0 0.0
        %2395 = vmatpush1.msra.mxu0 0.0
        %2396 = vmatprep.subr.mxu0 0.0
        %2397 = vmatpush1.msra.mxu0 0.0
        %2398 = vmatprep.subr.mxu0 0.0
        %2399 = vmatpush1.msra.mxu0 0.0
        %2400 = vmatprep.subr.mxu0 0.0
        %2401 = vmatpush1.msra.mxu0 0.0
        %2402 = vmatprep.subr.mxu0 0.0
        %2403 = vmatpush1.msra.mxu0 0.0
        %2404 = vmatprep.subr.mxu0 0.0
        %2405 = vmatpush1.msra.mxu0 0.0
        %2406 = vmatprep.subr.mxu0 0.0
        %2407 = vmatpush1.msra.mxu0 0.0
        %2408 = vmatprep.subr.mxu0 0.0
        %2409 = vmatpush1.msra.mxu0 0.0
        %2410 = vmatprep.subr.mxu0 0.0
        %2411 = vmatpush1.msra.mxu0 0.0
        %2412 = vmatprep.subr.mxu0 0.0
        %2413 = vmatpush1.msra.mxu0 0.0
        %2414 = vmatprep.subr.mxu0 0.0
        %2415 = vmatpush1.msra.mxu0 0.0
        %2416 = vmatprep.subr.mxu0 0.0
        %2417 = vmatpush1.msra.mxu0 0.0
        %2418 = vmatprep.subr.mxu0 0.0
        %2419 = vmatpush1.msra.mxu0 0.0
        %2420 = vmatprep.subr.mxu0 0.0
        %2421 = vmatpush1.msra.mxu0 0.0
        %2422 = vmatprep.subr.mxu0 0.0
        %2423 = vmatpush1.msra.mxu0 0.0
        %2424 = vmatprep.subr.mxu0 0.0
        %2425 = vmatpush1.msra.mxu0 0.0
        %2426 = vmatprep.subr.mxu0 0.0
        %2427 = vmatpush1.msra.mxu0 0.0
        %2428 = vmatprep.subr.mxu0 0.0
        %2429 = vmatpush1.msra.mxu0 0.0
        %2430 = vmatprep.subr.mxu0 0.0
        %2431 = vmatpush1.msra.mxu0 0.0
        %2432 = vmatprep.subr.mxu0 0.0
        %2433 = vmatpush1.msra.mxu0 0.0
        %2434 = vmatprep.subr.mxu0 0.0
        %2435 = vmatpush1.msra.mxu0 0.0
        %2436 = vmatprep.mubr.f32.mxu0 0.0
        %2437 = vmatmul.mubr.f32.gmra.mrb[0].mxu0 %v2370
        %v2438 = vpop.f32.mrb[0].mxu0
        %v2439 = vadd.f32 0.0, %v2438
        %v2440 = vpop.f32.mrb[0].mxu0
        %2441 = vdwg.mxu0
        %v2442 = vpack.c.bf16 %v2439, %v2439
        %2443 = vrot.lane.b32.xlu0 %v2271, 120
        %v2444 = vpop.permute.xlu0 %2443
        %2445 = vrot.lane.b32.xlu0 %v2261, 120
        %v2446 = vpop.permute.xlu0 %2445
        %2447 = vrot.lane.b32.xlu0 %v2264, 120
        %v2448 = vpop.permute.xlu0 %2447
        %v2449 = vsel %vm1241, %v2444, 0
        %v2451 = vsel %vm1241, %v2446, 0
        %v2453 = vsel %vm1241, %v2448, 0
        %2455 = vmatprep.subr.mxu0 0.0
        %2456 = vmatpush1.xpose.msra.mxu0 %v2451
        %2457 = vmatprep.subr.mxu0 0.0
        %2458 = vmatpush1.xpose.msra.mxu0 %v2453
        %2459 = vmatprep.subr.mxu0 0.0
        %2460 = vmatpush1.xpose.msra.mxu0 0.0
        %2461 = vmatprep.subr.mxu0 0.0
        %2462 = vmatpush1.xpose.msra.mxu0 0.0
        %2463 = vmatprep.subr.mxu0 0.0
        %2464 = vmatpush1.xpose.msra.mxu0 0.0
        %2465 = vmatprep.subr.mxu0 0.0
        %2466 = vmatpush1.xpose.msra.mxu0 0.0
        %2467 = vmatprep.subr.mxu0 0.0
        %2468 = vmatpush1.xpose.msra.mxu0 0.0
        %2469 = vmatprep.subr.mxu0 0.0
        %2470 = vmatpush1.xpose.msra.mxu0 0.0
        %2471 = vmatprep.subr.mxu0 0.0
        %2472 = vmatpush1.xpose.msra.mxu0 0.0
        %2473 = vmatprep.subr.mxu0 0.0
        %2474 = vmatpush1.xpose.msra.mxu0 0.0
        %2475 = vmatprep.subr.mxu0 0.0
        %2476 = vmatpush1.xpose.msra.mxu0 0.0
        %2477 = vmatprep.subr.mxu0 0.0
        %2478 = vmatpush1.xpose.msra.mxu0 0.0
        %2479 = vmatprep.subr.mxu0 0.0
        %2480 = vmatpush1.xpose.msra.mxu0 0.0
        %2481 = vmatprep.subr.mxu0 0.0
        %2482 = vmatpush1.xpose.msra.mxu0 0.0
        %2483 = vmatprep.subr.mxu0 0.0
        %2484 = vmatpush1.xpose.msra.mxu0 0.0
        %2485 = vmatprep.subr.mxu0 0.0
        %2486 = vmatpush1.xpose.msra.mxu0 0.0
        %2487 = vmatprep.subr.mxu0 0.0
        %2488 = vmatpush1.xpose.msra.mxu0 0.0
        %2489 = vmatprep.subr.mxu0 0.0
        %2490 = vmatpush1.xpose.msra.mxu0 0.0
        %2491 = vmatprep.subr.mxu0 0.0
        %2492 = vmatpush1.xpose.msra.mxu0 0.0
        %2493 = vmatprep.subr.mxu0 0.0
        %2494 = vmatpush1.xpose.msra.mxu0 0.0
        %2495 = vmatprep.subr.mxu0 0.0
        %2496 = vmatpush1.xpose.msra.mxu0 0.0
        %2497 = vmatprep.subr.mxu0 0.0
        %2498 = vmatpush1.xpose.msra.mxu0 0.0
        %2499 = vmatprep.subr.mxu0 0.0
        %2500 = vmatpush1.xpose.msra.mxu0 0.0
        %2501 = vmatprep.subr.mxu0 0.0
        %2502 = vmatpush1.xpose.msra.mxu0 0.0
        %2503 = vmatprep.subr.mxu0 0.0
        %2504 = vmatpush1.xpose.msra.mxu0 0.0
        %2505 = vmatprep.subr.mxu0 0.0
        %2506 = vmatpush1.xpose.msra.mxu0 0.0
        %2507 = vmatprep.subr.mxu0 0.0
        %2508 = vmatpush1.xpose.msra.mxu0 0.0
        %2509 = vmatprep.subr.mxu0 0.0
        %2510 = vmatpush1.xpose.msra.mxu0 0.0
        %2511 = vmatprep.subr.mxu0 0.0
        %2512 = vmatpush1.xpose.msra.mxu0 0.0
        %2513 = vmatprep.subr.mxu0 0.0
        %2514 = vmatpush1.xpose.msra.mxu0 0.0
        %2515 = vmatprep.subr.mxu0 0.0
        %2516 = vmatpush1.xpose.msra.mxu0 0.0
        %2517 = vmatprep.subr.mxu0 0.0
        %2518 = vmatpush1.xpose.msra.mxu0 0.0
        %2519 = vmatprep.mubr.f32.mxu0 0.0
        %2520 = vmatmul.mubr.f32.gmra.mrb[0].mxu0 %v2449
        %v2521 = vpop.f32.mrb[0].mxu0
        %v2522 = vadd.f32 %v1134, %v2521
        %v2523 = vpop.f32.mrb[0].mxu0
        %2524 = vdwg.mxu0
        %v2525 = vsel %vm2351, %v2522, -inf
        %2526 = vmax.xlane.f32.xlu0 %v2525
        %v2527 = vpop.xlane.xlu0 %2526
        %v2528 = vsub.f32 %v2522, %v2527
        %v2529 = vmul.f32 %v2528, 1.442695
        %v2530 = vpow.pop %v2529
        %v2531 = vsel %vm2351, %v2530, 0.0
        %2532 = vadd.xlane.f32.xlu0 %v2531
        %v2533 = vpop.xlane.xlu0 %2532
        %v2534 = vrcp.pop %v2533
        %v2535 = vmul.f32 %v2530, %v2534
        %2536 = vrot.lane.b32.xlu0 %v2261, 88
        %v2537 = vpop.permute.xlu0 %2536
        %2538 = vrot.lane.b32.xlu0 %v2264, 88
        %v2539 = vpop.permute.xlu0 %2538
        %v2543 = vsel %vm2351, %v2535, 0
        %2545 = vmatprep.subr.mxu0 0.0
        %2546 = vmatpush1.msra.mxu0 %v2537
        %2547 = vmatprep.subr.mxu0 0.0
        %2548 = vmatpush1.msra.mxu0 %v2539
        %2549 = vmatprep.subr.mxu0 0.0
        %2550 = vmatpush1.msra.mxu0 0.0
        %2551 = vmatprep.subr.mxu0 0.0
        %2552 = vmatpush1.msra.mxu0 0.0
        %2553 = vmatprep.subr.mxu0 0.0
        %2554 = vmatpush1.msra.mxu0 0.0
        %2555 = vmatprep.subr.mxu0 0.0
        %2556 = vmatpush1.msra.mxu0 0.0
        %2557 = vmatprep.subr.mxu0 0.0
        %2558 = vmatpush1.msra.mxu0 0.0
        %2559 = vmatprep.subr.mxu0 0.0
        %2560 = vmatpush1.msra.mxu0 0.0
        %2561 = vmatprep.subr.mxu0 0.0
        %2562 = vmatpush1.msra.mxu0 0.0
        %2563 = vmatprep.subr.mxu0 0.0
        %2564 = vmatpush1.msra.mxu0 0.0
        %2565 = vmatprep.subr.mxu0 0.0
        %2566 = vmatpush1.msra.mxu0 0.0
        %2567 = vmatprep.subr.mxu0 0.0
        %2568 = vmatpush1.msra.mxu0 0.0
        %2569 = vmatprep.subr.mxu0 0.0
        %2570 = vmatpush1.msra.mxu0 0.0
        %2571 = vmatprep.subr.mxu0 0.0
        %2572 = vmatpush1.msra.mxu0 0.0
        %2573 = vmatprep.subr.mxu0 0.0
        %2574 = vmatpush1.msra.mxu0 0.0
        %2575 = vmatprep.subr.mxu0 0.0
        %2576 = vmatpush1.msra.mxu0 0.0
        %2577 = vmatprep.subr.mxu0 0.0
        %2578 = vmatpush1.msra.mxu0 0.0
        %2579 = vmatprep.subr.mxu0 0.0
        %2580 = vmatpush1.msra.mxu0 0.0
        %2581 = vmatprep.subr.mxu0 0.0
        %2582 = vmatpush1.msra.mxu0 0.0
        %2583 = vmatprep.subr.mxu0 0.0
        %2584 = vmatpush1.msra.mxu0 0.0
        %2585 = vmatprep.subr.mxu0 0.0
        %2586 = vmatpush1.msra.mxu0 0.0
        %2587 = vmatprep.subr.mxu0 0.0
        %2588 = vmatpush1.msra.mxu0 0.0
        %2589 = vmatprep.subr.mxu0 0.0
        %2590 = vmatpush1.msra.mxu0 0.0
        %2591 = vmatprep.subr.mxu0 0.0
        %2592 = vmatpush1.msra.mxu0 0.0
        %2593 = vmatprep.subr.mxu0 0.0
        %2594 = vmatpush1.msra.mxu0 0.0
        %2595 = vmatprep.subr.mxu0 0.0
        %2596 = vmatpush1.msra.mxu0 0.0
        %2597 = vmatprep.subr.mxu0 0.0
        %2598 = vmatpush1.msra.mxu0 0.0
        %2599 = vmatprep.subr.mxu0 0.0
        %2600 = vmatpush1.msra.mxu0 0.0
        %2601 = vmatprep.subr.mxu0 0.0
        %2602 = vmatpush1.msra.mxu0 0.0
        %2603 = vmatprep.subr.mxu0 0.0
        %2604 = vmatpush1.msra.mxu0 0.0
        %2605 = vmatprep.subr.mxu0 0.0
        %2606 = vmatpush1.msra.mxu0 0.0
        %2607 = vmatprep.subr.mxu0 0.0
        %2608 = vmatpush1.msra.mxu0 0.0
        %2609 = vmatprep.mubr.f32.mxu0 0.0
        %2610 = vmatmul.mubr.f32.gmra.mrb[0].mxu0 %v2543
        %v2611 = vpop.f32.mrb[0].mxu0
        %v2612 = vadd.f32 0.0, %v2611
        %v2613 = vpop.f32.mrb[0].mxu0
        %2614 = vdwg.mxu0
        %v2615 = vpack.c.bf16 %v2612, %v2612
        %v2617 = vsel %vm1241, %v2615, 0
        %v2620 = vsel %vm1574, %v2268, 0
        %2622 = vmatprep.subr.bf16.mxu0 0
        %2623 = vmatpush1.bf16.msra.mxu0 %v2620
        %2624 = vmatprep.subr.bf16.mxu0 0
        %2625 = vmatpush1.bf16.msra.mxu0 0
        %2626 = vmatprep.subr.bf16.mxu0 0
        %2627 = vmatpush1.bf16.msra.mxu0 0
        %2628 = vmatprep.subr.bf16.mxu0 0
        %2629 = vmatpush1.bf16.msra.mxu0 0
        %2630 = vmatprep.subr.bf16.mxu0 0
        %2631 = vmatpush1.bf16.msra.mxu0 0
        %2632 = vmatprep.subr.bf16.mxu0 0
        %2633 = vmatpush1.bf16.msra.mxu0 0
        %2634 = vmatprep.subr.bf16.mxu0 0
        %2635 = vmatpush1.bf16.msra.mxu0 0
        %2636 = vmatprep.subr.bf16.mxu0 0
        %2637 = vmatpush1.bf16.msra.mxu0 0
        %2638 = vmatprep.subr.bf16.mxu0 0
        %2639 = vmatpush1.bf16.msra.mxu0 0
        %2640 = vmatprep.subr.bf16.mxu0 0
        %2641 = vmatpush1.bf16.msra.mxu0 0
        %2642 = vmatprep.subr.bf16.mxu0 0
        %2643 = vmatpush1.bf16.msra.mxu0 0
        %2644 = vmatprep.subr.bf16.mxu0 0
        %2645 = vmatpush1.bf16.msra.mxu0 0
        %2646 = vmatprep.subr.bf16.mxu0 0
        %2647 = vmatpush1.bf16.msra.mxu0 0
        %2648 = vmatprep.subr.bf16.mxu0 0
        %2649 = vmatpush1.bf16.msra.mxu0 0
        %2650 = vmatprep.subr.bf16.mxu0 0
        %2651 = vmatpush1.bf16.msra.mxu0 0
        %2652 = vmatprep.subr.bf16.mxu0 0
        %2653 = vmatpush1.bf16.msra.mxu0 0
        %2654 = vmatprep.mubr.bf16.mxu0 0
        %2655 = vmatmul.mubr.bf16.gmra.mrb[0].mxu0 %v2617
        %v2656 = vpop.f32.mrb[0].mxu0
        %v2657 = vadd.f32 0.0, %v2656
        %v2658 = vpop.f32.mrb[0].mxu0
        %v2659 = vpop.f32.mrb[0].mxu0
        %v2660 = vpop.f32.mrb[0].mxu0
        %2661 = vdwg.mxu0
        %v2663 = vsel %vm1241, %v2442, 0
        %v2666 = vsel %vm1574, %v2267, 0
        %2668 = vmatprep.subr.bf16.mxu0 0
        %2669 = vmatpush1.bf16.msra.mxu0 %v2666
        %2670 = vmatprep.subr.bf16.mxu0 0
        %2671 = vmatpush1.bf16.msra.mxu0 0
        %2672 = vmatprep.subr.bf16.mxu0 0
        %2673 = vmatpush1.bf16.msra.mxu0 0
        %2674 = vmatprep.subr.bf16.mxu0 0
        %2675 = vmatpush1.bf16.msra.mxu0 0
        %2676 = vmatprep.subr.bf16.mxu0 0
        %2677 = vmatpush1.bf16.msra.mxu0 0
        %2678 = vmatprep.subr.bf16.mxu0 0
        %2679 = vmatpush1.bf16.msra.mxu0 0
        %2680 = vmatprep.subr.bf16.mxu0 0
        %2681 = vmatpush1.bf16.msra.mxu0 0
        %2682 = vmatprep.subr.bf16.mxu0 0
        %2683 = vmatpush1.bf16.msra.mxu0 0
        %2684 = vmatprep.subr.bf16.mxu0 0
        %2685 = vmatpush1.bf16.msra.mxu0 0
        %2686 = vmatprep.subr.bf16.mxu0 0
        %2687 = vmatpush1.bf16.msra.mxu0 0
        %2688 = vmatprep.subr.bf16.mxu0 0
        %2689 = vmatpush1.bf16.msra.mxu0 0
        %2690 = vmatprep.subr.bf16.mxu0 0
        %2691 = vmatpush1.bf16.msra.mxu0 0
        %2692 = vmatprep.subr.bf16.mxu0 0
        %2693 = vmatpush1.bf16.msra.mxu0 0
        %2694 = vmatprep.subr.bf16.mxu0 0
        %2695 = vmatpush1.bf16.msra.mxu0 0
        %2696 = vmatprep.subr.bf16.mxu0 0
        %2697 = vmatpush1.bf16.msra.mxu0 0
        %2698 = vmatprep.subr.bf16.mxu0 0
        %2699 = vmatpush1.bf16.msra.mxu0 0
        %2700 = vmatprep.mubr.bf16.mxu0 0
        %2701 = vmatmul.mubr.bf16.gmra.mrb[0].mxu0 %v2663
        %v2702 = vpop.f32.mrb[0].mxu0
        %v2703 = vadd.f32 %v2657, %v2702
        %v2704 = vpop.f32.mrb[0].mxu0
        %v2705 = vpop.f32.mrb[0].mxu0
        %v2706 = vpop.f32.mrb[0].mxu0
        %2707 = vdwg.mxu0
        %2708 = vrot.lane.b32.xlu0 %v2271, 112
        %v2709 = vpop.permute.xlu0 %2708
        %2710 = vrot.lane.b32.xlu0 %v2261, 112
        %v2711 = vpop.permute.xlu0 %2710
        %2712 = vrot.lane.b32.xlu0 %v2264, 112
        %v2713 = vpop.permute.xlu0 %2712
        %v2714 = vsel %vm1241, %v2709, 0
        %v2716 = vsel %vm1241, %v2711, 0
        %v2718 = vsel %vm1241, %v2713, 0
        %2720 = vmatprep.subr.mxu0 0.0
        %2721 = vmatpush1.xpose.msra.mxu0 %v2716
        %2722 = vmatprep.subr.mxu0 0.0
        %2723 = vmatpush1.xpose.msra.mxu0 %v2718
        %2724 = vmatprep.subr.mxu0 0.0
        %2725 = vmatpush1.xpose.msra.mxu0 0.0
        %2726 = vmatprep.subr.mxu0 0.0
        %2727 = vmatpush1.xpose.msra.mxu0 0.0
        %2728 = vmatprep.subr.mxu0 0.0
        %2729 = vmatpush1.xpose.msra.mxu0 0.0
        %2730 = vmatprep.subr.mxu0 0.0
        %2731 = vmatpush1.xpose.msra.mxu0 0.0
        %2732 = vmatprep.subr.mxu0 0.0
        %2733 = vmatpush1.xpose.msra.mxu0 0.0
        %2734 = vmatprep.subr.mxu0 0.0
        %2735 = vmatpush1.xpose.msra.mxu0 0.0
        %2736 = vmatprep.subr.mxu0 0.0
        %2737 = vmatpush1.xpose.msra.mxu0 0.0
        %2738 = vmatprep.subr.mxu0 0.0
        %2739 = vmatpush1.xpose.msra.mxu0 0.0
        %2740 = vmatprep.subr.mxu0 0.0
        %2741 = vmatpush1.xpose.msra.mxu0 0.0
        %2742 = vmatprep.subr.mxu0 0.0
        %2743 = vmatpush1.xpose.msra.mxu0 0.0
        %2744 = vmatprep.subr.mxu0 0.0
        %2745 = vmatpush1.xpose.msra.mxu0 0.0
        %2746 = vmatprep.subr.mxu0 0.0
        %2747 = vmatpush1.xpose.msra.mxu0 0.0
        %2748 = vmatprep.subr.mxu0 0.0
        %2749 = vmatpush1.xpose.msra.mxu0 0.0
        %2750 = vmatprep.subr.mxu0 0.0
        %2751 = vmatpush1.xpose.msra.mxu0 0.0
        %2752 = vmatprep.subr.mxu0 0.0
        %2753 = vmatpush1.xpose.msra.mxu0 0.0
        %2754 = vmatprep.subr.mxu0 0.0
        %2755 = vmatpush1.xpose.msra.mxu0 0.0
        %2756 = vmatprep.subr.mxu0 0.0
        %2757 = vmatpush1.xpose.msra.mxu0 0.0
        %2758 = vmatprep.subr.mxu0 0.0
        %2759 = vmatpush1.xpose.msra.mxu0 0.0
        %2760 = vmatprep.subr.mxu0 0.0
        %2761 = vmatpush1.xpose.msra.mxu0 0.0
        %2762 = vmatprep.subr.mxu0 0.0
        %2763 = vmatpush1.xpose.msra.mxu0 0.0
        %2764 = vmatprep.subr.mxu0 0.0
        %2765 = vmatpush1.xpose.msra.mxu0 0.0
        %2766 = vmatprep.subr.mxu0 0.0
        %2767 = vmatpush1.xpose.msra.mxu0 0.0
        %2768 = vmatprep.subr.mxu0 0.0
        %2769 = vmatpush1.xpose.msra.mxu0 0.0
        %2770 = vmatprep.subr.mxu0 0.0
        %2771 = vmatpush1.xpose.msra.mxu0 0.0
        %2772 = vmatprep.subr.mxu0 0.0
        %2773 = vmatpush1.xpose.msra.mxu0 0.0
        %2774 = vmatprep.subr.mxu0 0.0
        %2775 = vmatpush1.xpose.msra.mxu0 0.0
        %2776 = vmatprep.subr.mxu0 0.0
        %2777 = vmatpush1.xpose.msra.mxu0 0.0
        %2778 = vmatprep.subr.mxu0 0.0
        %2779 = vmatpush1.xpose.msra.mxu0 0.0
        %2780 = vmatprep.subr.mxu0 0.0
        %2781 = vmatpush1.xpose.msra.mxu0 0.0
        %2782 = vmatprep.subr.mxu0 0.0
        %2783 = vmatpush1.xpose.msra.mxu0 0.0
        %2784 = vmatprep.mubr.f32.mxu0 0.0
        %2785 = vmatmul.mubr.f32.gmra.mrb[0].mxu0 %v2714
        %v2786 = vpop.f32.mrb[0].mxu0
        %v2787 = vadd.f32 %v1134, %v2786
        %v2788 = vpop.f32.mrb[0].mxu0
        %2789 = vdwg.mxu0
        %v2790 = vsel %vm2351, %v2787, -inf
        %2791 = vmax.xlane.f32.xlu0 %v2790
        %v2792 = vpop.xlane.xlu0 %2791
        %v2793 = vsub.f32 %v2787, %v2792
        %v2794 = vmul.f32 %v2793, 1.442695
        %v2795 = vpow.pop %v2794
        %v2796 = vsel %vm2351, %v2795, 0.0
        %2797 = vadd.xlane.f32.xlu0 %v2796
        %v2798 = vpop.xlane.xlu0 %2797
        %v2799 = vrcp.pop %v2798
        %v2800 = vmul.f32 %v2795, %v2799
        %2801 = vrot.lane.b32.xlu0 %v2261, 80
        %v2802 = vpop.permute.xlu0 %2801
        %2803 = vrot.lane.b32.xlu0 %v2264, 80
        %v2804 = vpop.permute.xlu0 %2803
        %v2808 = vsel %vm2351, %v2800, 0
        %2810 = vmatprep.subr.mxu0 0.0
        %2811 = vmatpush1.msra.mxu0 %v2802
        %2812 = vmatprep.subr.mxu0 0.0
        %2813 = vmatpush1.msra.mxu0 %v2804
        %2814 = vmatprep.subr.mxu0 0.0
        %2815 = vmatpush1.msra.mxu0 0.0
        %2816 = vmatprep.subr.mxu0 0.0
        %2817 = vmatpush1.msra.mxu0 0.0
        %2818 = vmatprep.subr.mxu0 0.0
        %2819 = vmatpush1.msra.mxu0 0.0
        %2820 = vmatprep.subr.mxu0 0.0
        %2821 = vmatpush1.msra.mxu0 0.0
        %2822 = vmatprep.subr.mxu0 0.0
        %2823 = vmatpush1.msra.mxu0 0.0
        %2824 = vmatprep.subr.mxu0 0.0
        %2825 = vmatpush1.msra.mxu0 0.0
        %2826 = vmatprep.subr.mxu0 0.0
        %2827 = vmatpush1.msra.mxu0 0.0
        %2828 = vmatprep.subr.mxu0 0.0
        %2829 = vmatpush1.msra.mxu0 0.0
        %2830 = vmatprep.subr.mxu0 0.0
        %2831 = vmatpush1.msra.mxu0 0.0
        %2832 = vmatprep.subr.mxu0 0.0
        %2833 = vmatpush1.msra.mxu0 0.0
        %2834 = vmatprep.subr.mxu0 0.0
        %2835 = vmatpush1.msra.mxu0 0.0
        %2836 = vmatprep.subr.mxu0 0.0
        %2837 = vmatpush1.msra.mxu0 0.0
        %2838 = vmatprep.subr.mxu0 0.0
        %2839 = vmatpush1.msra.mxu0 0.0
        %2840 = vmatprep.subr.mxu0 0.0
        %2841 = vmatpush1.msra.mxu0 0.0
        %2842 = vmatprep.subr.mxu0 0.0
        %2843 = vmatpush1.msra.mxu0 0.0
        %2844 = vmatprep.subr.mxu0 0.0
        %2845 = vmatpush1.msra.mxu0 0.0
        %2846 = vmatprep.subr.mxu0 0.0
        %2847 = vmatpush1.msra.mxu0 0.0
        %2848 = vmatprep.subr.mxu0 0.0
        %2849 = vmatpush1.msra.mxu0 0.0
        %2850 = vmatprep.subr.mxu0 0.0
        %2851 = vmatpush1.msra.mxu0 0.0
        %2852 = vmatprep.subr.mxu0 0.0
        %2853 = vmatpush1.msra.mxu0 0.0
        %2854 = vmatprep.subr.mxu0 0.0
        %2855 = vmatpush1.msra.mxu0 0.0
        %2856 = vmatprep.subr.mxu0 0.0
        %2857 = vmatpush1.msra.mxu0 0.0
        %2858 = vmatprep.subr.mxu0 0.0
        %2859 = vmatpush1.msra.mxu0 0.0
        %2860 = vmatprep.subr.mxu0 0.0
        %2861 = vmatpush1.msra.mxu0 0.0
        %2862 = vmatprep.subr.mxu0 0.0
        %2863 = vmatpush1.msra.mxu0 0.0
        %2864 = vmatprep.subr.mxu0 0.0
        %2865 = vmatpush1.msra.mxu0 0.0
        %2866 = vmatprep.subr.mxu0 0.0
        %2867 = vmatpush1.msra.mxu0 0.0
        %2868 = vmatprep.subr.mxu0 0.0
        %2869 = vmatpush1.msra.mxu0 0.0
        %2870 = vmatprep.subr.mxu0 0.0
        %2871 = vmatpush1.msra.mxu0 0.0
        %2872 = vmatprep.subr.mxu0 0.0
        %2873 = vmatpush1.msra.mxu0 0.0
        %2874 = vmatprep.mubr.f32.mxu0 0.0
        %2875 = vmatmul.mubr.f32.gmra.mrb[0].mxu0 %v2808
        %v2876 = vpop.f32.mrb[0].mxu0
        %v2877 = vadd.f32 0.0, %v2876
        %v2878 = vpop.f32.mrb[0].mxu0
        %2879 = vdwg.mxu0
        %v2880 = vpack.c.bf16 %v2877, %v2877
        %v2882 = vsel %vm1241, %v2880, 0
        %v2885 = vsel %vm1574, %v2269, 0
        %2887 = vmatprep.subr.bf16.mxu0 0
        %2888 = vmatpush1.bf16.msra.mxu0 %v2885
        %2889 = vmatprep.subr.bf16.mxu0 0
        %2890 = vmatpush1.bf16.msra.mxu0 0
        %2891 = vmatprep.subr.bf16.mxu0 0
        %2892 = vmatpush1.bf16.msra.mxu0 0
        %2893 = vmatprep.subr.bf16.mxu0 0
        %2894 = vmatpush1.bf16.msra.mxu0 0
        %2895 = vmatprep.subr.bf16.mxu0 0
        %2896 = vmatpush1.bf16.msra.mxu0 0
        %2897 = vmatprep.subr.bf16.mxu0 0
        %2898 = vmatpush1.bf16.msra.mxu0 0
        %2899 = vmatprep.subr.bf16.mxu0 0
        %2900 = vmatpush1.bf16.msra.mxu0 0
        %2901 = vmatprep.subr.bf16.mxu0 0
        %2902 = vmatpush1.bf16.msra.mxu0 0
        %2903 = vmatprep.subr.bf16.mxu0 0
        %2904 = vmatpush1.bf16.msra.mxu0 0
        %2905 = vmatprep.subr.bf16.mxu0 0
        %2906 = vmatpush1.bf16.msra.mxu0 0
        %2907 = vmatprep.subr.bf16.mxu0 0
        %2908 = vmatpush1.bf16.msra.mxu0 0
        %2909 = vmatprep.subr.bf16.mxu0 0
        %2910 = vmatpush1.bf16.msra.mxu0 0
        %2911 = vmatprep.subr.bf16.mxu0 0
        %2912 = vmatpush1.bf16.msra.mxu0 0
        %2913 = vmatprep.subr.bf16.mxu0 0
        %2914 = vmatpush1.bf16.msra.mxu0 0
        %2915 = vmatprep.subr.bf16.mxu0 0
        %2916 = vmatpush1.bf16.msra.mxu0 0
        %2917 = vmatprep.subr.bf16.mxu0 0
        %2918 = vmatpush1.bf16.msra.mxu0 0
        %2919 = vmatprep.mubr.bf16.mxu0 0
        %2920 = vmatmul.mubr.bf16.gmra.mrb[0].mxu0 %v2882
        %v2921 = vpop.f32.mrb[0].mxu0
        %v2922 = vadd.f32 0.0, %v2921
        %v2923 = vpop.f32.mrb[0].mxu0
        %v2924 = vpop.f32.mrb[0].mxu0
        %v2925 = vpop.f32.mrb[0].mxu0
        %2926 = vdwg.mxu0
        %v2927 = vadd.f32 %v2703, %v2922
        %2928 = vrot.lane.b32.xlu0 %v2271, 104
        %v2929 = vpop.permute.xlu0 %2928
        %2930 = vrot.lane.b32.xlu0 %v2261, 104
        %v2931 = vpop.permute.xlu0 %2930
        %2932 = vrot.lane.b32.xlu0 %v2264, 104
        %v2933 = vpop.permute.xlu0 %2932
        %v2934 = vsel %vm1241, %v2929, 0
        %v2936 = vsel %vm1241, %v2931, 0
        %v2938 = vsel %vm1241, %v2933, 0
        %2940 = vmatprep.subr.mxu0 0.0
        %2941 = vmatpush1.xpose.msra.mxu0 %v2936
        %2942 = vmatprep.subr.mxu0 0.0
        %2943 = vmatpush1.xpose.msra.mxu0 %v2938
        %2944 = vmatprep.subr.mxu0 0.0
        %2945 = vmatpush1.xpose.msra.mxu0 0.0
        %2946 = vmatprep.subr.mxu0 0.0
        %2947 = vmatpush1.xpose.msra.mxu0 0.0
        %2948 = vmatprep.subr.mxu0 0.0
        %2949 = vmatpush1.xpose.msra.mxu0 0.0
        %2950 = vmatprep.subr.mxu0 0.0
        %2951 = vmatpush1.xpose.msra.mxu0 0.0
        %2952 = vmatprep.subr.mxu0 0.0
        %2953 = vmatpush1.xpose.msra.mxu0 0.0
        %2954 = vmatprep.subr.mxu0 0.0
        %2955 = vmatpush1.xpose.msra.mxu0 0.0
        %2956 = vmatprep.subr.mxu0 0.0
        %2957 = vmatpush1.xpose.msra.mxu0 0.0
        %2958 = vmatprep.subr.mxu0 0.0
        %2959 = vmatpush1.xpose.msra.mxu0 0.0
        %2960 = vmatprep.subr.mxu0 0.0
        %2961 = vmatpush1.xpose.msra.mxu0 0.0
        %2962 = vmatprep.subr.mxu0 0.0
        %2963 = vmatpush1.xpose.msra.mxu0 0.0
        %2964 = vmatprep.subr.mxu0 0.0
        %2965 = vmatpush1.xpose.msra.mxu0 0.0
        %2966 = vmatprep.subr.mxu0 0.0
        %2967 = vmatpush1.xpose.msra.mxu0 0.0
        %2968 = vmatprep.subr.mxu0 0.0
        %2969 = vmatpush1.xpose.msra.mxu0 0.0
        %2970 = vmatprep.subr.mxu0 0.0
        %2971 = vmatpush1.xpose.msra.mxu0 0.0
        %2972 = vmatprep.subr.mxu0 0.0
        %2973 = vmatpush1.xpose.msra.mxu0 0.0
        %2974 = vmatprep.subr.mxu0 0.0
        %2975 = vmatpush1.xpose.msra.mxu0 0.0
        %2976 = vmatprep.subr.mxu0 0.0
        %2977 = vmatpush1.xpose.msra.mxu0 0.0
        %2978 = vmatprep.subr.mxu0 0.0
        %2979 = vmatpush1.xpose.msra.mxu0 0.0
        %2980 = vmatprep.subr.mxu0 0.0
        %2981 = vmatpush1.xpose.msra.mxu0 0.0
        %2982 = vmatprep.subr.mxu0 0.0
        %2983 = vmatpush1.xpose.msra.mxu0 0.0
        %2984 = vmatprep.subr.mxu0 0.0
        %2985 = vmatpush1.xpose.msra.mxu0 0.0
        %2986 = vmatprep.subr.mxu0 0.0
        %2987 = vmatpush1.xpose.msra.mxu0 0.0
        %2988 = vmatprep.subr.mxu0 0.0
        %2989 = vmatpush1.xpose.msra.mxu0 0.0
        %2990 = vmatprep.subr.mxu0 0.0
        %2991 = vmatpush1.xpose.msra.mxu0 0.0
        %2992 = vmatprep.subr.mxu0 0.0
        %2993 = vmatpush1.xpose.msra.mxu0 0.0
        %2994 = vmatprep.subr.mxu0 0.0
        %2995 = vmatpush1.xpose.msra.mxu0 0.0
        %2996 = vmatprep.subr.mxu0 0.0
        %2997 = vmatpush1.xpose.msra.mxu0 0.0
        %2998 = vmatprep.subr.mxu0 0.0
        %2999 = vmatpush1.xpose.msra.mxu0 0.0
        %3000 = vmatprep.subr.mxu0 0.0
        %3001 = vmatpush1.xpose.msra.mxu0 0.0
        %3002 = vmatprep.subr.mxu0 0.0
        %3003 = vmatpush1.xpose.msra.mxu0 0.0
        %3004 = vmatprep.mubr.f32.mxu0 0.0
        %3005 = vmatmul.mubr.f32.gmra.mrb[0].mxu0 %v2934
        %v3006 = vpop.f32.mrb[0].mxu0
        %v3007 = vadd.f32 %v1134, %v3006
        %v3008 = vpop.f32.mrb[0].mxu0
        %3009 = vdwg.mxu0
        %v3010 = vsel %vm2351, %v3007, -inf
        %3011 = vmax.xlane.f32.xlu0 %v3010
        %v3012 = vpop.xlane.xlu0 %3011
        %v3013 = vsub.f32 %v3007, %v3012
        %v3014 = vmul.f32 %v3013, 1.442695
        %v3015 = vpow.pop %v3014
        %v3016 = vsel %vm2351, %v3015, 0.0
        %3017 = vadd.xlane.f32.xlu0 %v3016
        %v3018 = vpop.xlane.xlu0 %3017
        %v3019 = vrcp.pop %v3018
        %v3020 = vmul.f32 %v3015, %v3019
        %3021 = vrot.lane.b32.xlu0 %v2261, 72
        %v3022 = vpop.permute.xlu0 %3021
        %3023 = vrot.lane.b32.xlu0 %v2264, 72
        %v3024 = vpop.permute.xlu0 %3023
        %v3028 = vsel %vm2351, %v3020, 0
        %3030 = vmatprep.subr.mxu0 0.0
        %3031 = vmatpush1.msra.mxu0 %v3022
        %3032 = vmatprep.subr.mxu0 0.0
        %3033 = vmatpush1.msra.mxu0 %v3024
        %3034 = vmatprep.subr.mxu0 0.0
        %3035 = vmatpush1.msra.mxu0 0.0
        %3036 = vmatprep.subr.mxu0 0.0
        %3037 = vmatpush1.msra.mxu0 0.0
        %3038 = vmatprep.subr.mxu0 0.0
        %3039 = vmatpush1.msra.mxu0 0.0
        %3040 = vmatprep.subr.mxu0 0.0
        %3041 = vmatpush1.msra.mxu0 0.0
        %3042 = vmatprep.subr.mxu0 0.0
        %3043 = vmatpush1.msra.mxu0 0.0
        %3044 = vmatprep.subr.mxu0 0.0
        %3045 = vmatpush1.msra.mxu0 0.0
        %3046 = vmatprep.subr.mxu0 0.0
        %3047 = vmatpush1.msra.mxu0 0.0
        %3048 = vmatprep.subr.mxu0 0.0
        %3049 = vmatpush1.msra.mxu0 0.0
        %3050 = vmatprep.subr.mxu0 0.0
        %3051 = vmatpush1.msra.mxu0 0.0
        %3052 = vmatprep.subr.mxu0 0.0
        %3053 = vmatpush1.msra.mxu0 0.0
        %3054 = vmatprep.subr.mxu0 0.0
        %3055 = vmatpush1.msra.mxu0 0.0
        %3056 = vmatprep.subr.mxu0 0.0
        %3057 = vmatpush1.msra.mxu0 0.0
        %3058 = vmatprep.subr.mxu0 0.0
        %3059 = vmatpush1.msra.mxu0 0.0
        %3060 = vmatprep.subr.mxu0 0.0
        %3061 = vmatpush1.msra.mxu0 0.0
        %3062 = vmatprep.subr.mxu0 0.0
        %3063 = vmatpush1.msra.mxu0 0.0
        %3064 = vmatprep.subr.mxu0 0.0
        %3065 = vmatpush1.msra.mxu0 0.0
        %3066 = vmatprep.subr.mxu0 0.0
        %3067 = vmatpush1.msra.mxu0 0.0
        %3068 = vmatprep.subr.mxu0 0.0
        %3069 = vmatpush1.msra.mxu0 0.0
        %3070 = vmatprep.subr.mxu0 0.0
        %3071 = vmatpush1.msra.mxu0 0.0
        %3072 = vmatprep.subr.mxu0 0.0
        %3073 = vmatpush1.msra.mxu0 0.0
        %3074 = vmatprep.subr.mxu0 0.0
        %3075 = vmatpush1.msra.mxu0 0.0
        %3076 = vmatprep.subr.mxu0 0.0
        %3077 = vmatpush1.msra.mxu0 0.0
        %3078 = vmatprep.subr.mxu0 0.0
        %3079 = vmatpush1.msra.mxu0 0.0
        %3080 = vmatprep.subr.mxu0 0.0
        %3081 = vmatpush1.msra.mxu0 0.0
        %3082 = vmatprep.subr.mxu0 0.0
        %3083 = vmatpush1.msra.mxu0 0.0
        %3084 = vmatprep.subr.mxu0 0.0
        %3085 = vmatpush1.msra.mxu0 0.0
        %3086 = vmatprep.subr.mxu0 0.0
        %3087 = vmatpush1.msra.mxu0 0.0
        %3088 = vmatprep.subr.mxu0 0.0
        %3089 = vmatpush1.msra.mxu0 0.0
        %3090 = vmatprep.subr.mxu0 0.0
        %3091 = vmatpush1.msra.mxu0 0.0
        %3092 = vmatprep.subr.mxu0 0.0
        %3093 = vmatpush1.msra.mxu0 0.0
        %3094 = vmatprep.mubr.f32.mxu0 0.0
        %3095 = vmatmul.mubr.f32.gmra.mrb[0].mxu0 %v3028
        %v3096 = vpop.f32.mrb[0].mxu0
        %v3097 = vadd.f32 0.0, %v3096
        %v3098 = vpop.f32.mrb[0].mxu0
        %3099 = vdwg.mxu0
        %v3100 = vpack.c.bf16 %v3097, %v3097
        %v3102 = vsel %vm1241, %v3100, 0
        %v3105 = vsel %vm1574, %v2270, 0
        %3107 = vmatprep.subr.bf16.mxu0 0
        %3108 = vmatpush1.bf16.msra.mxu0 %v3105
        %3109 = vmatprep.subr.bf16.mxu0 0
        %3110 = vmatpush1.bf16.msra.mxu0 0
        %3111 = vmatprep.subr.bf16.mxu0 0
        %3112 = vmatpush1.bf16.msra.mxu0 0
        %3113 = vmatprep.subr.bf16.mxu0 0
        %3114 = vmatpush1.bf16.msra.mxu0 0
        %3115 = vmatprep.subr.bf16.mxu0 0
        %3116 = vmatpush1.bf16.msra.mxu0 0
        %3117 = vmatprep.subr.bf16.mxu0 0
        %3118 = vmatpush1.bf16.msra.mxu0 0
        %3119 = vmatprep.subr.bf16.mxu0 0
        %3120 = vmatpush1.bf16.msra.mxu0 0
        %3121 = vmatprep.subr.bf16.mxu0 0
        %3122 = vmatpush1.bf16.msra.mxu0 0
        %3123 = vmatprep.subr.bf16.mxu0 0
        %3124 = vmatpush1.bf16.msra.mxu0 0
        %3125 = vmatprep.subr.bf16.mxu0 0
        %3126 = vmatpush1.bf16.msra.mxu0 0
        %3127 = vmatprep.subr.bf16.mxu0 0
        %3128 = vmatpush1.bf16.msra.mxu0 0
        %3129 = vmatprep.subr.bf16.mxu0 0
        %3130 = vmatpush1.bf16.msra.mxu0 0
        %3131 = vmatprep.subr.bf16.mxu0 0
        %3132 = vmatpush1.bf16.msra.mxu0 0
        %3133 = vmatprep.subr.bf16.mxu0 0
        %3134 = vmatpush1.bf16.msra.mxu0 0
        %3135 = vmatprep.subr.bf16.mxu0 0
        %3136 = vmatpush1.bf16.msra.mxu0 0
        %3137 = vmatprep.subr.bf16.mxu0 0
        %3138 = vmatpush1.bf16.msra.mxu0 0
        %3139 = vmatprep.mubr.bf16.mxu0 0
        %3140 = vmatmul.mubr.bf16.gmra.mrb[0].mxu0 %v3102
        %v3141 = vpop.f32.mrb[0].mxu0
        %v3142 = vadd.f32 0.0, %v3141
        %v3143 = vpop.f32.mrb[0].mxu0
        %v3144 = vpop.f32.mrb[0].mxu0
        %v3145 = vpop.f32.mrb[0].mxu0
        %3146 = vdwg.mxu0
        %v3147 = vadd.f32 %v2927, %v3142
        %v3148 = vld [vmem:[#allocation32] sm:$0x1]
        %v3150 = vlaneseq
        %v3151 = vshrl.u32 %v3150, 7
        %v3152 = vsub.s32 0, %v3151
        %v3153 = vrot.slane %v3148, %v3152
        %v3155 = vadd.f32 %v3147, %v3153
        %v3156 = vadd.f32 %v3155, %v2098
        %v3157 = vsel %vm1135, %v3156, 0.0
        %3158 = vadd.xlane.f32.xlu0 %v3157
        %v3159 = vpop.xlane.xlu0 %3158
        %v3160 = vmul.f32 %v3159, %v1139
        %v3161 = vsub.f32 %v3156, %v3160
        %v3162 = vmul.f32 %v3161, %v3161
        %v3163 = vsel %vm1135, %v3162, 0.0
        %3164 = vadd.xlane.f32.xlu0 %v3163
        %v3165 = vpop.xlane.xlu0 %3164
        %v3166 = vmul.f32 %v3165, %v1139
        %v3167 = vadd.f32 %v3166, 1e-06
        %v3168 = vrsqrt.pop %v3167
        %v3169 = vmul.f32 %v3161, %v3168
        %v3170 = vld [vmem:[#allocation16] sm:$0x1]
        %v3172 = vlaneseq
        %v3173 = vshrl.u32 %v3172, 7
        %v3174 = vsub.s32 0, %v3173
        %v3175 = vrot.slane %v3170, %v3174
        %v3177 = vmul.f32 %v3169, %v3175
        %v3178 = vld [vmem:[#allocation17] sm:$0x1]
        %v3180 = vlaneseq
        %v3181 = vshrl.u32 %v3180, 7
        %v3182 = vsub.s32 0, %v3181
        %v3183 = vrot.slane %v3178, %v3182
        %v3185 = vadd.f32 %v3177, %v3183
        %v3186 = vld [vmem:[#allocation34] sm:$0xf]
        %v3187 = vld [vmem:[#allocation34 + $0x4] sm:$0xf]
        %v3188 = vld [vmem:[#allocation34 + $0x8] sm:$0xf]
        %v3189 = vld [vmem:[#allocation34 + $0xc] sm:$0xf]
        %v3190 = vpack.c.bf16 %v3185, %v3185
        %v3191 = vld [vmem:[#allocation35] sm:$0x1]
        %v3193 = vlaneseq
        %v3194 = vshrl.u32 %v3193, 7
        %v3195 = vsub.s32 0, %v3194
        %v3196 = vrot.slane %v3191, %v3195
        %v3202 = vunpack.c.l.b16 %v3186
        %v3203 = vunpack.c.l.b16 %v3187
        %v3204 = vunpack.c.l.b16 %v3188
        %v3205 = vunpack.c.l.b16 %v3189
        %v3206 = vpack.c.b16 %v3203, %v3202
        %v3207 = vpack.c.b16 %v3205, %v3204
        %v3211 = vsel %vm1135, %v3190, 0
        %3213 = vmatprep.subr.bf16.mxu0 0
        %3214 = vmatpush1.bf16.msra.mxu0 %v3206
        %3215 = vmatprep.subr.bf16.mxu0 0
        %3216 = vmatpush1.bf16.msra.mxu0 %v3207
        %3217 = vmatprep.subr.bf16.mxu0 0
        %3218 = vmatpush1.bf16.msra.mxu0 0
        %3219 = vmatprep.subr.bf16.mxu0 0
        %3220 = vmatpush1.bf16.msra.mxu0 0
        %3221 = vmatprep.subr.bf16.mxu0 0
        %3222 = vmatpush1.bf16.msra.mxu0 0
        %3223 = vmatprep.subr.bf16.mxu0 0
        %3224 = vmatpush1.bf16.msra.mxu0 0
        %3225 = vmatprep.subr.bf16.mxu0 0
        %3226 = vmatpush1.bf16.msra.mxu0 0
        %3227 = vmatprep.subr.bf16.mxu0 0
        %3228 = vmatpush1.bf16.msra.mxu0 0
        %3229 = vmatprep.subr.bf16.mxu0 0
        %3230 = vmatpush1.bf16.msra.mxu0 0
        %3231 = vmatprep.subr.bf16.mxu0 0
        %3232 = vmatpush1.bf16.msra.mxu0 0
        %3233 = vmatprep.subr.bf16.mxu0 0
        %3234 = vmatpush1.bf16.msra.mxu0 0
        %3235 = vmatprep.subr.bf16.mxu0 0
        %3236 = vmatpush1.bf16.msra.mxu0 0
        %3237 = vmatprep.subr.bf16.mxu0 0
        %3238 = vmatpush1.bf16.msra.mxu0 0
        %3239 = vmatprep.subr.bf16.mxu0 0
        %3240 = vmatpush1.bf16.msra.mxu0 0
        %3241 = vmatprep.subr.bf16.mxu0 0
        %3242 = vmatpush1.bf16.msra.mxu0 0
        %3243 = vmatprep.subr.bf16.mxu0 0
        %3244 = vmatpush1.bf16.msra.mxu0 0
        %3245 = vmatprep.mubr.bf16.mxu0 0
        %3246 = vmatmul.mubr.bf16.gmra.mrb[0].mxu0 %v3211
        %v3247 = vpop.f32.mrb[0].mxu0
        %v3248 = vadd.f32 %v3196, %v3247
        %v3249 = vpop.f32.mrb[0].mxu0
        %v3250 = vpop.f32.mrb[0].mxu0
        %v3251 = vpop.f32.mrb[0].mxu0
        %3252 = vdwg.mxu0
        %v3253 = vmul.f32 %v3248, 0.5
        %v3254 = vmul.f32 %v3248, 0.044715
        %v3255 = vmul.f32 %v3254, %v3248
        %v3256 = vmul.f32 %v3255, %v3248
        %v3257 = vadd.f32 %v3248, %v3256
        %v3258 = vmul.f32 %v3257, 0.7978846
        %v3259 = vtanh.pop %v3258
        %v3260 = vadd.f32 %v3259, 1.0
        %v3261 = vmul.f32 %v3253, %v3260
        %v3262 = vld [vmem:[#allocation37] sm:$0xf]
        %v3263 = vld [vmem:[#allocation37 + $0x4] sm:$0xf]
        %v3264 = vld [vmem:[#allocation37 + $0x8] sm:$0xf]
        %v3265 = vld [vmem:[#allocation37 + $0xc] sm:$0xf]
        %v3266 = vld [vmem:[#allocation37 + $0x10] sm:$0xf]
        %v3267 = vld [vmem:[#allocation37 + $0x14] sm:$0xf]
        %v3268 = vld [vmem:[#allocation37 + $0x18] sm:$0xf]
        %v3269 = vld [vmem:[#allocation37 + $0x1c] sm:$0xf]
        %v3270 = vpack.c.bf16 %v3261, %v3261
        %v3271 = vld [vmem:[#allocation38] sm:$0x1]
        %v3273 = vlaneseq
        %v3274 = vshrl.u32 %v3273, 7
        %v3275 = vsub.s32 0, %v3274
        %v3276 = vrot.slane %v3271, %v3275
        %v3286 = vunpack.c.l.b16 %v3262
        %v3287 = vunpack.c.l.b16 %v3263
        %v3288 = vunpack.c.l.b16 %v3264
        %v3289 = vunpack.c.l.b16 %v3265
        %v3290 = vunpack.c.l.b16 %v3266
        %v3291 = vunpack.c.l.b16 %v3267
        %v3292 = vunpack.c.l.b16 %v3268
        %v3293 = vunpack.c.l.b16 %v3269
        %v3294 = vpack.c.b16 %v3287, %v3286
        %v3295 = vpack.c.b16 %v3289, %v3288
        %v3296 = vpack.c.b16 %v3291, %v3290
        %v3297 = vpack.c.b16 %v3293, %v3292
        %vm3302 = vcmask 523264
        %v3304 = vsel %vm3302, %v3270, 0
        %3306 = vmatprep.subr.bf16.mxu0 0
        %3307 = vmatpush1.bf16.msra.mxu0 %v3294
        %3308 = vmatprep.subr.bf16.mxu0 0
        %3309 = vmatpush1.bf16.msra.mxu0 %v3295
        %3310 = vmatprep.subr.bf16.mxu0 0
        %3311 = vmatpush1.bf16.msra.mxu0 %v3296
        %3312 = vmatprep.subr.bf16.mxu0 0
        %3313 = vmatpush1.bf16.msra.mxu0 %v3297
        %3314 = vmatprep.subr.bf16.mxu0 0
        %3315 = vmatpush1.bf16.msra.mxu0 0
        %3316 = vmatprep.subr.bf16.mxu0 0
        %3317 = vmatpush1.bf16.msra.mxu0 0
        %3318 = vmatprep.subr.bf16.mxu0 0
        %3319 = vmatpush1.bf16.msra.mxu0 0
        %3320 = vmatprep.subr.bf16.mxu0 0
        %3321 = vmatpush1.bf16.msra.mxu0 0
        %3322 = vmatprep.subr.bf16.mxu0 0
        %3323 = vmatpush1.bf16.msra.mxu0 0
        %3324 = vmatprep.subr.bf16.mxu0 0
        %3325 = vmatpush1.bf16.msra.mxu0 0
        %3326 = vmatprep.subr.bf16.mxu0 0
        %3327 = vmatpush1.bf16.msra.mxu0 0
        %3328 = vmatprep.subr.bf16.mxu0 0
        %3329 = vmatpush1.bf16.msra.mxu0 0
        %3330 = vmatprep.subr.bf16.mxu0 0
        %3331 = vmatpush1.bf16.msra.mxu0 0
        %3332 = vmatprep.subr.bf16.mxu0 0
        %3333 = vmatpush1.bf16.msra.mxu0 0
        %3334 = vmatprep.subr.bf16.mxu0 0
        %3335 = vmatpush1.bf16.msra.mxu0 0
        %3336 = vmatprep.subr.bf16.mxu0 0
        %3337 = vmatpush1.bf16.msra.mxu0 0
        %3338 = vmatprep.mubr.bf16.mxu0 0
        %3339 = vmatmul.mubr.bf16.gmra.mrb[0].mxu0 %v3304
        %v3340 = vpop.f32.mrb[0].mxu0
        %v3341 = vadd.f32 %v3276, %v3340
        %v3342 = vpop.f32.mrb[0].mxu0
        %v3343 = vpop.f32.mrb[0].mxu0
        %v3344 = vpop.f32.mrb[0].mxu0
        %3345 = vdwg.mxu0
        %v3346 = vadd.f32 %v3341, %v3156
        %v3347 = vpack.c.bf16 %v3346, %v3346
        %vm3348 = vcmask 257024
        %3349 = vst.msk [vmem:[%s1127] sm:$0xf] %vm3348, %v3347
        %s3350 = sand.u32 %s589, 1
        %s3351 = scalar_lea.sflag [#allocation4], %s3350
        %s3352 = sand.u32 %s589, 1
        %s3353 = smul.addr %s3352, 4
        %s3354 = scalar_lea.vmem [#allocation40], %s3353
        // Predicated region
        $region213: #{decoder_apply.3} parent=115 // pred_check
          %p3355 = pneg %p599
        $region214: #{decoder_apply.3} parent=115 // pred_check_branch
          %3357 = sbr.rel (%p3355) target = $region216
        $region215: #{decoder_apply.3} parent=115 // pred_region
          %s3359 = ssub.s32 64, 64
          %3360 = vsyncadd %s3351, %s3359
          %s3361 = smul.addr %s57, 64
          %s3362 = scalar_lea.hbm %s24, %s3361
          %s3364 = sshll.u32 %s3354, 4
          %s3365 = int_to_ptr.vmem [resolvable:$true] %s3364
          %3367 = dma.vmem_to_hbm [thread:$0]  %s3365, 64, %s3362, %s3351
        $region216: #{decoder_apply.3} parent=115 // pred_fallthru
          _
      $region116: #{decoder_apply.3} parent=5 // pred_fallthru
        _
      %p3368 = scmp.le.s32.totalorder 2, %s52
      // Predicated region
      $region217: #{decoder_apply.3} parent=5 // pred_check
        %p3369 = pneg %p3368
      $region218: #{decoder_apply.3} parent=5 // pred_check_branch
        %3371 = sbr.rel (%p3369) target = $region220
      $region219: #{decoder_apply.3} parent=5 // pred_region
        %s3372 = ssub.s32 %s52, 2
        // Predicated region
        $region221: #{decoder_apply.3} parent=219 // pred_check
          %p3373 = pneg %p605
        $region222: #{decoder_apply.3} parent=219 // pred_check_branch
          %3375 = sbr.rel (%p3373) target = $region224
        $region223: #{decoder_apply.3} parent=219 // pred_region
          %s3376 = sand.u32 %s590, 1
          %s3377 = scalar_lea.sflag [#allocation4], %s3376
          %s3378 = sand.u32 %s590, 1
          %s3379 = smul.addr %s3378, 4
          %s3380 = scalar_lea.vmem [#allocation40], %s3379
          %3381 = dma.done %s3377, 64
        $region224: #{decoder_apply.3} parent=219 // pred_fallthru
          _
      $region220: #{decoder_apply.3} parent=5 // pred_fallthru
        _
    $region6: #{decoder_apply.3} parent=1 // loop_footer
      %s56 = sadd.s32 1, %s52
    $region7: #{decoder_apply.3} parent=1 // loop_footer_branch
      %51 = sbr.rel target = $region3
    $region8: #{decoder_apply.3} parent=1 // loop_exit
      _
    %3382 = vsyncpa [#allocation3], 1
    %s3383 = scalar_lea.sflag [#allocation3], 1
    %3384 = vsyncpa %s3383, 1
    %3385 = vsyncpa [#allocation6], 1
    %s3386 = scalar_lea.sflag [#allocation6], 1
    %3387 = vsyncpa %s3386, 1
    %3388 = vsyncpa [#allocation9], 1
    %s3389 = scalar_lea.sflag [#allocation9], 1
    %3390 = vsyncpa %s3389, 1
    %3391 = vsyncpa [#allocation12], 1
    %3392 = vsyncpa [#allocation15], 1
    %3393 = vsyncpa [#allocation18], 1
    %3394 = vsyncpa [#allocation21], 1
    %3395 = vsyncpa [#allocation24], 1
    %3396 = vsyncpa [#allocation27], 1
    %3397 = vsyncpa [#allocation30], 1
    %3398 = vsyncpa [#allocation33], 1
    %3399 = vsyncpa [#allocation36], 1
    %3400 = vsyncpa [#allocation39], 1
    %3401 = vsyncpa [#allocation4], 1
    %s3402 = scalar_lea.sflag [#allocation4], 1
    %3403 = vsyncpa %s3402, 1

</llo_original>
